<compile_context>
chip_gen: v7x
topology: tpu7x:2x2x1
jax: 0.10.0
libtpu: 0.0.40
codegen_flags: <defaults>
</compile_context>

<pallas_src>
import jax
import jax.numpy as jnp
from jax.experimental import pallas as pl
from jax.experimental.pallas import tpu as pltpu


def _direction_dim_semantics():
    """Direction grid axis: split across the 2 TensorCores on v7x, plain 'parallel' on
    single-TC chips (v5e/v6e) where it only affects scheduling."""
    try:
        kind = jax.devices()[0].device_kind.lower()
    except Exception:
        kind = ""
    core_parallel = getattr(pltpu, "CORE_PARALLEL", None)
    if "v7" in kind and core_parallel is not None:
        return (core_parallel,)
    return ("parallel",)


# -----------------------------------------------------------------------------
# Pallas kernel: one bidirectional GRU layer.  grid=(2,) over directions.
# Per grid point (direction d):
#   x_ref:     (P, T*Bp, In_piece)  input pieces (shared by both directions)
#   wih_ref:   (P, In_piece, 3H)    row-split W_ih^T, gate columns ordered [r | z | n], bf16
#   whh_ref:   (H, 3H)              W_hh^T, bf16
#   bi_ref:    (1, 3H)              b_ih with b_hh_r / b_hh_z folded in (f32)
#   bhn_ref:   (1, H)               b_hh for the n gate (multiplied by r, kept separate)
#   out_ref:   (T*Bp, H)            this direction's hidden-state sequence
#   hlast_ref: (Bp, H)              this direction's final hidden state
#   gi_ref:    (T*Bp, 3H)           VMEM scratch: fused input projection for all timesteps
# -----------------------------------------------------------------------------
def _bigru_layer_kernel(x_ref, wih_ref, whh_ref, bi_ref, bhn_ref,
                        out_ref, hlast_ref, gi_ref):
    d = pl.program_id(0)                       # 0 = forward, 1 = backward (time-reversed)
    P = x_ref.shape[0]
    TB = x_ref.shape[1]
    Bp, H = hlast_ref.shape
    T = TB // Bp
    G = 3 * H

    # ---- Phase 1: fused input projection for the whole sequence (no recurrence).
    #      One lane-dense (TB, 3H) result; bf16 MXU operands, f32 accumulation. ----
    proj = jnp.dot(x_ref[0].astype(jnp.bfloat16), wih_ref[0],
                   preferred_element_type=jnp.float32)
    for p in range(1, P):                      # layer > 0: fwd/bwd pieces of the 2H input
        proj = proj + jnp.dot(x_ref[p].astype(jnp.bfloat16), wih_ref[p],
                              preferred_element_type=jnp.float32)
    gi_ref[...] = proj + bi_ref[...]           # (TB, 3H); r/z rows already hold b_hh_r/z

    # Hoist recurrence weights / bias loads out of the unrolled time loop.
    whh = whh_ref[...]                         # (H, 3H) bf16
    b_hn = bhn_ref[...]                        # (1, H)  f32

    # ---- Phase 2: sequential recurrence; h carried in vregs (f32), one fused MXU push
    #      per step, static sublane-aligned offsets per direction. ----
    def recurrence(time_order):
        h = jnp.zeros((Bp, H), jnp.float32)
        for t in time_order:                   # T small & static -> fully unrolled
            off = t * Bp                       # static Python int, 8-aligned
            gi = gi_ref[off:off + Bp, :]       # (Bp, 3H), unmasked aligned load
            gh = jnp.dot(h.astype(jnp.bfloat16), whh,
                         preferred_element_type=jnp.float32)        # (Bp, 3H)
            r = jax.nn.sigmoid(gi[:, 0:H] + gh[:, 0:H])
            z = jax.nn.sigmoid(gi[:, H:2 * H] + gh[:, H:2 * H])
            n = jnp.tanh(gi[:, 2 * H:G] + r * (gh[:, 2 * H:G] + b_hn))
            h = (1.0 - z) * n + z * h                                # (Bp, H) f32
            out_ref[off:off + Bp, :] = h       # static, aligned store
        hlast_ref[...] = h

    @pl.when(d == 0)
    def _():
        recurrence(range(T))                   # forward in time

    @pl.when(d == 1)
    def _():
        recurrence(range(T - 1, -1, -1))       # reversal folded into static offsets


def _bigru_layer(x_pieces, wih, whh, bi, bhn, Bp):
    """One bidirectional GRU layer.

    x_pieces: (P, T*Bp, In_piece) f32   wih: (2, P, In_piece, 3H) bf16
    whh: (2, H, 3H) bf16                bi: (2, 1, 3H) f32        bhn: (2, 1, H) f32
    Returns (out (2, T*Bp, H) f32, h_last (2, Bp, H) f32).
    """
    P, TB, In = x_pieces.shape
    H = whh.shape[1]
    G = 3 * H

    grid_spec = pltpu.PrefetchScalarGridSpec(
        num_scalar_prefetch=0,
        grid=(2,),                                                   # direction axis
        in_specs=[
            pl.BlockSpec((P, TB, In), lambda d: (0, 0, 0)),          # whole sequence (shared)
            pl.BlockSpec((None, P, In, G), lambda d: (d, 0, 0, 0)),  # per-dir fused W_ih^T
            pl.BlockSpec((None, H, G), lambda d: (d, 0, 0)),         # per-dir fused W_hh^T
            pl.BlockSpec((None, 1, G), lambda d: (d, 0, 0)),         # fused input bias
            pl.BlockSpec((None, 1, H), lambda d: (d, 0, 0)),         # b_hh (n gate)
        ],
        out_specs=[
            pl.BlockSpec((None, TB, H), lambda d: (d, 0, 0)),        # one slab per direction
            pl.BlockSpec((None, Bp, H), lambda d: (d, 0, 0)),        # final hidden per dir
        ],
        scratch_shapes=[pltpu.VMEM((TB, G), jnp.float32)],           # fused gi scratch
    )

    out, h_last = pl.pallas_call(
        _bigru_layer_kernel,
        out_shape=(jax.ShapeDtypeStruct((2, TB, H), jnp.float32),
                   jax.ShapeDtypeStruct((2, Bp, H), jnp.float32)),
        grid_spec=grid_spec,
        compiler_params=pltpu.CompilerParams(
            dimension_semantics=_direction_dim_semantics()),
    )(x_pieces, wih, whh, bi, bhn)
    return out, h_last


# -----------------------------------------------------------------------------
# Parameter construction (deterministic, PyTorch-shaped) + one-time preparation
# -----------------------------------------------------------------------------
def init_params(key, vocab_size, emb_dim, hid_dim, n_layers):
    params = {}
    k_emb, key = jax.random.split(key)
    params["embedding"] = jax.random.normal(k_emb, (vocab_size, emb_dim), jnp.float32)

    bound = 1.0 / jnp.sqrt(hid_dim)
    for layer in range(n_layers):
        in_size = emb_dim if layer == 0 else 2 * hid_dim
        for direction in range(2):  # 0 = forward, 1 = backward
            sfx = f"l{layer}" + ("_reverse" if direction == 1 else "")
            key, k1, k2, k3, k4 = jax.random.split(key, 5)
            params[f"weight_ih_{sfx}"] = jax.random.uniform(
                k1, (3 * hid_dim, in_size), jnp.float32, -bound, bound)
            params[f"weight_hh_{sfx}"] = jax.random.uniform(
                k2, (3 * hid_dim, hid_dim), jnp.float32, -bound, bound)
            params[f"bias_ih_{sfx}"] = jax.random.uniform(
                k3, (3 * hid_dim,), jnp.float32, -bound, bound)
            params[f"bias_hh_{sfx}"] = jax.random.uniform(
                k4, (3 * hid_dim,), jnp.float32, -bound, bound)
    return params


def prepare_params(params, hid_dim, n_layers):
    """One-time weight repacking into kernel-friendly layouts (done OUTSIDE the jitted fwd)."""
    H = hid_dim

    def prep_dir(sfx):
        w_ih = jnp.asarray(params[f"weight_ih_{sfx}"], jnp.float32)   # (3H, In)
        w_hh = jnp.asarray(params[f"weight_hh_{sfx}"], jnp.float32)   # (3H, H)
        b_ih = jnp.asarray(params[f"bias_ih_{sfx}"], jnp.float32)     # (3H,)
        b_hh = jnp.asarray(params[f"bias_hh_{sfx}"], jnp.float32)     # (3H,)
        wih = w_ih.T                                                  # (In, 3H) cols = [r|z|n]
        whh = w_hh.T                                                  # (H, 3H)
        # Fold b_hh for the r/z gates into the batched input-projection bias; the n-gate
        # hidden bias stays separate (it is multiplied by r in the cell).
        bi = jnp.concatenate([b_ih[0:H] + b_hh[0:H],
                              b_ih[H:2 * H] + b_hh[H:2 * H],
                              b_ih[2 * H:3 * H]]).reshape(1, 3 * H)
        bhn = b_hh[2 * H:3 * H].reshape(1, H)
        return wih, whh, bi, bhn

    layers = []
    for layer in range(n_layers):
        f_wih, f_whh, f_bi, f_bhn = prep_dir(f"l{layer}")
        b_wih, b_whh, b_bi, b_bhn = prep_dir(f"l{layer}_reverse")
        P = 1 if layer == 0 else 2   # layer>0 input = [fwd | bwd] pieces of the 2H features

        def split(wih_t):            # row-split W_ih^T so the kernel never needs an x-concat
            in_size = wih_t.shape[0]
            piece = in_size // P
            return jnp.stack([wih_t[p * piece:(p + 1) * piece] for p in range(P)], axis=0)

        wih = jnp.stack([split(f_wih), split(b_wih)], axis=0).astype(jnp.bfloat16)  # (2,P,In/P,3H)
        whh = jnp.stack([f_whh, b_whh], axis=0).astype(jnp.bfloat16)                # (2,H,3H)
        bi = jnp.stack([f_bi, b_bi], axis=0)                                        # (2,1,3H)
        bhn = jnp.stack([f_bhn, b_bhn], axis=0)                                     # (2,1,H)
        layers.append((wih, whh, bi, bhn))

    return {"embedding": jnp.asarray(params["embedding"], jnp.float32),
            "layers": tuple(layers)}


# -----------------------------------------------------------------------------
# RNNEncoder.forward
# -----------------------------------------------------------------------------
@jax.jit
def rnn_encoder_forward(prepared, token_ids):
    """token_ids: (B, T) int32.  Returns (outputs (B, T, 2H), hidden (2*n_layers, B, H))."""
    B, T = token_ids.shape
    emb = prepared["embedding"][token_ids]          # (B, T, E) embedding lookup (XLA gather)
    # nn.Dropout(p=0.02) in eval mode == identity
    E = emb.shape[-1]

    Bp = ((B + 7) // 8) * 8                         # pad batch to f32 sublane multiple
    x = jnp.transpose(emb, (1, 0, 2))               # (T, B, E) time-major
    x = jnp.pad(x, ((0, 0), (0, Bp - B), (0, 0)))   # (T, Bp, E); padded rows sliced off later
    x = x.reshape(1, T * Bp, E)                     # single "piece" for layer 0

    hiddens = []
    for (wih, whh, bi, bhn) in prepared["layers"]:
        out2, h_last = _bigru_layer(x, wih, whh, bi, bhn, Bp)
        x = out2                                    # (2, T*Bp, H): next layer's pieces, no concat
        hiddens.append(h_last)                      # (2, Bp, H): [fwd, bwd]

    H = x.shape[-1]
    out4 = x.reshape(2, T, Bp, H)                   # (dir, T, Bp, H)
    outputs = jnp.transpose(out4, (2, 1, 0, 3)).reshape(Bp, T, 2 * H)[:B]   # (B, T, 2H)
    hidden = jnp.concatenate(hiddens, axis=0)[:, :B, :]   # (2*n_layers, B, H), PyTorch order
    return outputs, hidden


if __name__ == "__main__":
    vocab_size, emb_dim, hid_dim, n_layers = 50, 16, 32, 2
    batch, seq = 2, 8

    key = jax.random.PRNGKey(0)
    k_param, k_tok = jax.random.split(key)
    params = init_params(k_param, vocab_size, emb_dim, hid_dim, n_layers)
    prepared = prepare_params(params, hid_dim, n_layers)
    token_ids = jax.random.randint(k_tok, (batch, seq), 0, vocab_size, dtype=jnp.int32)

    outputs, hidden = rnn_encoder_forward(prepared, token_ids)
    jax.block_until_ready((outputs, hidden))

    assert outputs.shape == (batch, seq, 2 * hid_dim), outputs.shape
    assert hidden.shape == (2 * n_layers, batch, hid_dim), hidden.shape
    assert bool(jnp.all(jnp.isfinite(outputs))) and bool(jnp.all(jnp.isfinite(hidden)))
    print("KERNEL_OK")
</pallas_src>

<mosaic_0001>
module attributes {stable_mosaic.version = 11 : i64} {
  func.func @_bigru_layer_kernel(%arg0: i32, %arg1: memref<2x64x32xf32, #tpu.memory_space<vmem>>, %arg2: memref<1x2x32x96xbf16, #tpu.memory_space<vmem>>, %arg3: memref<1x32x96xbf16, #tpu.memory_space<vmem>>, %arg4: memref<1x1x96xf32, #tpu.memory_space<vmem>>, %arg5: memref<1x1x32xf32, #tpu.memory_space<vmem>>, %arg6: memref<1x64x32xf32, #tpu.memory_space<vmem>>, %arg7: memref<1x8x32xf32, #tpu.memory_space<vmem>>, %arg8: memref<64x96xf32, #tpu.memory_space<vmem>>) attributes {dimension_semantics = [#tpu.dimension_semantics<parallel>], iteration_bounds = array<i64: 2>, scalar_prefetch = 0 : i64, scratch_operands = 1 : i64, tpu.core_type = #tpu.core_type<tc>, window_params = [{pipeline_mode = #tpu.pipeline_mode<synchronous>, transform_indices = @transform_0, window_bounds = array<i64: 2, 64, 32>}, {transform_indices = @transform_1, window_bounds = array<i64: 1, 2, 32, 96>}, {transform_indices = @transform_2, window_bounds = array<i64: 1, 32, 96>}, {transform_indices = @transform_3, window_bounds = array<i64: 1, 1, 96>}, {transform_indices = @transform_4, window_bounds = array<i64: 1, 1, 32>}, {transform_indices = @transform_5, window_bounds = array<i64: 1, 64, 32>}, {transform_indices = @transform_6, window_bounds = array<i64: 1, 8, 32>}]} {
    %c0 = arith.constant 0 : index
    %c0_0 = arith.constant 0 : index
    %c0_1 = arith.constant 0 : index
    %0 = vector.load %arg1[%c0, %c0_0, %c0_1] : memref<2x64x32xf32, #tpu.memory_space<vmem>>, vector<1x64x32xf32>
    %1 = vector.shape_cast %0 : vector<1x64x32xf32> to vector<64x32xf32>
    %2 = arith.truncf %1 : vector<64x32xf32> to vector<64x32xbf16>
    %c0_2 = arith.constant 0 : index
    %c0_3 = arith.constant 0 : index
    %c0_4 = arith.constant 0 : index
    %c0_5 = arith.constant 0 : index
    %3 = vector.load %arg2[%c0_2, %c0_3, %c0_4, %c0_5] : memref<1x2x32x96xbf16, #tpu.memory_space<vmem>>, vector<1x1x32x96xbf16>
    %4 = vector.shape_cast %3 : vector<1x1x32x96xbf16> to vector<32x96xbf16>
    %cst = arith.constant dense<0.000000e+00> : vector<64x96xf32>
    %5 = tpu.matmul %2, %4, %cst {dimension_numbers = #tpu.dot_dimension_numbers<[1], [0], [0], [1], [0, 0, 1, 1], [], []>} : vector<64x32xbf16>, vector<32x96xbf16>, vector<64x96xf32> -> vector<64x96xf32>
    %c1 = arith.constant 1 : index
    %c0_6 = arith.constant 0 : index
    %c0_7 = arith.constant 0 : index
    %6 = vector.load %arg1[%c1, %c0_6, %c0_7] : memref<2x64x32xf32, #tpu.memory_space<vmem>>, vector<1x64x32xf32>
    %7 = vector.shape_cast %6 : vector<1x64x32xf32> to vector<64x32xf32>
    %8 = arith.truncf %7 : vector<64x32xf32> to vector<64x32xbf16>
    %c0_8 = arith.constant 0 : index
    %c1_9 = arith.constant 1 : index
    %c0_10 = arith.constant 0 : index
    %c0_11 = arith.constant 0 : index
    %9 = vector.load %arg2[%c0_8, %c1_9, %c0_10, %c0_11] : memref<1x2x32x96xbf16, #tpu.memory_space<vmem>>, vector<1x1x32x96xbf16>
    %10 = vector.shape_cast %9 : vector<1x1x32x96xbf16> to vector<32x96xbf16>
    %cst_12 = arith.constant dense<0.000000e+00> : vector<64x96xf32>
    %11 = tpu.matmul %8, %10, %cst_12 {dimension_numbers = #tpu.dot_dimension_numbers<[1], [0], [0], [1], [0, 0, 1, 1], [], []>} : vector<64x32xbf16>, vector<32x96xbf16>, vector<64x96xf32> -> vector<64x96xf32>
    %12 = arith.addf %5, %11 : vector<64x96xf32>
    %c0_13 = arith.constant 0 : index
    %c0_14 = arith.constant 0 : index
    %c0_15 = arith.constant 0 : index
    %13 = vector.load %arg4[%c0_13, %c0_14, %c0_15] : memref<1x1x96xf32, #tpu.memory_space<vmem>>, vector<1x1x96xf32>
    %14 = vector.shape_cast %13 : vector<1x1x96xf32> to vector<1x96xf32>
    %15 = vector.broadcast %14 : vector<1x96xf32> to vector<64x96xf32>
    %16 = arith.addf %12, %15 : vector<64x96xf32>
    %c0_16 = arith.constant 0 : index
    %c0_17 = arith.constant 0 : index
    %17 = vector.load %arg8[%c0_16, %c0_17] : memref<64x96xf32, #tpu.memory_space<vmem>>, vector<64x96xf32>
    tpu.vector_store %arg8[%c0_16, %c0_17], %16 {strides = array<i32>} : memref<64x96xf32, #tpu.memory_space<vmem>>, vector<64x96xf32>,
    %c0_18 = arith.constant 0 : index
    %c0_19 = arith.constant 0 : index
    %c0_20 = arith.constant 0 : index
    %18 = vector.load %arg3[%c0_18, %c0_19, %c0_20] : memref<1x32x96xbf16, #tpu.memory_space<vmem>>, vector<1x32x96xbf16>
    %19 = vector.shape_cast %18 : vector<1x32x96xbf16> to vector<32x96xbf16>
    %c0_21 = arith.constant 0 : index
    %c0_22 = arith.constant 0 : index
    %c0_23 = arith.constant 0 : index
    %20 = vector.load %arg5[%c0_21, %c0_22, %c0_23] : memref<1x1x32xf32, #tpu.memory_space<vmem>>, vector<1x1x32xf32>
    %21 = vector.shape_cast %20 : vector<1x1x32xf32> to vector<1x32xf32>
    %c0_i32 = arith.constant 0 : i32
    %22 = arith.cmpi eq, %arg0, %c0_i32 : i32
    %23 = arith.extui %22 : i1 to i32
    %c0_i32_24 = arith.constant 0 : i32
    %24 = arith.cmpi ne, %23, %c0_i32_24 : i32
    scf.if %24 {
      %cst_26 = arith.constant 0.000000e+00 : f32
      %28 = vector.broadcast %cst_26 : f32 to vector<8x32xf32>
      %c0_27 = arith.constant 0 : index
      %c0_28 = arith.constant 0 : index
      %29 = vector.load %arg8[%c0_27, %c0_28] : memref<64x96xf32, #tpu.memory_space<vmem>>, vector<8x96xf32>
      %30 = arith.truncf %28 : vector<8x32xf32> to vector<8x32xbf16>
      %cst_29 = arith.constant dense<0.000000e+00> : vector<8x96xf32>
      %31 = tpu.matmul %30, %19, %cst_29 {dimension_numbers = #tpu.dot_dimension_numbers<[1], [0], [0], [1], [0, 0, 1, 1], [], []>} : vector<8x32xbf16>, vector<32x96xbf16>, vector<8x96xf32> -> vector<8x96xf32>
      %32 = vector.extract_strided_slice %29 {offsets = [0, 0], sizes = [8, 32], strides = [1, 1]} : vector<8x96xf32> to vector<8x32xf32>
      %33 = vector.extract_strided_slice %31 {offsets = [0, 0], sizes = [8, 32], strides = [1, 1]} : vector<8x96xf32> to vector<8x32xf32>
      %34 = arith.addf %32, %33 : vector<8x32xf32>
      %35 = arith.negf %34 : vector<8x32xf32>
      %36 = math.exp %35 : vector<8x32xf32>
      %cst_30 = arith.constant 1.000000e+00 : f32
      %37 = vector.broadcast %cst_30 : f32 to vector<8x32xf32>
      %38 = arith.addf %37, %36 : vector<8x32xf32>
      %39 = arith.divf %37, %38 : vector<8x32xf32>
      %40 = vector.extract_strided_slice %29 {offsets = [0, 32], sizes = [8, 32], strides = [1, 1]} : vector<8x96xf32> to vector<8x32xf32>
      %41 = vector.extract_strided_slice %31 {offsets = [0, 32], sizes = [8, 32], strides = [1, 1]} : vector<8x96xf32> to vector<8x32xf32>
      %42 = arith.addf %40, %41 : vector<8x32xf32>
      %43 = arith.negf %42 : vector<8x32xf32>
      %44 = math.exp %43 : vector<8x32xf32>
      %cst_31 = arith.constant 1.000000e+00 : f32
      %45 = vector.broadcast %cst_31 : f32 to vector<8x32xf32>
      %46 = arith.addf %45, %44 : vector<8x32xf32>
      %47 = arith.divf %45, %46 : vector<8x32xf32>
      %48 = vector.extract_strided_slice %29 {offsets = [0, 64], sizes = [8, 32], strides = [1, 1]} : vector<8x96xf32> to vector<8x32xf32>
      %49 = vector.extract_strided_slice %31 {offsets = [0, 64], sizes = [8, 32], strides = [1, 1]} : vector<8x96xf32> to vector<8x32xf32>
      %50 = vector.broadcast %21 : vector<1x32xf32> to vector<8x32xf32>
      %51 = arith.addf %49, %50 : vector<8x32xf32>
      %52 = arith.mulf %39, %51 : vector<8x32xf32>
      %53 = arith.addf %48, %52 : vector<8x32xf32>
      %54 = math.tanh %53 : vector<8x32xf32>
      %cst_32 = arith.constant 1.000000e+00 : f32
      %55 = vector.broadcast %cst_32 : f32 to vector<8x32xf32>
      %56 = arith.subf %55, %47 : vector<8x32xf32>
      %57 = arith.mulf %56, %54 : vector<8x32xf32>
      %58 = arith.mulf %47, %28 : vector<8x32xf32>
      %59 = arith.addf %57, %58 : vector<8x32xf32>
      %c0_33 = arith.constant 0 : index
      %c0_34 = arith.constant 0 : index
      %c0_35 = arith.constant 0 : index
      %60 = vector.load %arg6[%c0_33, %c0_34, %c0_35] : memref<1x64x32xf32, #tpu.memory_space<vmem>>, vector<1x8x32xf32>
      %61 = vector.shape_cast %60 : vector<1x8x32xf32> to vector<8x32xf32>
      %62 = vector.shape_cast %59 : vector<8x32xf32> to vector<1x8x32xf32>
      tpu.vector_store %arg6[%c0_33, %c0_34, %c0_35], %62 {strides = array<i32>} : memref<1x64x32xf32, #tpu.memory_space<vmem>>, vector<1x8x32xf32>,
      %c8 = arith.constant 8 : index
      %c0_36 = arith.constant 0 : index
      %63 = vector.load %arg8[%c8, %c0_36] : memref<64x96xf32, #tpu.memory_space<vmem>>, vector<8x96xf32>
      %64 = arith.truncf %59 : vector<8x32xf32> to vector<8x32xbf16>
      %cst_37 = arith.constant dense<0.000000e+00> : vector<8x96xf32>
      %65 = tpu.matmul %64, %19, %cst_37 {dimension_numbers = #tpu.dot_dimension_numbers<[1], [0], [0], [1], [0, 0, 1, 1], [], []>} : vector<8x32xbf16>, vector<32x96xbf16>, vector<8x96xf32> -> vector<8x96xf32>
      %66 = vector.extract_strided_slice %63 {offsets = [0, 0], sizes = [8, 32], strides = [1, 1]} : vector<8x96xf32> to vector<8x32xf32>
      %67 = vector.extract_strided_slice %65 {offsets = [0, 0], sizes = [8, 32], strides = [1, 1]} : vector<8x96xf32> to vector<8x32xf32>
      %68 = arith.addf %66, %67 : vector<8x32xf32>
      %69 = arith.negf %68 : vector<8x32xf32>
      %70 = math.exp %69 : vector<8x32xf32>
      %cst_38 = arith.constant 1.000000e+00 : f32
      %71 = vector.broadcast %cst_38 : f32 to vector<8x32xf32>
      %72 = arith.addf %71, %70 : vector<8x32xf32>
      %73 = arith.divf %71, %72 : vector<8x32xf32>
      %74 = vector.extract_strided_slice %63 {offsets = [0, 32], sizes = [8, 32], strides = [1, 1]} : vector<8x96xf32> to vector<8x32xf32>
      %75 = vector.extract_strided_slice %65 {offsets = [0, 32], sizes = [8, 32], strides = [1, 1]} : vector<8x96xf32> to vector<8x32xf32>
      %76 = arith.addf %74, %75 : vector<8x32xf32>
      %77 = arith.negf %76 : vector<8x32xf32>
      %78 = math.exp %77 : vector<8x32xf32>
      %cst_39 = arith.constant 1.000000e+00 : f32
      %79 = vector.broadcast %cst_39 : f32 to vector<8x32xf32>
      %80 = arith.addf %79, %78 : vector<8x32xf32>
      %81 = arith.divf %79, %80 : vector<8x32xf32>
      %82 = vector.extract_strided_slice %63 {offsets = [0, 64], sizes = [8, 32], strides = [1, 1]} : vector<8x96xf32> to vector<8x32xf32>
      %83 = vector.extract_strided_slice %65 {offsets = [0, 64], sizes = [8, 32], strides = [1, 1]} : vector<8x96xf32> to vector<8x32xf32>
      %84 = vector.broadcast %21 : vector<1x32xf32> to vector<8x32xf32>
      %85 = arith.addf %83, %84 : vector<8x32xf32>
      %86 = arith.mulf %73, %85 : vector<8x32xf32>
      %87 = arith.addf %82, %86 : vector<8x32xf32>
      %88 = math.tanh %87 : vector<8x32xf32>
      %cst_40 = arith.constant 1.000000e+00 : f32
      %89 = vector.broadcast %cst_40 : f32 to vector<8x32xf32>
      %90 = arith.subf %89, %81 : vector<8x32xf32>
      %91 = arith.mulf %90, %88 : vector<8x32xf32>
      %92 = arith.mulf %81, %59 : vector<8x32xf32>
      %93 = arith.addf %91, %92 : vector<8x32xf32>
      %c0_41 = arith.constant 0 : index
      %c8_42 = arith.constant 8 : index
      %c0_43 = arith.constant 0 : index
      %94 = vector.load %arg6[%c0_41, %c8_42, %c0_43] : memref<1x64x32xf32, #tpu.memory_space<vmem>>, vector<1x8x32xf32>
      %95 = vector.shape_cast %94 : vector<1x8x32xf32> to vector<8x32xf32>
      %96 = vector.shape_cast %93 : vector<8x32xf32> to vector<1x8x32xf32>
      tpu.vector_store %arg6[%c0_41, %c8_42, %c0_43], %96 {strides = array<i32>} : memref<1x64x32xf32, #tpu.memory_space<vmem>>, vector<1x8x32xf32>,
      %c16 = arith.constant 16 : index
      %c0_44 = arith.constant 0 : index
      %97 = vector.load %arg8[%c16, %c0_44] : memref<64x96xf32, #tpu.memory_space<vmem>>, vector<8x96xf32>
      %98 = arith.truncf %93 : vector<8x32xf32> to vector<8x32xbf16>
      %cst_45 = arith.constant dense<0.000000e+00> : vector<8x96xf32>
      %99 = tpu.matmul %98, %19, %cst_45 {dimension_numbers = #tpu.dot_dimension_numbers<[1], [0], [0], [1], [0, 0, 1, 1], [], []>} : vector<8x32xbf16>, vector<32x96xbf16>, vector<8x96xf32> -> vector<8x96xf32>
      %100 = vector.extract_strided_slice %97 {offsets = [0, 0], sizes = [8, 32], strides = [1, 1]} : vector<8x96xf32> to vector<8x32xf32>
      %101 = vector.extract_strided_slice %99 {offsets = [0, 0], sizes = [8, 32], strides = [1, 1]} : vector<8x96xf32> to vector<8x32xf32>
      %102 = arith.addf %100, %101 : vector<8x32xf32>
      %103 = arith.negf %102 : vector<8x32xf32>
      %104 = math.exp %103 : vector<8x32xf32>
      %cst_46 = arith.constant 1.000000e+00 : f32
      %105 = vector.broadcast %cst_46 : f32 to vector<8x32xf32>
      %106 = arith.addf %105, %104 : vector<8x32xf32>
      %107 = arith.divf %105, %106 : vector<8x32xf32>
      %108 = vector.extract_strided_slice %97 {offsets = [0, 32], sizes = [8, 32], strides = [1, 1]} : vector<8x96xf32> to vector<8x32xf32>
      %109 = vector.extract_strided_slice %99 {offsets = [0, 32], sizes = [8, 32], strides = [1, 1]} : vector<8x96xf32> to vector<8x32xf32>
      %110 = arith.addf %108, %109 : vector<8x32xf32>
      %111 = arith.negf %110 : vector<8x32xf32>
      %112 = math.exp %111 : vector<8x32xf32>
      %cst_47 = arith.constant 1.000000e+00 : f32
      %113 = vector.broadcast %cst_47 : f32 to vector<8x32xf32>
      %114 = arith.addf %113, %112 : vector<8x32xf32>
      %115 = arith.divf %113, %114 : vector<8x32xf32>
      %116 = vector.extract_strided_slice %97 {offsets = [0, 64], sizes = [8, 32], strides = [1, 1]} : vector<8x96xf32> to vector<8x32xf32>
      %117 = vector.extract_strided_slice %99 {offsets = [0, 64], sizes = [8, 32], strides = [1, 1]} : vector<8x96xf32> to vector<8x32xf32>
      %118 = vector.broadcast %21 : vector<1x32xf32> to vector<8x32xf32>
      %119 = arith.addf %117, %118 : vector<8x32xf32>
      %120 = arith.mulf %107, %119 : vector<8x32xf32>
      %121 = arith.addf %116, %120 : vector<8x32xf32>
      %122 = math.tanh %121 : vector<8x32xf32>
      %cst_48 = arith.constant 1.000000e+00 : f32
      %123 = vector.broadcast %cst_48 : f32 to vector<8x32xf32>
      %124 = arith.subf %123, %115 : vector<8x32xf32>
      %125 = arith.mulf %124, %122 : vector<8x32xf32>
      %126 = arith.mulf %115, %93 : vector<8x32xf32>
      %127 = arith.addf %125, %126 : vector<8x32xf32>
      %c0_49 = arith.constant 0 : index
      %c16_50 = arith.constant 16 : index
      %c0_51 = arith.constant 0 : index
      %128 = vector.load %arg6[%c0_49, %c16_50, %c0_51] : memref<1x64x32xf32, #tpu.memory_space<vmem>>, vector<1x8x32xf32>
      %129 = vector.shape_cast %128 : vector<1x8x32xf32> to vector<8x32xf32>
      %130 = vector.shape_cast %127 : vector<8x32xf32> to vector<1x8x32xf32>
      tpu.vector_store %arg6[%c0_49, %c16_50, %c0_51], %130 {strides = array<i32>} : memref<1x64x32xf32, #tpu.memory_space<vmem>>, vector<1x8x32xf32>,
      %c24 = arith.constant 24 : index
      %c0_52 = arith.constant 0 : index
      %131 = vector.load %arg8[%c24, %c0_52] : memref<64x96xf32, #tpu.memory_space<vmem>>, vector<8x96xf32>
      %132 = arith.truncf %127 : vector<8x32xf32> to vector<8x32xbf16>
      %cst_53 = arith.constant dense<0.000000e+00> : vector<8x96xf32>
      %133 = tpu.matmul %132, %19, %cst_53 {dimension_numbers = #tpu.dot_dimension_numbers<[1], [0], [0], [1], [0, 0, 1, 1], [], []>} : vector<8x32xbf16>, vector<32x96xbf16>, vector<8x96xf32> -> vector<8x96xf32>
      %134 = vector.extract_strided_slice %131 {offsets = [0, 0], sizes = [8, 32], strides = [1, 1]} : vector<8x96xf32> to vector<8x32xf32>
      %135 = vector.extract_strided_slice %133 {offsets = [0, 0], sizes = [8, 32], strides = [1, 1]} : vector<8x96xf32> to vector<8x32xf32>
      %136 = arith.addf %134, %135 : vector<8x32xf32>
      %137 = arith.negf %136 : vector<8x32xf32>
      %138 = math.exp %137 : vector<8x32xf32>
      %cst_54 = arith.constant 1.000000e+00 : f32
      %139 = vector.broadcast %cst_54 : f32 to vector<8x32xf32>
      %140 = arith.addf %139, %138 : vector<8x32xf32>
      %141 = arith.divf %139, %140 : vector<8x32xf32>
      %142 = vector.extract_strided_slice %131 {offsets = [0, 32], sizes = [8, 32], strides = [1, 1]} : vector<8x96xf32> to vector<8x32xf32>
      %143 = vector.extract_strided_slice %133 {offsets = [0, 32], sizes = [8, 32], strides = [1, 1]} : vector<8x96xf32> to vector<8x32xf32>
      %144 = arith.addf %142, %143 : vector<8x32xf32>
      %145 = arith.negf %144 : vector<8x32xf32>
      %146 = math.exp %145 : vector<8x32xf32>
      %cst_55 = arith.constant 1.000000e+00 : f32
      %147 = vector.broadcast %cst_55 : f32 to vector<8x32xf32>
      %148 = arith.addf %147, %146 : vector<8x32xf32>
      %149 = arith.divf %147, %148 : vector<8x32xf32>
      %150 = vector.extract_strided_slice %131 {offsets = [0, 64], sizes = [8, 32], strides = [1, 1]} : vector<8x96xf32> to vector<8x32xf32>
      %151 = vector.extract_strided_slice %133 {offsets = [0, 64], sizes = [8, 32], strides = [1, 1]} : vector<8x96xf32> to vector<8x32xf32>
      %152 = vector.broadcast %21 : vector<1x32xf32> to vector<8x32xf32>
      %153 = arith.addf %151, %152 : vector<8x32xf32>
      %154 = arith.mulf %141, %153 : vector<8x32xf32>
      %155 = arith.addf %150, %154 : vector<8x32xf32>
      %156 = math.tanh %155 : vector<8x32xf32>
      %cst_56 = arith.constant 1.000000e+00 : f32
      %157 = vector.broadcast %cst_56 : f32 to vector<8x32xf32>
      %158 = arith.subf %157, %149 : vector<8x32xf32>
      %159 = arith.mulf %158, %156 : vector<8x32xf32>
      %160 = arith.mulf %149, %127 : vector<8x32xf32>
      %161 = arith.addf %159, %160 : vector<8x32xf32>
      %c0_57 = arith.constant 0 : index
      %c24_58 = arith.constant 24 : index
      %c0_59 = arith.constant 0 : index
      %162 = vector.load %arg6[%c0_57, %c24_58, %c0_59] : memref<1x64x32xf32, #tpu.memory_space<vmem>>, vector<1x8x32xf32>
      %163 = vector.shape_cast %162 : vector<1x8x32xf32> to vector<8x32xf32>
      %164 = vector.shape_cast %161 : vector<8x32xf32> to vector<1x8x32xf32>
      tpu.vector_store %arg6[%c0_57, %c24_58, %c0_59], %164 {strides = array<i32>} : memref<1x64x32xf32, #tpu.memory_space<vmem>>, vector<1x8x32xf32>,
      %c32 = arith.constant 32 : index
      %c0_60 = arith.constant 0 : index
      %165 = vector.load %arg8[%c32, %c0_60] : memref<64x96xf32, #tpu.memory_space<vmem>>, vector<8x96xf32>
      %166 = arith.truncf %161 : vector<8x32xf32> to vector<8x32xbf16>
      %cst_61 = arith.constant dense<0.000000e+00> : vector<8x96xf32>
      %167 = tpu.matmul %166, %19, %cst_61 {dimension_numbers = #tpu.dot_dimension_numbers<[1], [0], [0], [1], [0, 0, 1, 1], [], []>} : vector<8x32xbf16>, vector<32x96xbf16>, vector<8x96xf32> -> vector<8x96xf32>
      %168 = vector.extract_strided_slice %165 {offsets = [0, 0], sizes = [8, 32], strides = [1, 1]} : vector<8x96xf32> to vector<8x32xf32>
      %169 = vector.extract_strided_slice %167 {offsets = [0, 0], sizes = [8, 32], strides = [1, 1]} : vector<8x96xf32> to vector<8x32xf32>
      %170 = arith.addf %168, %169 : vector<8x32xf32>
      %171 = arith.negf %170 : vector<8x32xf32>
      %172 = math.exp %171 : vector<8x32xf32>
      %cst_62 = arith.constant 1.000000e+00 : f32
      %173 = vector.broadcast %cst_62 : f32 to vector<8x32xf32>
      %174 = arith.addf %173, %172 : vector<8x32xf32>
      %175 = arith.divf %173, %174 : vector<8x32xf32>
      %176 = vector.extract_strided_slice %165 {offsets = [0, 32], sizes = [8, 32], strides = [1, 1]} : vector<8x96xf32> to vector<8x32xf32>
      %177 = vector.extract_strided_slice %167 {offsets = [0, 32], sizes = [8, 32], strides = [1, 1]} : vector<8x96xf32> to vector<8x32xf32>
      %178 = arith.addf %176, %177 : vector<8x32xf32>
      %179 = arith.negf %178 : vector<8x32xf32>
      %180 = math.exp %179 : vector<8x32xf32>
      %cst_63 = arith.constant 1.000000e+00 : f32
      %181 = vector.broadcast %cst_63 : f32 to vector<8x32xf32>
      %182 = arith.addf %181, %180 : vector<8x32xf32>
      %183 = arith.divf %181, %182 : vector<8x32xf32>
      %184 = vector.extract_strided_slice %165 {offsets = [0, 64], sizes = [8, 32], strides = [1, 1]} : vector<8x96xf32> to vector<8x32xf32>
      %185 = vector.extract_strided_slice %167 {offsets = [0, 64], sizes = [8, 32], strides = [1, 1]} : vector<8x96xf32> to vector<8x32xf32>
      %186 = vector.broadcast %21 : vector<1x32xf32> to vector<8x32xf32>
      %187 = arith.addf %185, %186 : vector<8x32xf32>
      %188 = arith.mulf %175, %187 : vector<8x32xf32>
      %189 = arith.addf %184, %188 : vector<8x32xf32>
      %190 = math.tanh %189 : vector<8x32xf32>
      %cst_64 = arith.constant 1.000000e+00 : f32
      %191 = vector.broadcast %cst_64 : f32 to vector<8x32xf32>
      %192 = arith.subf %191, %183 : vector<8x32xf32>
      %193 = arith.mulf %192, %190 : vector<8x32xf32>
      %194 = arith.mulf %183, %161 : vector<8x32xf32>
      %195 = arith.addf %193, %194 : vector<8x32xf32>
      %c0_65 = arith.constant 0 : index
      %c32_66 = arith.constant 32 : index
      %c0_67 = arith.constant 0 : index
      %196 = vector.load %arg6[%c0_65, %c32_66, %c0_67] : memref<1x64x32xf32, #tpu.memory_space<vmem>>, vector<1x8x32xf32>
      %197 = vector.shape_cast %196 : vector<1x8x32xf32> to vector<8x32xf32>
      %198 = vector.shape_cast %195 : vector<8x32xf32> to vector<1x8x32xf32>
      tpu.vector_store %arg6[%c0_65, %c32_66, %c0_67], %198 {strides = array<i32>} : memref<1x64x32xf32, #tpu.memory_space<vmem>>, vector<1x8x32xf32>,
      %c40 = arith.constant 40 : index
      %c0_68 = arith.constant 0 : index
      %199 = vector.load %arg8[%c40, %c0_68] : memref<64x96xf32, #tpu.memory_space<vmem>>, vector<8x96xf32>
      %200 = arith.truncf %195 : vector<8x32xf32> to vector<8x32xbf16>
      %cst_69 = arith.constant dense<0.000000e+00> : vector<8x96xf32>
      %201 = tpu.matmul %200, %19, %cst_69 {dimension_numbers = #tpu.dot_dimension_numbers<[1], [0], [0], [1], [0, 0, 1, 1], [], []>} : vector<8x32xbf16>, vector<32x96xbf16>, vector<8x96xf32> -> vector<8x96xf32>
      %202 = vector.extract_strided_slice %199 {offsets = [0, 0], sizes = [8, 32], strides = [1, 1]} : vector<8x96xf32> to vector<8x32xf32>
      %203 = vector.extract_strided_slice %201 {offsets = [0, 0], sizes = [8, 32], strides = [1, 1]} : vector<8x96xf32> to vector<8x32xf32>
      %204 = arith.addf %202, %203 : vector<8x32xf32>
      %205 = arith.negf %204 : vector<8x32xf32>
      %206 = math.exp %205 : vector<8x32xf32>
      %cst_70 = arith.constant 1.000000e+00 : f32
      %207 = vector.broadcast %cst_70 : f32 to vector<8x32xf32>
      %208 = arith.addf %207, %206 : vector<8x32xf32>
      %209 = arith.divf %207, %208 : vector<8x32xf32>
      %210 = vector.extract_strided_slice %199 {offsets = [0, 32], sizes = [8, 32], strides = [1, 1]} : vector<8x96xf32> to vector<8x32xf32>
      %211 = vector.extract_strided_slice %201 {offsets = [0, 32], sizes = [8, 32], strides = [1, 1]} : vector<8x96xf32> to vector<8x32xf32>
      %212 = arith.addf %210, %211 : vector<8x32xf32>
      %213 = arith.negf %212 : vector<8x32xf32>
      %214 = math.exp %213 : vector<8x32xf32>
      %cst_71 = arith.constant 1.000000e+00 : f32
      %215 = vector.broadcast %cst_71 : f32 to vector<8x32xf32>
      %216 = arith.addf %215, %214 : vector<8x32xf32>
      %217 = arith.divf %215, %216 : vector<8x32xf32>
      %218 = vector.extract_strided_slice %199 {offsets = [0, 64], sizes = [8, 32], strides = [1, 1]} : vector<8x96xf32> to vector<8x32xf32>
      %219 = vector.extract_strided_slice %201 {offsets = [0, 64], sizes = [8, 32], strides = [1, 1]} : vector<8x96xf32> to vector<8x32xf32>
      %220 = vector.broadcast %21 : vector<1x32xf32> to vector<8x32xf32>
      %221 = arith.addf %219, %220 : vector<8x32xf32>
      %222 = arith.mulf %209, %221 : vector<8x32xf32>
      %223 = arith.addf %218, %222 : vector<8x32xf32>
      %224 = math.tanh %223 : vector<8x32xf32>
      %cst_72 = arith.constant 1.000000e+00 : f32
      %225 = vector.broadcast %cst_72 : f32 to vector<8x32xf32>
      %226 = arith.subf %225, %217 : vector<8x32xf32>
      %227 = arith.mulf %226, %224 : vector<8x32xf32>
      %228 = arith.mulf %217, %195 : vector<8x32xf32>
      %229 = arith.addf %227, %228 : vector<8x32xf32>
      %c0_73 = arith.constant 0 : index
      %c40_74 = arith.constant 40 : index
      %c0_75 = arith.constant 0 : index
      %230 = vector.load %arg6[%c0_73, %c40_74, %c0_75] : memref<1x64x32xf32, #tpu.memory_space<vmem>>, vector<1x8x32xf32>
      %231 = vector.shape_cast %230 : vector<1x8x32xf32> to vector<8x32xf32>
      %232 = vector.shape_cast %229 : vector<8x32xf32> to vector<1x8x32xf32>
      tpu.vector_store %arg6[%c0_73, %c40_74, %c0_75], %232 {strides = array<i32>} : memref<1x64x32xf32, #tpu.memory_space<vmem>>, vector<1x8x32xf32>,
      %c48 = arith.constant 48 : index
      %c0_76 = arith.constant 0 : index
      %233 = vector.load %arg8[%c48, %c0_76] : memref<64x96xf32, #tpu.memory_space<vmem>>, vector<8x96xf32>
      %234 = arith.truncf %229 : vector<8x32xf32> to vector<8x32xbf16>
      %cst_77 = arith.constant dense<0.000000e+00> : vector<8x96xf32>
      %235 = tpu.matmul %234, %19, %cst_77 {dimension_numbers = #tpu.dot_dimension_numbers<[1], [0], [0], [1], [0, 0, 1, 1], [], []>} : vector<8x32xbf16>, vector<32x96xbf16>, vector<8x96xf32> -> vector<8x96xf32>
      %236 = vector.extract_strided_slice %233 {offsets = [0, 0], sizes = [8, 32], strides = [1, 1]} : vector<8x96xf32> to vector<8x32xf32>
      %237 = vector.extract_strided_slice %235 {offsets = [0, 0], sizes = [8, 32], strides = [1, 1]} : vector<8x96xf32> to vector<8x32xf32>
      %238 = arith.addf %236, %237 : vector<8x32xf32>
      %239 = arith.negf %238 : vector<8x32xf32>
      %240 = math.exp %239 : vector<8x32xf32>
      %cst_78 = arith.constant 1.000000e+00 : f32
      %241 = vector.broadcast %cst_78 : f32 to vector<8x32xf32>
      %242 = arith.addf %241, %240 : vector<8x32xf32>
      %243 = arith.divf %241, %242 : vector<8x32xf32>
      %244 = vector.extract_strided_slice %233 {offsets = [0, 32], sizes = [8, 32], strides = [1, 1]} : vector<8x96xf32> to vector<8x32xf32>
      %245 = vector.extract_strided_slice %235 {offsets = [0, 32], sizes = [8, 32], strides = [1, 1]} : vector<8x96xf32> to vector<8x32xf32>
      %246 = arith.addf %244, %245 : vector<8x32xf32>
      %247 = arith.negf %246 : vector<8x32xf32>
      %248 = math.exp %247 : vector<8x32xf32>
      %cst_79 = arith.constant 1.000000e+00 : f32
      %249 = vector.broadcast %cst_79 : f32 to vector<8x32xf32>
      %250 = arith.addf %249, %248 : vector<8x32xf32>
      %251 = arith.divf %249, %250 : vector<8x32xf32>
      %252 = vector.extract_strided_slice %233 {offsets = [0, 64], sizes = [8, 32], strides = [1, 1]} : vector<8x96xf32> to vector<8x32xf32>
      %253 = vector.extract_strided_slice %235 {offsets = [0, 64], sizes = [8, 32], strides = [1, 1]} : vector<8x96xf32> to vector<8x32xf32>
      %254 = vector.broadcast %21 : vector<1x32xf32> to vector<8x32xf32>
      %255 = arith.addf %253, %254 : vector<8x32xf32>
      %256 = arith.mulf %243, %255 : vector<8x32xf32>
      %257 = arith.addf %252, %256 : vector<8x32xf32>
      %258 = math.tanh %257 : vector<8x32xf32>
      %cst_80 = arith.constant 1.000000e+00 : f32
      %259 = vector.broadcast %cst_80 : f32 to vector<8x32xf32>
      %260 = arith.subf %259, %251 : vector<8x32xf32>
      %261 = arith.mulf %260, %258 : vector<8x32xf32>
      %262 = arith.mulf %251, %229 : vector<8x32xf32>
      %263 = arith.addf %261, %262 : vector<8x32xf32>
      %c0_81 = arith.constant 0 : index
      %c48_82 = arith.constant 48 : index
      %c0_83 = arith.constant 0 : index
      %264 = vector.load %arg6[%c0_81, %c48_82, %c0_83] : memref<1x64x32xf32, #tpu.memory_space<vmem>>, vector<1x8x32xf32>
      %265 = vector.shape_cast %264 : vector<1x8x32xf32> to vector<8x32xf32>
      %266 = vector.shape_cast %263 : vector<8x32xf32> to vector<1x8x32xf32>
      tpu.vector_store %arg6[%c0_81, %c48_82, %c0_83], %266 {strides = array<i32>} : memref<1x64x32xf32, #tpu.memory_space<vmem>>, vector<1x8x32xf32>,
      %c56 = arith.constant 56 : index
      %c0_84 = arith.constant 0 : index
      %267 = vector.load %arg8[%c56, %c0_84] : memref<64x96xf32, #tpu.memory_space<vmem>>, vector<8x96xf32>
      %268 = arith.truncf %263 : vector<8x32xf32> to vector<8x32xbf16>
      %cst_85 = arith.constant dense<0.000000e+00> : vector<8x96xf32>
      %269 = tpu.matmul %268, %19, %cst_85 {dimension_numbers = #tpu.dot_dimension_numbers<[1], [0], [0], [1], [0, 0, 1, 1], [], []>} : vector<8x32xbf16>, vector<32x96xbf16>, vector<8x96xf32> -> vector<8x96xf32>
      %270 = vector.extract_strided_slice %267 {offsets = [0, 0], sizes = [8, 32], strides = [1, 1]} : vector<8x96xf32> to vector<8x32xf32>
      %271 = vector.extract_strided_slice %269 {offsets = [0, 0], sizes = [8, 32], strides = [1, 1]} : vector<8x96xf32> to vector<8x32xf32>
      %272 = arith.addf %270, %271 : vector<8x32xf32>
      %273 = arith.negf %272 : vector<8x32xf32>
      %274 = math.exp %273 : vector<8x32xf32>
      %cst_86 = arith.constant 1.000000e+00 : f32
      %275 = vector.broadcast %cst_86 : f32 to vector<8x32xf32>
      %276 = arith.addf %275, %274 : vector<8x32xf32>
      %277 = arith.divf %275, %276 : vector<8x32xf32>
      %278 = vector.extract_strided_slice %267 {offsets = [0, 32], sizes = [8, 32], strides = [1, 1]} : vector<8x96xf32> to vector<8x32xf32>
      %279 = vector.extract_strided_slice %269 {offsets = [0, 32], sizes = [8, 32], strides = [1, 1]} : vector<8x96xf32> to vector<8x32xf32>
      %280 = arith.addf %278, %279 : vector<8x32xf32>
      %281 = arith.negf %280 : vector<8x32xf32>
      %282 = math.exp %281 : vector<8x32xf32>
      %cst_87 = arith.constant 1.000000e+00 : f32
      %283 = vector.broadcast %cst_87 : f32 to vector<8x32xf32>
      %284 = arith.addf %283, %282 : vector<8x32xf32>
      %285 = arith.divf %283, %284 : vector<8x32xf32>
      %286 = vector.extract_strided_slice %267 {offsets = [0, 64], sizes = [8, 32], strides = [1, 1]} : vector<8x96xf32> to vector<8x32xf32>
      %287 = vector.extract_strided_slice %269 {offsets = [0, 64], sizes = [8, 32], strides = [1, 1]} : vector<8x96xf32> to vector<8x32xf32>
      %288 = vector.broadcast %21 : vector<1x32xf32> to vector<8x32xf32>
      %289 = arith.addf %287, %288 : vector<8x32xf32>
      %290 = arith.mulf %277, %289 : vector<8x32xf32>
      %291 = arith.addf %286, %290 : vector<8x32xf32>
      %292 = math.tanh %291 : vector<8x32xf32>
      %cst_88 = arith.constant 1.000000e+00 : f32
      %293 = vector.broadcast %cst_88 : f32 to vector<8x32xf32>
      %294 = arith.subf %293, %285 : vector<8x32xf32>
      %295 = arith.mulf %294, %292 : vector<8x32xf32>
      %296 = arith.mulf %285, %263 : vector<8x32xf32>
      %297 = arith.addf %295, %296 : vector<8x32xf32>
      %c0_89 = arith.constant 0 : index
      %c56_90 = arith.constant 56 : index
      %c0_91 = arith.constant 0 : index
      %298 = vector.load %arg6[%c0_89, %c56_90, %c0_91] : memref<1x64x32xf32, #tpu.memory_space<vmem>>, vector<1x8x32xf32>
      %299 = vector.shape_cast %298 : vector<1x8x32xf32> to vector<8x32xf32>
      %300 = vector.shape_cast %297 : vector<8x32xf32> to vector<1x8x32xf32>
      tpu.vector_store %arg6[%c0_89, %c56_90, %c0_91], %300 {strides = array<i32>} : memref<1x64x32xf32, #tpu.memory_space<vmem>>, vector<1x8x32xf32>,
      %c0_92 = arith.constant 0 : index
      %c0_93 = arith.constant 0 : index
      %c0_94 = arith.constant 0 : index
      %301 = vector.load %arg7[%c0_92, %c0_93, %c0_94] : memref<1x8x32xf32, #tpu.memory_space<vmem>>, vector<1x8x32xf32>
      %302 = vector.shape_cast %301 : vector<1x8x32xf32> to vector<8x32xf32>
      %303 = vector.shape_cast %297 : vector<8x32xf32> to vector<1x8x32xf32>
      tpu.vector_store %arg7[%c0_92, %c0_93, %c0_94], %303 {strides = array<i32>} : memref<1x8x32xf32, #tpu.memory_space<vmem>>, vector<1x8x32xf32>,
    } else {
    }
    %c1_i32 = arith.constant 1 : i32
    %25 = arith.cmpi eq, %arg0, %c1_i32 : i32
    %26 = arith.extui %25 : i1 to i32
    %c0_i32_25 = arith.constant 0 : i32
    %27 = arith.cmpi ne, %26, %c0_i32_25 : i32
    scf.if %27 {
      %cst_26 = arith.constant 0.000000e+00 : f32
      %28 = vector.broadcast %cst_26 : f32 to vector<8x32xf32>
      %c56 = arith.constant 56 : index
      %c0_27 = arith.constant 0 : index
      %29 = vector.load %arg8[%c56, %c0_27] : memref<64x96xf32, #tpu.memory_space<vmem>>, vector<8x96xf32>
      %30 = arith.truncf %28 : vector<8x32xf32> to vector<8x32xbf16>
      %cst_28 = arith.constant dense<0.000000e+00> : vector<8x96xf32>
      %31 = tpu.matmul %30, %19, %cst_28 {dimension_numbers = #tpu.dot_dimension_numbers<[1], [0], [0], [1], [0, 0, 1, 1], [], []>} : vector<8x32xbf16>, vector<32x96xbf16>, vector<8x96xf32> -> vector<8x96xf32>
      %32 = vector.extract_strided_slice %29 {offsets = [0, 0], sizes = [8, 32], strides = [1, 1]} : vector<8x96xf32> to vector<8x32xf32>
      %33 = vector.extract_strided_slice %31 {offsets = [0, 0], sizes = [8, 32], strides = [1, 1]} : vector<8x96xf32> to vector<8x32xf32>
      %34 = arith.addf %32, %33 : vector<8x32xf32>
      %35 = arith.negf %34 : vector<8x32xf32>
      %36 = math.exp %35 : vector<8x32xf32>
      %cst_29 = arith.constant 1.000000e+00 : f32
      %37 = vector.broadcast %cst_29 : f32 to vector<8x32xf32>
      %38 = arith.addf %37, %36 : vector<8x32xf32>
      %39 = arith.divf %37, %38 : vector<8x32xf32>
      %40 = vector.extract_strided_slice %29 {offsets = [0, 32], sizes = [8, 32], strides = [1, 1]} : vector<8x96xf32> to vector<8x32xf32>
      %41 = vector.extract_strided_slice %31 {offsets = [0, 32], sizes = [8, 32], strides = [1, 1]} : vector<8x96xf32> to vector<8x32xf32>
      %42 = arith.addf %40, %41 : vector<8x32xf32>
      %43 = arith.negf %42 : vector<8x32xf32>
      %44 = math.exp %43 : vector<8x32xf32>
      %cst_30 = arith.constant 1.000000e+00 : f32
      %45 = vector.broadcast %cst_30 : f32 to vector<8x32xf32>
      %46 = arith.addf %45, %44 : vector<8x32xf32>
      %47 = arith.divf %45, %46 : vector<8x32xf32>
      %48 = vector.extract_strided_slice %29 {offsets = [0, 64], sizes = [8, 32], strides = [1, 1]} : vector<8x96xf32> to vector<8x32xf32>
      %49 = vector.extract_strided_slice %31 {offsets = [0, 64], sizes = [8, 32], strides = [1, 1]} : vector<8x96xf32> to vector<8x32xf32>
      %50 = vector.broadcast %21 : vector<1x32xf32> to vector<8x32xf32>
      %51 = arith.addf %49, %50 : vector<8x32xf32>
      %52 = arith.mulf %39, %51 : vector<8x32xf32>
      %53 = arith.addf %48, %52 : vector<8x32xf32>
      %54 = math.tanh %53 : vector<8x32xf32>
      %cst_31 = arith.constant 1.000000e+00 : f32
      %55 = vector.broadcast %cst_31 : f32 to vector<8x32xf32>
      %56 = arith.subf %55, %47 : vector<8x32xf32>
      %57 = arith.mulf %56, %54 : vector<8x32xf32>
      %58 = arith.mulf %47, %28 : vector<8x32xf32>
      %59 = arith.addf %57, %58 : vector<8x32xf32>
      %c0_32 = arith.constant 0 : index
      %c56_33 = arith.constant 56 : index
      %c0_34 = arith.constant 0 : index
      %60 = vector.load %arg6[%c0_32, %c56_33, %c0_34] : memref<1x64x32xf32, #tpu.memory_space<vmem>>, vector<1x8x32xf32>
      %61 = vector.shape_cast %60 : vector<1x8x32xf32> to vector<8x32xf32>
      %62 = vector.shape_cast %59 : vector<8x32xf32> to vector<1x8x32xf32>
      tpu.vector_store %arg6[%c0_32, %c56_33, %c0_34], %62 {strides = array<i32>} : memref<1x64x32xf32, #tpu.memory_space<vmem>>, vector<1x8x32xf32>,
      %c48 = arith.constant 48 : index
      %c0_35 = arith.constant 0 : index
      %63 = vector.load %arg8[%c48, %c0_35] : memref<64x96xf32, #tpu.memory_space<vmem>>, vector<8x96xf32>
      %64 = arith.truncf %59 : vector<8x32xf32> to vector<8x32xbf16>
      %cst_36 = arith.constant dense<0.000000e+00> : vector<8x96xf32>
      %65 = tpu.matmul %64, %19, %cst_36 {dimension_numbers = #tpu.dot_dimension_numbers<[1], [0], [0], [1], [0, 0, 1, 1], [], []>} : vector<8x32xbf16>, vector<32x96xbf16>, vector<8x96xf32> -> vector<8x96xf32>
      %66 = vector.extract_strided_slice %63 {offsets = [0, 0], sizes = [8, 32], strides = [1, 1]} : vector<8x96xf32> to vector<8x32xf32>
      %67 = vector.extract_strided_slice %65 {offsets = [0, 0], sizes = [8, 32], strides = [1, 1]} : vector<8x96xf32> to vector<8x32xf32>
      %68 = arith.addf %66, %67 : vector<8x32xf32>
      %69 = arith.negf %68 : vector<8x32xf32>
      %70 = math.exp %69 : vector<8x32xf32>
      %cst_37 = arith.constant 1.000000e+00 : f32
      %71 = vector.broadcast %cst_37 : f32 to vector<8x32xf32>
      %72 = arith.addf %71, %70 : vector<8x32xf32>
      %73 = arith.divf %71, %72 : vector<8x32xf32>
      %74 = vector.extract_strided_slice %63 {offsets = [0, 32], sizes = [8, 32], strides = [1, 1]} : vector<8x96xf32> to vector<8x32xf32>
      %75 = vector.extract_strided_slice %65 {offsets = [0, 32], sizes = [8, 32], strides = [1, 1]} : vector<8x96xf32> to vector<8x32xf32>
      %76 = arith.addf %74, %75 : vector<8x32xf32>
      %77 = arith.negf %76 : vector<8x32xf32>
      %78 = math.exp %77 : vector<8x32xf32>
      %cst_38 = arith.constant 1.000000e+00 : f32
      %79 = vector.broadcast %cst_38 : f32 to vector<8x32xf32>
      %80 = arith.addf %79, %78 : vector<8x32xf32>
      %81 = arith.divf %79, %80 : vector<8x32xf32>
      %82 = vector.extract_strided_slice %63 {offsets = [0, 64], sizes = [8, 32], strides = [1, 1]} : vector<8x96xf32> to vector<8x32xf32>
      %83 = vector.extract_strided_slice %65 {offsets = [0, 64], sizes = [8, 32], strides = [1, 1]} : vector<8x96xf32> to vector<8x32xf32>
      %84 = vector.broadcast %21 : vector<1x32xf32> to vector<8x32xf32>
      %85 = arith.addf %83, %84 : vector<8x32xf32>
      %86 = arith.mulf %73, %85 : vector<8x32xf32>
      %87 = arith.addf %82, %86 : vector<8x32xf32>
      %88 = math.tanh %87 : vector<8x32xf32>
      %cst_39 = arith.constant 1.000000e+00 : f32
      %89 = vector.broadcast %cst_39 : f32 to vector<8x32xf32>
      %90 = arith.subf %89, %81 : vector<8x32xf32>
      %91 = arith.mulf %90, %88 : vector<8x32xf32>
      %92 = arith.mulf %81, %59 : vector<8x32xf32>
      %93 = arith.addf %91, %92 : vector<8x32xf32>
      %c0_40 = arith.constant 0 : index
      %c48_41 = arith.constant 48 : index
      %c0_42 = arith.constant 0 : index
      %94 = vector.load %arg6[%c0_40, %c48_41, %c0_42] : memref<1x64x32xf32, #tpu.memory_space<vmem>>, vector<1x8x32xf32>
      %95 = vector.shape_cast %94 : vector<1x8x32xf32> to vector<8x32xf32>
      %96 = vector.shape_cast %93 : vector<8x32xf32> to vector<1x8x32xf32>
      tpu.vector_store %arg6[%c0_40, %c48_41, %c0_42], %96 {strides = array<i32>} : memref<1x64x32xf32, #tpu.memory_space<vmem>>, vector<1x8x32xf32>,
      %c40 = arith.constant 40 : index
      %c0_43 = arith.constant 0 : index
      %97 = vector.load %arg8[%c40, %c0_43] : memref<64x96xf32, #tpu.memory_space<vmem>>, vector<8x96xf32>
      %98 = arith.truncf %93 : vector<8x32xf32> to vector<8x32xbf16>
      %cst_44 = arith.constant dense<0.000000e+00> : vector<8x96xf32>
      %99 = tpu.matmul %98, %19, %cst_44 {dimension_numbers = #tpu.dot_dimension_numbers<[1], [0], [0], [1], [0, 0, 1, 1], [], []>} : vector<8x32xbf16>, vector<32x96xbf16>, vector<8x96xf32> -> vector<8x96xf32>
      %100 = vector.extract_strided_slice %97 {offsets = [0, 0], sizes = [8, 32], strides = [1, 1]} : vector<8x96xf32> to vector<8x32xf32>
      %101 = vector.extract_strided_slice %99 {offsets = [0, 0], sizes = [8, 32], strides = [1, 1]} : vector<8x96xf32> to vector<8x32xf32>
      %102 = arith.addf %100, %101 : vector<8x32xf32>
      %103 = arith.negf %102 : vector<8x32xf32>
      %104 = math.exp %103 : vector<8x32xf32>
      %cst_45 = arith.constant 1.000000e+00 : f32
      %105 = vector.broadcast %cst_45 : f32 to vector<8x32xf32>
      %106 = arith.addf %105, %104 : vector<8x32xf32>
      %107 = arith.divf %105, %106 : vector<8x32xf32>
      %108 = vector.extract_strided_slice %97 {offsets = [0, 32], sizes = [8, 32], strides = [1, 1]} : vector<8x96xf32> to vector<8x32xf32>
      %109 = vector.extract_strided_slice %99 {offsets = [0, 32], sizes = [8, 32], strides = [1, 1]} : vector<8x96xf32> to vector<8x32xf32>
      %110 = arith.addf %108, %109 : vector<8x32xf32>
      %111 = arith.negf %110 : vector<8x32xf32>
      %112 = math.exp %111 : vector<8x32xf32>
      %cst_46 = arith.constant 1.000000e+00 : f32
      %113 = vector.broadcast %cst_46 : f32 to vector<8x32xf32>
      %114 = arith.addf %113, %112 : vector<8x32xf32>
      %115 = arith.divf %113, %114 : vector<8x32xf32>
      %116 = vector.extract_strided_slice %97 {offsets = [0, 64], sizes = [8, 32], strides = [1, 1]} : vector<8x96xf32> to vector<8x32xf32>
      %117 = vector.extract_strided_slice %99 {offsets = [0, 64], sizes = [8, 32], strides = [1, 1]} : vector<8x96xf32> to vector<8x32xf32>
      %118 = vector.broadcast %21 : vector<1x32xf32> to vector<8x32xf32>
      %119 = arith.addf %117, %118 : vector<8x32xf32>
      %120 = arith.mulf %107, %119 : vector<8x32xf32>
      %121 = arith.addf %116, %120 : vector<8x32xf32>
      %122 = math.tanh %121 : vector<8x32xf32>
      %cst_47 = arith.constant 1.000000e+00 : f32
      %123 = vector.broadcast %cst_47 : f32 to vector<8x32xf32>
      %124 = arith.subf %123, %115 : vector<8x32xf32>
      %125 = arith.mulf %124, %122 : vector<8x32xf32>
      %126 = arith.mulf %115, %93 : vector<8x32xf32>
      %127 = arith.addf %125, %126 : vector<8x32xf32>
      %c0_48 = arith.constant 0 : index
      %c40_49 = arith.constant 40 : index
      %c0_50 = arith.constant 0 : index
      %128 = vector.load %arg6[%c0_48, %c40_49, %c0_50] : memref<1x64x32xf32, #tpu.memory_space<vmem>>, vector<1x8x32xf32>
      %129 = vector.shape_cast %128 : vector<1x8x32xf32> to vector<8x32xf32>
      %130 = vector.shape_cast %127 : vector<8x32xf32> to vector<1x8x32xf32>
      tpu.vector_store %arg6[%c0_48, %c40_49, %c0_50], %130 {strides = array<i32>} : memref<1x64x32xf32, #tpu.memory_space<vmem>>, vector<1x8x32xf32>,
      %c32 = arith.constant 32 : index
      %c0_51 = arith.constant 0 : index
      %131 = vector.load %arg8[%c32, %c0_51] : memref<64x96xf32, #tpu.memory_space<vmem>>, vector<8x96xf32>
      %132 = arith.truncf %127 : vector<8x32xf32> to vector<8x32xbf16>
      %cst_52 = arith.constant dense<0.000000e+00> : vector<8x96xf32>
      %133 = tpu.matmul %132, %19, %cst_52 {dimension_numbers = #tpu.dot_dimension_numbers<[1], [0], [0], [1], [0, 0, 1, 1], [], []>} : vector<8x32xbf16>, vector<32x96xbf16>, vector<8x96xf32> -> vector<8x96xf32>
      %134 = vector.extract_strided_slice %131 {offsets = [0, 0], sizes = [8, 32], strides = [1, 1]} : vector<8x96xf32> to vector<8x32xf32>
      %135 = vector.extract_strided_slice %133 {offsets = [0, 0], sizes = [8, 32], strides = [1, 1]} : vector<8x96xf32> to vector<8x32xf32>
      %136 = arith.addf %134, %135 : vector<8x32xf32>
      %137 = arith.negf %136 : vector<8x32xf32>
      %138 = math.exp %137 : vector<8x32xf32>
      %cst_53 = arith.constant 1.000000e+00 : f32
      %139 = vector.broadcast %cst_53 : f32 to vector<8x32xf32>
      %140 = arith.addf %139, %138 : vector<8x32xf32>
      %141 = arith.divf %139, %140 : vector<8x32xf32>
      %142 = vector.extract_strided_slice %131 {offsets = [0, 32], sizes = [8, 32], strides = [1, 1]} : vector<8x96xf32> to vector<8x32xf32>
      %143 = vector.extract_strided_slice %133 {offsets = [0, 32], sizes = [8, 32], strides = [1, 1]} : vector<8x96xf32> to vector<8x32xf32>
      %144 = arith.addf %142, %143 : vector<8x32xf32>
      %145 = arith.negf %144 : vector<8x32xf32>
      %146 = math.exp %145 : vector<8x32xf32>
      %cst_54 = arith.constant 1.000000e+00 : f32
      %147 = vector.broadcast %cst_54 : f32 to vector<8x32xf32>
      %148 = arith.addf %147, %146 : vector<8x32xf32>
      %149 = arith.divf %147, %148 : vector<8x32xf32>
      %150 = vector.extract_strided_slice %131 {offsets = [0, 64], sizes = [8, 32], strides = [1, 1]} : vector<8x96xf32> to vector<8x32xf32>
      %151 = vector.extract_strided_slice %133 {offsets = [0, 64], sizes = [8, 32], strides = [1, 1]} : vector<8x96xf32> to vector<8x32xf32>
      %152 = vector.broadcast %21 : vector<1x32xf32> to vector<8x32xf32>
      %153 = arith.addf %151, %152 : vector<8x32xf32>
      %154 = arith.mulf %141, %153 : vector<8x32xf32>
      %155 = arith.addf %150, %154 : vector<8x32xf32>
      %156 = math.tanh %155 : vector<8x32xf32>
      %cst_55 = arith.constant 1.000000e+00 : f32
      %157 = vector.broadcast %cst_55 : f32 to vector<8x32xf32>
      %158 = arith.subf %157, %149 : vector<8x32xf32>
      %159 = arith.mulf %158, %156 : vector<8x32xf32>
      %160 = arith.mulf %149, %127 : vector<8x32xf32>
      %161 = arith.addf %159, %160 : vector<8x32xf32>
      %c0_56 = arith.constant 0 : index
      %c32_57 = arith.constant 32 : index
      %c0_58 = arith.constant 0 : index
      %162 = vector.load %arg6[%c0_56, %c32_57, %c0_58] : memref<1x64x32xf32, #tpu.memory_space<vmem>>, vector<1x8x32xf32>
      %163 = vector.shape_cast %162 : vector<1x8x32xf32> to vector<8x32xf32>
      %164 = vector.shape_cast %161 : vector<8x32xf32> to vector<1x8x32xf32>
      tpu.vector_store %arg6[%c0_56, %c32_57, %c0_58], %164 {strides = array<i32>} : memref<1x64x32xf32, #tpu.memory_space<vmem>>, vector<1x8x32xf32>,
      %c24 = arith.constant 24 : index
      %c0_59 = arith.constant 0 : index
      %165 = vector.load %arg8[%c24, %c0_59] : memref<64x96xf32, #tpu.memory_space<vmem>>, vector<8x96xf32>
      %166 = arith.truncf %161 : vector<8x32xf32> to vector<8x32xbf16>
      %cst_60 = arith.constant dense<0.000000e+00> : vector<8x96xf32>
      %167 = tpu.matmul %166, %19, %cst_60 {dimension_numbers = #tpu.dot_dimension_numbers<[1], [0], [0], [1], [0, 0, 1, 1], [], []>} : vector<8x32xbf16>, vector<32x96xbf16>, vector<8x96xf32> -> vector<8x96xf32>
      %168 = vector.extract_strided_slice %165 {offsets = [0, 0], sizes = [8, 32], strides = [1, 1]} : vector<8x96xf32> to vector<8x32xf32>
      %169 = vector.extract_strided_slice %167 {offsets = [0, 0], sizes = [8, 32], strides = [1, 1]} : vector<8x96xf32> to vector<8x32xf32>
      %170 = arith.addf %168, %169 : vector<8x32xf32>
      %171 = arith.negf %170 : vector<8x32xf32>
      %172 = math.exp %171 : vector<8x32xf32>
      %cst_61 = arith.constant 1.000000e+00 : f32
      %173 = vector.broadcast %cst_61 : f32 to vector<8x32xf32>
      %174 = arith.addf %173, %172 : vector<8x32xf32>
      %175 = arith.divf %173, %174 : vector<8x32xf32>
      %176 = vector.extract_strided_slice %165 {offsets = [0, 32], sizes = [8, 32], strides = [1, 1]} : vector<8x96xf32> to vector<8x32xf32>
      %177 = vector.extract_strided_slice %167 {offsets = [0, 32], sizes = [8, 32], strides = [1, 1]} : vector<8x96xf32> to vector<8x32xf32>
      %178 = arith.addf %176, %177 : vector<8x32xf32>
      %179 = arith.negf %178 : vector<8x32xf32>
      %180 = math.exp %179 : vector<8x32xf32>
      %cst_62 = arith.constant 1.000000e+00 : f32
      %181 = vector.broadcast %cst_62 : f32 to vector<8x32xf32>
      %182 = arith.addf %181, %180 : vector<8x32xf32>
      %183 = arith.divf %181, %182 : vector<8x32xf32>
      %184 = vector.extract_strided_slice %165 {offsets = [0, 64], sizes = [8, 32], strides = [1, 1]} : vector<8x96xf32> to vector<8x32xf32>
      %185 = vector.extract_strided_slice %167 {offsets = [0, 64], sizes = [8, 32], strides = [1, 1]} : vector<8x96xf32> to vector<8x32xf32>
      %186 = vector.broadcast %21 : vector<1x32xf32> to vector<8x32xf32>
      %187 = arith.addf %185, %186 : vector<8x32xf32>
      %188 = arith.mulf %175, %187 : vector<8x32xf32>
      %189 = arith.addf %184, %188 : vector<8x32xf32>
      %190 = math.tanh %189 : vector<8x32xf32>
      %cst_63 = arith.constant 1.000000e+00 : f32
      %191 = vector.broadcast %cst_63 : f32 to vector<8x32xf32>
      %192 = arith.subf %191, %183 : vector<8x32xf32>
      %193 = arith.mulf %192, %190 : vector<8x32xf32>
      %194 = arith.mulf %183, %161 : vector<8x32xf32>
      %195 = arith.addf %193, %194 : vector<8x32xf32>
      %c0_64 = arith.constant 0 : index
      %c24_65 = arith.constant 24 : index
      %c0_66 = arith.constant 0 : index
      %196 = vector.load %arg6[%c0_64, %c24_65, %c0_66] : memref<1x64x32xf32, #tpu.memory_space<vmem>>, vector<1x8x32xf32>
      %197 = vector.shape_cast %196 : vector<1x8x32xf32> to vector<8x32xf32>
      %198 = vector.shape_cast %195 : vector<8x32xf32> to vector<1x8x32xf32>
      tpu.vector_store %arg6[%c0_64, %c24_65, %c0_66], %198 {strides = array<i32>} : memref<1x64x32xf32, #tpu.memory_space<vmem>>, vector<1x8x32xf32>,
      %c16 = arith.constant 16 : index
      %c0_67 = arith.constant 0 : index
      %199 = vector.load %arg8[%c16, %c0_67] : memref<64x96xf32, #tpu.memory_space<vmem>>, vector<8x96xf32>
      %200 = arith.truncf %195 : vector<8x32xf32> to vector<8x32xbf16>
      %cst_68 = arith.constant dense<0.000000e+00> : vector<8x96xf32>
      %201 = tpu.matmul %200, %19, %cst_68 {dimension_numbers = #tpu.dot_dimension_numbers<[1], [0], [0], [1], [0, 0, 1, 1], [], []>} : vector<8x32xbf16>, vector<32x96xbf16>, vector<8x96xf32> -> vector<8x96xf32>
      %202 = vector.extract_strided_slice %199 {offsets = [0, 0], sizes = [8, 32], strides = [1, 1]} : vector<8x96xf32> to vector<8x32xf32>
      %203 = vector.extract_strided_slice %201 {offsets = [0, 0], sizes = [8, 32], strides = [1, 1]} : vector<8x96xf32> to vector<8x32xf32>
      %204 = arith.addf %202, %203 : vector<8x32xf32>
      %205 = arith.negf %204 : vector<8x32xf32>
      %206 = math.exp %205 : vector<8x32xf32>
      %cst_69 = arith.constant 1.000000e+00 : f32
      %207 = vector.broadcast %cst_69 : f32 to vector<8x32xf32>
      %208 = arith.addf %207, %206 : vector<8x32xf32>
      %209 = arith.divf %207, %208 : vector<8x32xf32>
      %210 = vector.extract_strided_slice %199 {offsets = [0, 32], sizes = [8, 32], strides = [1, 1]} : vector<8x96xf32> to vector<8x32xf32>
      %211 = vector.extract_strided_slice %201 {offsets = [0, 32], sizes = [8, 32], strides = [1, 1]} : vector<8x96xf32> to vector<8x32xf32>
      %212 = arith.addf %210, %211 : vector<8x32xf32>
      %213 = arith.negf %212 : vector<8x32xf32>
      %214 = math.exp %213 : vector<8x32xf32>
      %cst_70 = arith.constant 1.000000e+00 : f32
      %215 = vector.broadcast %cst_70 : f32 to vector<8x32xf32>
      %216 = arith.addf %215, %214 : vector<8x32xf32>
      %217 = arith.divf %215, %216 : vector<8x32xf32>
      %218 = vector.extract_strided_slice %199 {offsets = [0, 64], sizes = [8, 32], strides = [1, 1]} : vector<8x96xf32> to vector<8x32xf32>
      %219 = vector.extract_strided_slice %201 {offsets = [0, 64], sizes = [8, 32], strides = [1, 1]} : vector<8x96xf32> to vector<8x32xf32>
      %220 = vector.broadcast %21 : vector<1x32xf32> to vector<8x32xf32>
      %221 = arith.addf %219, %220 : vector<8x32xf32>
      %222 = arith.mulf %209, %221 : vector<8x32xf32>
      %223 = arith.addf %218, %222 : vector<8x32xf32>
      %224 = math.tanh %223 : vector<8x32xf32>
      %cst_71 = arith.constant 1.000000e+00 : f32
      %225 = vector.broadcast %cst_71 : f32 to vector<8x32xf32>
      %226 = arith.subf %225, %217 : vector<8x32xf32>
      %227 = arith.mulf %226, %224 : vector<8x32xf32>
      %228 = arith.mulf %217, %195 : vector<8x32xf32>
      %229 = arith.addf %227, %228 : vector<8x32xf32>
      %c0_72 = arith.constant 0 : index
      %c16_73 = arith.constant 16 : index
      %c0_74 = arith.constant 0 : index
      %230 = vector.load %arg6[%c0_72, %c16_73, %c0_74] : memref<1x64x32xf32, #tpu.memory_space<vmem>>, vector<1x8x32xf32>
      %231 = vector.shape_cast %230 : vector<1x8x32xf32> to vector<8x32xf32>
      %232 = vector.shape_cast %229 : vector<8x32xf32> to vector<1x8x32xf32>
      tpu.vector_store %arg6[%c0_72, %c16_73, %c0_74], %232 {strides = array<i32>} : memref<1x64x32xf32, #tpu.memory_space<vmem>>, vector<1x8x32xf32>,
      %c8 = arith.constant 8 : index
      %c0_75 = arith.constant 0 : index
      %233 = vector.load %arg8[%c8, %c0_75] : memref<64x96xf32, #tpu.memory_space<vmem>>, vector<8x96xf32>
      %234 = arith.truncf %229 : vector<8x32xf32> to vector<8x32xbf16>
      %cst_76 = arith.constant dense<0.000000e+00> : vector<8x96xf32>
      %235 = tpu.matmul %234, %19, %cst_76 {dimension_numbers = #tpu.dot_dimension_numbers<[1], [0], [0], [1], [0, 0, 1, 1], [], []>} : vector<8x32xbf16>, vector<32x96xbf16>, vector<8x96xf32> -> vector<8x96xf32>
      %236 = vector.extract_strided_slice %233 {offsets = [0, 0], sizes = [8, 32], strides = [1, 1]} : vector<8x96xf32> to vector<8x32xf32>
      %237 = vector.extract_strided_slice %235 {offsets = [0, 0], sizes = [8, 32], strides = [1, 1]} : vector<8x96xf32> to vector<8x32xf32>
      %238 = arith.addf %236, %237 : vector<8x32xf32>
      %239 = arith.negf %238 : vector<8x32xf32>
      %240 = math.exp %239 : vector<8x32xf32>
      %cst_77 = arith.constant 1.000000e+00 : f32
      %241 = vector.broadcast %cst_77 : f32 to vector<8x32xf32>
      %242 = arith.addf %241, %240 : vector<8x32xf32>
      %243 = arith.divf %241, %242 : vector<8x32xf32>
      %244 = vector.extract_strided_slice %233 {offsets = [0, 32], sizes = [8, 32], strides = [1, 1]} : vector<8x96xf32> to vector<8x32xf32>
      %245 = vector.extract_strided_slice %235 {offsets = [0, 32], sizes = [8, 32], strides = [1, 1]} : vector<8x96xf32> to vector<8x32xf32>
      %246 = arith.addf %244, %245 : vector<8x32xf32>
      %247 = arith.negf %246 : vector<8x32xf32>
      %248 = math.exp %247 : vector<8x32xf32>
      %cst_78 = arith.constant 1.000000e+00 : f32
      %249 = vector.broadcast %cst_78 : f32 to vector<8x32xf32>
      %250 = arith.addf %249, %248 : vector<8x32xf32>
      %251 = arith.divf %249, %250 : vector<8x32xf32>
      %252 = vector.extract_strided_slice %233 {offsets = [0, 64], sizes = [8, 32], strides = [1, 1]} : vector<8x96xf32> to vector<8x32xf32>
      %253 = vector.extract_strided_slice %235 {offsets = [0, 64], sizes = [8, 32], strides = [1, 1]} : vector<8x96xf32> to vector<8x32xf32>
      %254 = vector.broadcast %21 : vector<1x32xf32> to vector<8x32xf32>
      %255 = arith.addf %253, %254 : vector<8x32xf32>
      %256 = arith.mulf %243, %255 : vector<8x32xf32>
      %257 = arith.addf %252, %256 : vector<8x32xf32>
      %258 = math.tanh %257 : vector<8x32xf32>
      %cst_79 = arith.constant 1.000000e+00 : f32
      %259 = vector.broadcast %cst_79 : f32 to vector<8x32xf32>
      %260 = arith.subf %259, %251 : vector<8x32xf32>
      %261 = arith.mulf %260, %258 : vector<8x32xf32>
      %262 = arith.mulf %251, %229 : vector<8x32xf32>
      %263 = arith.addf %261, %262 : vector<8x32xf32>
      %c0_80 = arith.constant 0 : index
      %c8_81 = arith.constant 8 : index
      %c0_82 = arith.constant 0 : index
      %264 = vector.load %arg6[%c0_80, %c8_81, %c0_82] : memref<1x64x32xf32, #tpu.memory_space<vmem>>, vector<1x8x32xf32>
      %265 = vector.shape_cast %264 : vector<1x8x32xf32> to vector<8x32xf32>
      %266 = vector.shape_cast %263 : vector<8x32xf32> to vector<1x8x32xf32>
      tpu.vector_store %arg6[%c0_80, %c8_81, %c0_82], %266 {strides = array<i32>} : memref<1x64x32xf32, #tpu.memory_space<vmem>>, vector<1x8x32xf32>,
      %c0_83 = arith.constant 0 : index
      %c0_84 = arith.constant 0 : index
      %267 = vector.load %arg8[%c0_83, %c0_84] : memref<64x96xf32, #tpu.memory_space<vmem>>, vector<8x96xf32>
      %268 = arith.truncf %263 : vector<8x32xf32> to vector<8x32xbf16>
      %cst_85 = arith.constant dense<0.000000e+00> : vector<8x96xf32>
      %269 = tpu.matmul %268, %19, %cst_85 {dimension_numbers = #tpu.dot_dimension_numbers<[1], [0], [0], [1], [0, 0, 1, 1], [], []>} : vector<8x32xbf16>, vector<32x96xbf16>, vector<8x96xf32> -> vector<8x96xf32>
      %270 = vector.extract_strided_slice %267 {offsets = [0, 0], sizes = [8, 32], strides = [1, 1]} : vector<8x96xf32> to vector<8x32xf32>
      %271 = vector.extract_strided_slice %269 {offsets = [0, 0], sizes = [8, 32], strides = [1, 1]} : vector<8x96xf32> to vector<8x32xf32>
      %272 = arith.addf %270, %271 : vector<8x32xf32>
      %273 = arith.negf %272 : vector<8x32xf32>
      %274 = math.exp %273 : vector<8x32xf32>
      %cst_86 = arith.constant 1.000000e+00 : f32
      %275 = vector.broadcast %cst_86 : f32 to vector<8x32xf32>
      %276 = arith.addf %275, %274 : vector<8x32xf32>
      %277 = arith.divf %275, %276 : vector<8x32xf32>
      %278 = vector.extract_strided_slice %267 {offsets = [0, 32], sizes = [8, 32], strides = [1, 1]} : vector<8x96xf32> to vector<8x32xf32>
      %279 = vector.extract_strided_slice %269 {offsets = [0, 32], sizes = [8, 32], strides = [1, 1]} : vector<8x96xf32> to vector<8x32xf32>
      %280 = arith.addf %278, %279 : vector<8x32xf32>
      %281 = arith.negf %280 : vector<8x32xf32>
      %282 = math.exp %281 : vector<8x32xf32>
      %cst_87 = arith.constant 1.000000e+00 : f32
      %283 = vector.broadcast %cst_87 : f32 to vector<8x32xf32>
      %284 = arith.addf %283, %282 : vector<8x32xf32>
      %285 = arith.divf %283, %284 : vector<8x32xf32>
      %286 = vector.extract_strided_slice %267 {offsets = [0, 64], sizes = [8, 32], strides = [1, 1]} : vector<8x96xf32> to vector<8x32xf32>
      %287 = vector.extract_strided_slice %269 {offsets = [0, 64], sizes = [8, 32], strides = [1, 1]} : vector<8x96xf32> to vector<8x32xf32>
      %288 = vector.broadcast %21 : vector<1x32xf32> to vector<8x32xf32>
      %289 = arith.addf %287, %288 : vector<8x32xf32>
      %290 = arith.mulf %277, %289 : vector<8x32xf32>
      %291 = arith.addf %286, %290 : vector<8x32xf32>
      %292 = math.tanh %291 : vector<8x32xf32>
      %cst_88 = arith.constant 1.000000e+00 : f32
      %293 = vector.broadcast %cst_88 : f32 to vector<8x32xf32>
      %294 = arith.subf %293, %285 : vector<8x32xf32>
      %295 = arith.mulf %294, %292 : vector<8x32xf32>
      %296 = arith.mulf %285, %263 : vector<8x32xf32>
      %297 = arith.addf %295, %296 : vector<8x32xf32>
      %c0_89 = arith.constant 0 : index
      %c0_90 = arith.constant 0 : index
      %c0_91 = arith.constant 0 : index
      %298 = vector.load %arg6[%c0_89, %c0_90, %c0_91] : memref<1x64x32xf32, #tpu.memory_space<vmem>>, vector<1x8x32xf32>
      %299 = vector.shape_cast %298 : vector<1x8x32xf32> to vector<8x32xf32>
      %300 = vector.shape_cast %297 : vector<8x32xf32> to vector<1x8x32xf32>
      tpu.vector_store %arg6[%c0_89, %c0_90, %c0_91], %300 {strides = array<i32>} : memref<1x64x32xf32, #tpu.memory_space<vmem>>, vector<1x8x32xf32>,
      %c0_92 = arith.constant 0 : index
      %c0_93 = arith.constant 0 : index
      %c0_94 = arith.constant 0 : index
      %301 = vector.load %arg7[%c0_92, %c0_93, %c0_94] : memref<1x8x32xf32, #tpu.memory_space<vmem>>, vector<1x8x32xf32>
      %302 = vector.shape_cast %301 : vector<1x8x32xf32> to vector<8x32xf32>
      %303 = vector.shape_cast %297 : vector<8x32xf32> to vector<1x8x32xf32>
      tpu.vector_store %arg7[%c0_92, %c0_93, %c0_94], %303 {strides = array<i32>} : memref<1x8x32xf32, #tpu.memory_space<vmem>>, vector<1x8x32xf32>,
    } else {
    }
    return
  }
  func.func @transform_0(%arg0: i32) -> (i32, i32, i32) {
    %c0_i32 = arith.constant 0 : i32
    %c0_i32_0 = arith.constant 0 : i32
    %c0_i32_1 = arith.constant 0 : i32
    %c0_i32_2 = arith.constant 0 : i32
    return %c0_i32, %c0_i32_0, %c0_i32_1 : i32, i32, i32
  }
  func.func @transform_1(%arg0: i32) -> (i32, i32, i32, i32) {
    %c0_i32 = arith.constant 0 : i32
    %c0_i32_0 = arith.constant 0 : i32
    %c0_i32_1 = arith.constant 0 : i32
    %c0_i32_2 = arith.constant 0 : i32
    return %arg0, %c0_i32, %c0_i32_0, %c0_i32_1 : i32, i32, i32, i32
  }
  func.func @transform_2(%arg0: i32) -> (i32, i32, i32) {
    %c0_i32 = arith.constant 0 : i32
    %c0_i32_0 = arith.constant 0 : i32
    %c0_i32_1 = arith.constant 0 : i32
    return %arg0, %c0_i32, %c0_i32_0 : i32, i32, i32
  }
  func.func @transform_3(%arg0: i32) -> (i32, i32, i32) {
    %c0_i32 = arith.constant 0 : i32
    %c0_i32_0 = arith.constant 0 : i32
    %c0_i32_1 = arith.constant 0 : i32
    return %arg0, %c0_i32, %c0_i32_0 : i32, i32, i32
  }
  func.func @transform_4(%arg0: i32) -> (i32, i32, i32) {
    %c0_i32 = arith.constant 0 : i32
    %c0_i32_0 = arith.constant 0 : i32
    %c0_i32_1 = arith.constant 0 : i32
    return %arg0, %c0_i32, %c0_i32_0 : i32, i32, i32
  }
  func.func @transform_5(%arg0: i32) -> (i32, i32, i32) {
    %c0_i32 = arith.constant 0 : i32
    %c0_i32_0 = arith.constant 0 : i32
    %c0_i32_1 = arith.constant 0 : i32
    return %arg0, %c0_i32, %c0_i32_0 : i32, i32, i32
  }
  func.func @transform_6(%arg0: i32) -> (i32, i32, i32) {
    %c0_i32 = arith.constant 0 : i32
    %c0_i32_0 = arith.constant 0 : i32
    %c0_i32_1 = arith.constant 0 : i32
    return %arg0, %c0_i32, %c0_i32_0 : i32, i32, i32
  }
}

module attributes {stable_mosaic.version = 11 : i64} {
  func.func @_bigru_layer_kernel(%arg0: i32, %arg1: memref<1x64x16xf32, #tpu.memory_space<vmem>>, %arg2: memref<1x1x16x96xbf16, #tpu.memory_space<vmem>>, %arg3: memref<1x32x96xbf16, #tpu.memory_space<vmem>>, %arg4: memref<1x1x96xf32, #tpu.memory_space<vmem>>, %arg5: memref<1x1x32xf32, #tpu.memory_space<vmem>>, %arg6: memref<1x64x32xf32, #tpu.memory_space<vmem>>, %arg7: memref<1x8x32xf32, #tpu.memory_space<vmem>>, %arg8: memref<64x96xf32, #tpu.memory_space<vmem>>) attributes {dimension_semantics = [#tpu.dimension_semantics<parallel>], iteration_bounds = array<i64: 2>, scalar_prefetch = 0 : i64, scratch_operands = 1 : i64, tpu.core_type = #tpu.core_type<tc>, window_params = [{pipeline_mode = #tpu.pipeline_mode<synchronous>, transform_indices = @transform_0, window_bounds = array<i64: 1, 64, 16>}, {transform_indices = @transform_1, window_bounds = array<i64: 1, 1, 16, 96>}, {transform_indices = @transform_2, window_bounds = array<i64: 1, 32, 96>}, {transform_indices = @transform_3, window_bounds = array<i64: 1, 1, 96>}, {transform_indices = @transform_4, window_bounds = array<i64: 1, 1, 32>}, {transform_indices = @transform_5, window_bounds = array<i64: 1, 64, 32>}, {transform_indices = @transform_6, window_bounds = array<i64: 1, 8, 32>}]} {
    %c0 = arith.constant 0 : index
    %c0_0 = arith.constant 0 : index
    %c0_1 = arith.constant 0 : index
    %0 = vector.load %arg1[%c0, %c0_0, %c0_1] : memref<1x64x16xf32, #tpu.memory_space<vmem>>, vector<1x64x16xf32>
    %1 = vector.shape_cast %0 : vector<1x64x16xf32> to vector<64x16xf32>
    %2 = arith.truncf %1 : vector<64x16xf32> to vector<64x16xbf16>
    %c0_2 = arith.constant 0 : index
    %c0_3 = arith.constant 0 : index
    %c0_4 = arith.constant 0 : index
    %c0_5 = arith.constant 0 : index
    %3 = vector.load %arg2[%c0_2, %c0_3, %c0_4, %c0_5] : memref<1x1x16x96xbf16, #tpu.memory_space<vmem>>, vector<1x1x16x96xbf16>
    %4 = vector.shape_cast %3 : vector<1x1x16x96xbf16> to vector<16x96xbf16>
    %cst = arith.constant dense<0.000000e+00> : vector<64x96xf32>
    %5 = tpu.matmul %2, %4, %cst {dimension_numbers = #tpu.dot_dimension_numbers<[1], [0], [0], [1], [0, 0, 1, 1], [], []>} : vector<64x16xbf16>, vector<16x96xbf16>, vector<64x96xf32> -> vector<64x96xf32>
    %c0_6 = arith.constant 0 : index
    %c0_7 = arith.constant 0 : index
    %c0_8 = arith.constant 0 : index
    %6 = vector.load %arg4[%c0_6, %c0_7, %c0_8] : memref<1x1x96xf32, #tpu.memory_space<vmem>>, vector<1x1x96xf32>
    %7 = vector.shape_cast %6 : vector<1x1x96xf32> to vector<1x96xf32>
    %8 = vector.broadcast %7 : vector<1x96xf32> to vector<64x96xf32>
    %9 = arith.addf %5, %8 : vector<64x96xf32>
    %c0_9 = arith.constant 0 : index
    %c0_10 = arith.constant 0 : index
    %10 = vector.load %arg8[%c0_9, %c0_10] : memref<64x96xf32, #tpu.memory_space<vmem>>, vector<64x96xf32>
    tpu.vector_store %arg8[%c0_9, %c0_10], %9 {strides = array<i32>} : memref<64x96xf32, #tpu.memory_space<vmem>>, vector<64x96xf32>,
    %c0_11 = arith.constant 0 : index
    %c0_12 = arith.constant 0 : index
    %c0_13 = arith.constant 0 : index
    %11 = vector.load %arg3[%c0_11, %c0_12, %c0_13] : memref<1x32x96xbf16, #tpu.memory_space<vmem>>, vector<1x32x96xbf16>
    %12 = vector.shape_cast %11 : vector<1x32x96xbf16> to vector<32x96xbf16>
    %c0_14 = arith.constant 0 : index
    %c0_15 = arith.constant 0 : index
    %c0_16 = arith.constant 0 : index
    %13 = vector.load %arg5[%c0_14, %c0_15, %c0_16] : memref<1x1x32xf32, #tpu.memory_space<vmem>>, vector<1x1x32xf32>
    %14 = vector.shape_cast %13 : vector<1x1x32xf32> to vector<1x32xf32>
    %c0_i32 = arith.constant 0 : i32
    %15 = arith.cmpi eq, %arg0, %c0_i32 : i32
    %16 = arith.extui %15 : i1 to i32
    %c0_i32_17 = arith.constant 0 : i32
    %17 = arith.cmpi ne, %16, %c0_i32_17 : i32
    scf.if %17 {
      %cst_19 = arith.constant 0.000000e+00 : f32
      %21 = vector.broadcast %cst_19 : f32 to vector<8x32xf32>
      %c0_20 = arith.constant 0 : index
      %c0_21 = arith.constant 0 : index
      %22 = vector.load %arg8[%c0_20, %c0_21] : memref<64x96xf32, #tpu.memory_space<vmem>>, vector<8x96xf32>
      %23 = arith.truncf %21 : vector<8x32xf32> to vector<8x32xbf16>
      %cst_22 = arith.constant dense<0.000000e+00> : vector<8x96xf32>
      %24 = tpu.matmul %23, %12, %cst_22 {dimension_numbers = #tpu.dot_dimension_numbers<[1], [0], [0], [1], [0, 0, 1, 1], [], []>} : vector<8x32xbf16>, vector<32x96xbf16>, vector<8x96xf32> -> vector<8x96xf32>
      %25 = vector.extract_strided_slice %22 {offsets = [0, 0], sizes = [8, 32], strides = [1, 1]} : vector<8x96xf32> to vector<8x32xf32>
      %26 = vector.extract_strided_slice %24 {offsets = [0, 0], sizes = [8, 32], strides = [1, 1]} : vector<8x96xf32> to vector<8x32xf32>
      %27 = arith.addf %25, %26 : vector<8x32xf32>
      %28 = arith.negf %27 : vector<8x32xf32>
      %29 = math.exp %28 : vector<8x32xf32>
      %cst_23 = arith.constant 1.000000e+00 : f32
      %30 = vector.broadcast %cst_23 : f32 to vector<8x32xf32>
      %31 = arith.addf %30, %29 : vector<8x32xf32>
      %32 = arith.divf %30, %31 : vector<8x32xf32>
      %33 = vector.extract_strided_slice %22 {offsets = [0, 32], sizes = [8, 32], strides = [1, 1]} : vector<8x96xf32> to vector<8x32xf32>
      %34 = vector.extract_strided_slice %24 {offsets = [0, 32], sizes = [8, 32], strides = [1, 1]} : vector<8x96xf32> to vector<8x32xf32>
      %35 = arith.addf %33, %34 : vector<8x32xf32>
      %36 = arith.negf %35 : vector<8x32xf32>
      %37 = math.exp %36 : vector<8x32xf32>
      %cst_24 = arith.constant 1.000000e+00 : f32
      %38 = vector.broadcast %cst_24 : f32 to vector<8x32xf32>
      %39 = arith.addf %38, %37 : vector<8x32xf32>
      %40 = arith.divf %38, %39 : vector<8x32xf32>
      %41 = vector.extract_strided_slice %22 {offsets = [0, 64], sizes = [8, 32], strides = [1, 1]} : vector<8x96xf32> to vector<8x32xf32>
      %42 = vector.extract_strided_slice %24 {offsets = [0, 64], sizes = [8, 32], strides = [1, 1]} : vector<8x96xf32> to vector<8x32xf32>
      %43 = vector.broadcast %14 : vector<1x32xf32> to vector<8x32xf32>
      %44 = arith.addf %42, %43 : vector<8x32xf32>
      %45 = arith.mulf %32, %44 : vector<8x32xf32>
      %46 = arith.addf %41, %45 : vector<8x32xf32>
      %47 = math.tanh %46 : vector<8x32xf32>
      %cst_25 = arith.constant 1.000000e+00 : f32
      %48 = vector.broadcast %cst_25 : f32 to vector<8x32xf32>
      %49 = arith.subf %48, %40 : vector<8x32xf32>
      %50 = arith.mulf %49, %47 : vector<8x32xf32>
      %51 = arith.mulf %40, %21 : vector<8x32xf32>
      %52 = arith.addf %50, %51 : vector<8x32xf32>
      %c0_26 = arith.constant 0 : index
      %c0_27 = arith.constant 0 : index
      %c0_28 = arith.constant 0 : index
      %53 = vector.load %arg6[%c0_26, %c0_27, %c0_28] : memref<1x64x32xf32, #tpu.memory_space<vmem>>, vector<1x8x32xf32>
      %54 = vector.shape_cast %53 : vector<1x8x32xf32> to vector<8x32xf32>
      %55 = vector.shape_cast %52 : vector<8x32xf32> to vector<1x8x32xf32>
      tpu.vector_store %arg6[%c0_26, %c0_27, %c0_28], %55 {strides = array<i32>} : memref<1x64x32xf32, #tpu.memory_space<vmem>>, vector<1x8x32xf32>,
      %c8 = arith.constant 8 : index
      %c0_29 = arith.constant 0 : index
      %56 = vector.load %arg8[%c8, %c0_29] : memref<64x96xf32, #tpu.memory_space<vmem>>, vector<8x96xf32>
      %57 = arith.truncf %52 : vector<8x32xf32> to vector<8x32xbf16>
      %cst_30 = arith.constant dense<0.000000e+00> : vector<8x96xf32>
      %58 = tpu.matmul %57, %12, %cst_30 {dimension_numbers = #tpu.dot_dimension_numbers<[1], [0], [0], [1], [0, 0, 1, 1], [], []>} : vector<8x32xbf16>, vector<32x96xbf16>, vector<8x96xf32> -> vector<8x96xf32>
      %59 = vector.extract_strided_slice %56 {offsets = [0, 0], sizes = [8, 32], strides = [1, 1]} : vector<8x96xf32> to vector<8x32xf32>
      %60 = vector.extract_strided_slice %58 {offsets = [0, 0], sizes = [8, 32], strides = [1, 1]} : vector<8x96xf32> to vector<8x32xf32>
      %61 = arith.addf %59, %60 : vector<8x32xf32>
      %62 = arith.negf %61 : vector<8x32xf32>
      %63 = math.exp %62 : vector<8x32xf32>
      %cst_31 = arith.constant 1.000000e+00 : f32
      %64 = vector.broadcast %cst_31 : f32 to vector<8x32xf32>
      %65 = arith.addf %64, %63 : vector<8x32xf32>
      %66 = arith.divf %64, %65 : vector<8x32xf32>
      %67 = vector.extract_strided_slice %56 {offsets = [0, 32], sizes = [8, 32], strides = [1, 1]} : vector<8x96xf32> to vector<8x32xf32>
      %68 = vector.extract_strided_slice %58 {offsets = [0, 32], sizes = [8, 32], strides = [1, 1]} : vector<8x96xf32> to vector<8x32xf32>
      %69 = arith.addf %67, %68 : vector<8x32xf32>
      %70 = arith.negf %69 : vector<8x32xf32>
      %71 = math.exp %70 : vector<8x32xf32>
      %cst_32 = arith.constant 1.000000e+00 : f32
      %72 = vector.broadcast %cst_32 : f32 to vector<8x32xf32>
      %73 = arith.addf %72, %71 : vector<8x32xf32>
      %74 = arith.divf %72, %73 : vector<8x32xf32>
      %75 = vector.extract_strided_slice %56 {offsets = [0, 64], sizes = [8, 32], strides = [1, 1]} : vector<8x96xf32> to vector<8x32xf32>
      %76 = vector.extract_strided_slice %58 {offsets = [0, 64], sizes = [8, 32], strides = [1, 1]} : vector<8x96xf32> to vector<8x32xf32>
      %77 = vector.broadcast %14 : vector<1x32xf32> to vector<8x32xf32>
      %78 = arith.addf %76, %77 : vector<8x32xf32>
      %79 = arith.mulf %66, %78 : vector<8x32xf32>
      %80 = arith.addf %75, %79 : vector<8x32xf32>
      %81 = math.tanh %80 : vector<8x32xf32>
      %cst_33 = arith.constant 1.000000e+00 : f32
      %82 = vector.broadcast %cst_33 : f32 to vector<8x32xf32>
      %83 = arith.subf %82, %74 : vector<8x32xf32>
      %84 = arith.mulf %83, %81 : vector<8x32xf32>
      %85 = arith.mulf %74, %52 : vector<8x32xf32>
      %86 = arith.addf %84, %85 : vector<8x32xf32>
      %c0_34 = arith.constant 0 : index
      %c8_35 = arith.constant 8 : index
      %c0_36 = arith.constant 0 : index
      %87 = vector.load %arg6[%c0_34, %c8_35, %c0_36] : memref<1x64x32xf32, #tpu.memory_space<vmem>>, vector<1x8x32xf32>
      %88 = vector.shape_cast %87 : vector<1x8x32xf32> to vector<8x32xf32>
      %89 = vector.shape_cast %86 : vector<8x32xf32> to vector<1x8x32xf32>
      tpu.vector_store %arg6[%c0_34, %c8_35, %c0_36], %89 {strides = array<i32>} : memref<1x64x32xf32, #tpu.memory_space<vmem>>, vector<1x8x32xf32>,
      %c16 = arith.constant 16 : index
      %c0_37 = arith.constant 0 : index
      %90 = vector.load %arg8[%c16, %c0_37] : memref<64x96xf32, #tpu.memory_space<vmem>>, vector<8x96xf32>
      %91 = arith.truncf %86 : vector<8x32xf32> to vector<8x32xbf16>
      %cst_38 = arith.constant dense<0.000000e+00> : vector<8x96xf32>
      %92 = tpu.matmul %91, %12, %cst_38 {dimension_numbers = #tpu.dot_dimension_numbers<[1], [0], [0], [1], [0, 0, 1, 1], [], []>} : vector<8x32xbf16>, vector<32x96xbf16>, vector<8x96xf32> -> vector<8x96xf32>
      %93 = vector.extract_strided_slice %90 {offsets = [0, 0], sizes = [8, 32], strides = [1, 1]} : vector<8x96xf32> to vector<8x32xf32>
      %94 = vector.extract_strided_slice %92 {offsets = [0, 0], sizes = [8, 32], strides = [1, 1]} : vector<8x96xf32> to vector<8x32xf32>
      %95 = arith.addf %93, %94 : vector<8x32xf32>
      %96 = arith.negf %95 : vector<8x32xf32>
      %97 = math.exp %96 : vector<8x32xf32>
      %cst_39 = arith.constant 1.000000e+00 : f32
      %98 = vector.broadcast %cst_39 : f32 to vector<8x32xf32>
      %99 = arith.addf %98, %97 : vector<8x32xf32>
      %100 = arith.divf %98, %99 : vector<8x32xf32>
      %101 = vector.extract_strided_slice %90 {offsets = [0, 32], sizes = [8, 32], strides = [1, 1]} : vector<8x96xf32> to vector<8x32xf32>
      %102 = vector.extract_strided_slice %92 {offsets = [0, 32], sizes = [8, 32], strides = [1, 1]} : vector<8x96xf32> to vector<8x32xf32>
      %103 = arith.addf %101, %102 : vector<8x32xf32>
      %104 = arith.negf %103 : vector<8x32xf32>
      %105 = math.exp %104 : vector<8x32xf32>
      %cst_40 = arith.constant 1.000000e+00 : f32
      %106 = vector.broadcast %cst_40 : f32 to vector<8x32xf32>
      %107 = arith.addf %106, %105 : vector<8x32xf32>
      %108 = arith.divf %106, %107 : vector<8x32xf32>
      %109 = vector.extract_strided_slice %90 {offsets = [0, 64], sizes = [8, 32], strides = [1, 1]} : vector<8x96xf32> to vector<8x32xf32>
      %110 = vector.extract_strided_slice %92 {offsets = [0, 64], sizes = [8, 32], strides = [1, 1]} : vector<8x96xf32> to vector<8x32xf32>
      %111 = vector.broadcast %14 : vector<1x32xf32> to vector<8x32xf32>
      %112 = arith.addf %110, %111 : vector<8x32xf32>
      %113 = arith.mulf %100, %112 : vector<8x32xf32>
      %114 = arith.addf %109, %113 : vector<8x32xf32>
      %115 = math.tanh %114 : vector<8x32xf32>
      %cst_41 = arith.constant 1.000000e+00 : f32
      %116 = vector.broadcast %cst_41 : f32 to vector<8x32xf32>
      %117 = arith.subf %116, %108 : vector<8x32xf32>
      %118 = arith.mulf %117, %115 : vector<8x32xf32>
      %119 = arith.mulf %108, %86 : vector<8x32xf32>
      %120 = arith.addf %118, %119 : vector<8x32xf32>
      %c0_42 = arith.constant 0 : index
      %c16_43 = arith.constant 16 : index
      %c0_44 = arith.constant 0 : index
      %121 = vector.load %arg6[%c0_42, %c16_43, %c0_44] : memref<1x64x32xf32, #tpu.memory_space<vmem>>, vector<1x8x32xf32>
      %122 = vector.shape_cast %121 : vector<1x8x32xf32> to vector<8x32xf32>
      %123 = vector.shape_cast %120 : vector<8x32xf32> to vector<1x8x32xf32>
      tpu.vector_store %arg6[%c0_42, %c16_43, %c0_44], %123 {strides = array<i32>} : memref<1x64x32xf32, #tpu.memory_space<vmem>>, vector<1x8x32xf32>,
      %c24 = arith.constant 24 : index
      %c0_45 = arith.constant 0 : index
      %124 = vector.load %arg8[%c24, %c0_45] : memref<64x96xf32, #tpu.memory_space<vmem>>, vector<8x96xf32>
      %125 = arith.truncf %120 : vector<8x32xf32> to vector<8x32xbf16>
      %cst_46 = arith.constant dense<0.000000e+00> : vector<8x96xf32>
      %126 = tpu.matmul %125, %12, %cst_46 {dimension_numbers = #tpu.dot_dimension_numbers<[1], [0], [0], [1], [0, 0, 1, 1], [], []>} : vector<8x32xbf16>, vector<32x96xbf16>, vector<8x96xf32> -> vector<8x96xf32>
      %127 = vector.extract_strided_slice %124 {offsets = [0, 0], sizes = [8, 32], strides = [1, 1]} : vector<8x96xf32> to vector<8x32xf32>
      %128 = vector.extract_strided_slice %126 {offsets = [0, 0], sizes = [8, 32], strides = [1, 1]} : vector<8x96xf32> to vector<8x32xf32>
      %129 = arith.addf %127, %128 : vector<8x32xf32>
      %130 = arith.negf %129 : vector<8x32xf32>
      %131 = math.exp %130 : vector<8x32xf32>
      %cst_47 = arith.constant 1.000000e+00 : f32
      %132 = vector.broadcast %cst_47 : f32 to vector<8x32xf32>
      %133 = arith.addf %132, %131 : vector<8x32xf32>
      %134 = arith.divf %132, %133 : vector<8x32xf32>
      %135 = vector.extract_strided_slice %124 {offsets = [0, 32], sizes = [8, 32], strides = [1, 1]} : vector<8x96xf32> to vector<8x32xf32>
      %136 = vector.extract_strided_slice %126 {offsets = [0, 32], sizes = [8, 32], strides = [1, 1]} : vector<8x96xf32> to vector<8x32xf32>
      %137 = arith.addf %135, %136 : vector<8x32xf32>
      %138 = arith.negf %137 : vector<8x32xf32>
      %139 = math.exp %138 : vector<8x32xf32>
      %cst_48 = arith.constant 1.000000e+00 : f32
      %140 = vector.broadcast %cst_48 : f32 to vector<8x32xf32>
      %141 = arith.addf %140, %139 : vector<8x32xf32>
      %142 = arith.divf %140, %141 : vector<8x32xf32>
      %143 = vector.extract_strided_slice %124 {offsets = [0, 64], sizes = [8, 32], strides = [1, 1]} : vector<8x96xf32> to vector<8x32xf32>
      %144 = vector.extract_strided_slice %126 {offsets = [0, 64], sizes = [8, 32], strides = [1, 1]} : vector<8x96xf32> to vector<8x32xf32>
      %145 = vector.broadcast %14 : vector<1x32xf32> to vector<8x32xf32>
      %146 = arith.addf %144, %145 : vector<8x32xf32>
      %147 = arith.mulf %134, %146 : vector<8x32xf32>
      %148 = arith.addf %143, %147 : vector<8x32xf32>
      %149 = math.tanh %148 : vector<8x32xf32>
      %cst_49 = arith.constant 1.000000e+00 : f32
      %150 = vector.broadcast %cst_49 : f32 to vector<8x32xf32>
      %151 = arith.subf %150, %142 : vector<8x32xf32>
      %152 = arith.mulf %151, %149 : vector<8x32xf32>
      %153 = arith.mulf %142, %120 : vector<8x32xf32>
      %154 = arith.addf %152, %153 : vector<8x32xf32>
      %c0_50 = arith.constant 0 : index
      %c24_51 = arith.constant 24 : index
      %c0_52 = arith.constant 0 : index
      %155 = vector.load %arg6[%c0_50, %c24_51, %c0_52] : memref<1x64x32xf32, #tpu.memory_space<vmem>>, vector<1x8x32xf32>
      %156 = vector.shape_cast %155 : vector<1x8x32xf32> to vector<8x32xf32>
      %157 = vector.shape_cast %154 : vector<8x32xf32> to vector<1x8x32xf32>
      tpu.vector_store %arg6[%c0_50, %c24_51, %c0_52], %157 {strides = array<i32>} : memref<1x64x32xf32, #tpu.memory_space<vmem>>, vector<1x8x32xf32>,
      %c32 = arith.constant 32 : index
      %c0_53 = arith.constant 0 : index
      %158 = vector.load %arg8[%c32, %c0_53] : memref<64x96xf32, #tpu.memory_space<vmem>>, vector<8x96xf32>
      %159 = arith.truncf %154 : vector<8x32xf32> to vector<8x32xbf16>
      %cst_54 = arith.constant dense<0.000000e+00> : vector<8x96xf32>
      %160 = tpu.matmul %159, %12, %cst_54 {dimension_numbers = #tpu.dot_dimension_numbers<[1], [0], [0], [1], [0, 0, 1, 1], [], []>} : vector<8x32xbf16>, vector<32x96xbf16>, vector<8x96xf32> -> vector<8x96xf32>
      %161 = vector.extract_strided_slice %158 {offsets = [0, 0], sizes = [8, 32], strides = [1, 1]} : vector<8x96xf32> to vector<8x32xf32>
      %162 = vector.extract_strided_slice %160 {offsets = [0, 0], sizes = [8, 32], strides = [1, 1]} : vector<8x96xf32> to vector<8x32xf32>
      %163 = arith.addf %161, %162 : vector<8x32xf32>
      %164 = arith.negf %163 : vector<8x32xf32>
      %165 = math.exp %164 : vector<8x32xf32>
      %cst_55 = arith.constant 1.000000e+00 : f32
      %166 = vector.broadcast %cst_55 : f32 to vector<8x32xf32>
      %167 = arith.addf %166, %165 : vector<8x32xf32>
      %168 = arith.divf %166, %167 : vector<8x32xf32>
      %169 = vector.extract_strided_slice %158 {offsets = [0, 32], sizes = [8, 32], strides = [1, 1]} : vector<8x96xf32> to vector<8x32xf32>
      %170 = vector.extract_strided_slice %160 {offsets = [0, 32], sizes = [8, 32], strides = [1, 1]} : vector<8x96xf32> to vector<8x32xf32>
      %171 = arith.addf %169, %170 : vector<8x32xf32>
      %172 = arith.negf %171 : vector<8x32xf32>
      %173 = math.exp %172 : vector<8x32xf32>
      %cst_56 = arith.constant 1.000000e+00 : f32
      %174 = vector.broadcast %cst_56 : f32 to vector<8x32xf32>
      %175 = arith.addf %174, %173 : vector<8x32xf32>
      %176 = arith.divf %174, %175 : vector<8x32xf32>
      %177 = vector.extract_strided_slice %158 {offsets = [0, 64], sizes = [8, 32], strides = [1, 1]} : vector<8x96xf32> to vector<8x32xf32>
      %178 = vector.extract_strided_slice %160 {offsets = [0, 64], sizes = [8, 32], strides = [1, 1]} : vector<8x96xf32> to vector<8x32xf32>
      %179 = vector.broadcast %14 : vector<1x32xf32> to vector<8x32xf32>
      %180 = arith.addf %178, %179 : vector<8x32xf32>
      %181 = arith.mulf %168, %180 : vector<8x32xf32>
      %182 = arith.addf %177, %181 : vector<8x32xf32>
      %183 = math.tanh %182 : vector<8x32xf32>
      %cst_57 = arith.constant 1.000000e+00 : f32
      %184 = vector.broadcast %cst_57 : f32 to vector<8x32xf32>
      %185 = arith.subf %184, %176 : vector<8x32xf32>
      %186 = arith.mulf %185, %183 : vector<8x32xf32>
      %187 = arith.mulf %176, %154 : vector<8x32xf32>
      %188 = arith.addf %186, %187 : vector<8x32xf32>
      %c0_58 = arith.constant 0 : index
      %c32_59 = arith.constant 32 : index
      %c0_60 = arith.constant 0 : index
      %189 = vector.load %arg6[%c0_58, %c32_59, %c0_60] : memref<1x64x32xf32, #tpu.memory_space<vmem>>, vector<1x8x32xf32>
      %190 = vector.shape_cast %189 : vector<1x8x32xf32> to vector<8x32xf32>
      %191 = vector.shape_cast %188 : vector<8x32xf32> to vector<1x8x32xf32>
      tpu.vector_store %arg6[%c0_58, %c32_59, %c0_60], %191 {strides = array<i32>} : memref<1x64x32xf32, #tpu.memory_space<vmem>>, vector<1x8x32xf32>,
      %c40 = arith.constant 40 : index
      %c0_61 = arith.constant 0 : index
      %192 = vector.load %arg8[%c40, %c0_61] : memref<64x96xf32, #tpu.memory_space<vmem>>, vector<8x96xf32>
      %193 = arith.truncf %188 : vector<8x32xf32> to vector<8x32xbf16>
      %cst_62 = arith.constant dense<0.000000e+00> : vector<8x96xf32>
      %194 = tpu.matmul %193, %12, %cst_62 {dimension_numbers = #tpu.dot_dimension_numbers<[1], [0], [0], [1], [0, 0, 1, 1], [], []>} : vector<8x32xbf16>, vector<32x96xbf16>, vector<8x96xf32> -> vector<8x96xf32>
      %195 = vector.extract_strided_slice %192 {offsets = [0, 0], sizes = [8, 32], strides = [1, 1]} : vector<8x96xf32> to vector<8x32xf32>
      %196 = vector.extract_strided_slice %194 {offsets = [0, 0], sizes = [8, 32], strides = [1, 1]} : vector<8x96xf32> to vector<8x32xf32>
      %197 = arith.addf %195, %196 : vector<8x32xf32>
      %198 = arith.negf %197 : vector<8x32xf32>
      %199 = math.exp %198 : vector<8x32xf32>
      %cst_63 = arith.constant 1.000000e+00 : f32
      %200 = vector.broadcast %cst_63 : f32 to vector<8x32xf32>
      %201 = arith.addf %200, %199 : vector<8x32xf32>
      %202 = arith.divf %200, %201 : vector<8x32xf32>
      %203 = vector.extract_strided_slice %192 {offsets = [0, 32], sizes = [8, 32], strides = [1, 1]} : vector<8x96xf32> to vector<8x32xf32>
      %204 = vector.extract_strided_slice %194 {offsets = [0, 32], sizes = [8, 32], strides = [1, 1]} : vector<8x96xf32> to vector<8x32xf32>
      %205 = arith.addf %203, %204 : vector<8x32xf32>
      %206 = arith.negf %205 : vector<8x32xf32>
      %207 = math.exp %206 : vector<8x32xf32>
      %cst_64 = arith.constant 1.000000e+00 : f32
      %208 = vector.broadcast %cst_64 : f32 to vector<8x32xf32>
      %209 = arith.addf %208, %207 : vector<8x32xf32>
      %210 = arith.divf %208, %209 : vector<8x32xf32>
      %211 = vector.extract_strided_slice %192 {offsets = [0, 64], sizes = [8, 32], strides = [1, 1]} : vector<8x96xf32> to vector<8x32xf32>
      %212 = vector.extract_strided_slice %194 {offsets = [0, 64], sizes = [8, 32], strides = [1, 1]} : vector<8x96xf32> to vector<8x32xf32>
      %213 = vector.broadcast %14 : vector<1x32xf32> to vector<8x32xf32>
      %214 = arith.addf %212, %213 : vector<8x32xf32>
      %215 = arith.mulf %202, %214 : vector<8x32xf32>
      %216 = arith.addf %211, %215 : vector<8x32xf32>
      %217 = math.tanh %216 : vector<8x32xf32>
      %cst_65 = arith.constant 1.000000e+00 : f32
      %218 = vector.broadcast %cst_65 : f32 to vector<8x32xf32>
      %219 = arith.subf %218, %210 : vector<8x32xf32>
      %220 = arith.mulf %219, %217 : vector<8x32xf32>
      %221 = arith.mulf %210, %188 : vector<8x32xf32>
      %222 = arith.addf %220, %221 : vector<8x32xf32>
      %c0_66 = arith.constant 0 : index
      %c40_67 = arith.constant 40 : index
      %c0_68 = arith.constant 0 : index
      %223 = vector.load %arg6[%c0_66, %c40_67, %c0_68] : memref<1x64x32xf32, #tpu.memory_space<vmem>>, vector<1x8x32xf32>
      %224 = vector.shape_cast %223 : vector<1x8x32xf32> to vector<8x32xf32>
      %225 = vector.shape_cast %222 : vector<8x32xf32> to vector<1x8x32xf32>
      tpu.vector_store %arg6[%c0_66, %c40_67, %c0_68], %225 {strides = array<i32>} : memref<1x64x32xf32, #tpu.memory_space<vmem>>, vector<1x8x32xf32>,
      %c48 = arith.constant 48 : index
      %c0_69 = arith.constant 0 : index
      %226 = vector.load %arg8[%c48, %c0_69] : memref<64x96xf32, #tpu.memory_space<vmem>>, vector<8x96xf32>
      %227 = arith.truncf %222 : vector<8x32xf32> to vector<8x32xbf16>
      %cst_70 = arith.constant dense<0.000000e+00> : vector<8x96xf32>
      %228 = tpu.matmul %227, %12, %cst_70 {dimension_numbers = #tpu.dot_dimension_numbers<[1], [0], [0], [1], [0, 0, 1, 1], [], []>} : vector<8x32xbf16>, vector<32x96xbf16>, vector<8x96xf32> -> vector<8x96xf32>
      %229 = vector.extract_strided_slice %226 {offsets = [0, 0], sizes = [8, 32], strides = [1, 1]} : vector<8x96xf32> to vector<8x32xf32>
      %230 = vector.extract_strided_slice %228 {offsets = [0, 0], sizes = [8, 32], strides = [1, 1]} : vector<8x96xf32> to vector<8x32xf32>
      %231 = arith.addf %229, %230 : vector<8x32xf32>
      %232 = arith.negf %231 : vector<8x32xf32>
      %233 = math.exp %232 : vector<8x32xf32>
      %cst_71 = arith.constant 1.000000e+00 : f32
      %234 = vector.broadcast %cst_71 : f32 to vector<8x32xf32>
      %235 = arith.addf %234, %233 : vector<8x32xf32>
      %236 = arith.divf %234, %235 : vector<8x32xf32>
      %237 = vector.extract_strided_slice %226 {offsets = [0, 32], sizes = [8, 32], strides = [1, 1]} : vector<8x96xf32> to vector<8x32xf32>
      %238 = vector.extract_strided_slice %228 {offsets = [0, 32], sizes = [8, 32], strides = [1, 1]} : vector<8x96xf32> to vector<8x32xf32>
      %239 = arith.addf %237, %238 : vector<8x32xf32>
      %240 = arith.negf %239 : vector<8x32xf32>
      %241 = math.exp %240 : vector<8x32xf32>
      %cst_72 = arith.constant 1.000000e+00 : f32
      %242 = vector.broadcast %cst_72 : f32 to vector<8x32xf32>
      %243 = arith.addf %242, %241 : vector<8x32xf32>
      %244 = arith.divf %242, %243 : vector<8x32xf32>
      %245 = vector.extract_strided_slice %226 {offsets = [0, 64], sizes = [8, 32], strides = [1, 1]} : vector<8x96xf32> to vector<8x32xf32>
      %246 = vector.extract_strided_slice %228 {offsets = [0, 64], sizes = [8, 32], strides = [1, 1]} : vector<8x96xf32> to vector<8x32xf32>
      %247 = vector.broadcast %14 : vector<1x32xf32> to vector<8x32xf32>
      %248 = arith.addf %246, %247 : vector<8x32xf32>
      %249 = arith.mulf %236, %248 : vector<8x32xf32>
      %250 = arith.addf %245, %249 : vector<8x32xf32>
      %251 = math.tanh %250 : vector<8x32xf32>
      %cst_73 = arith.constant 1.000000e+00 : f32
      %252 = vector.broadcast %cst_73 : f32 to vector<8x32xf32>
      %253 = arith.subf %252, %244 : vector<8x32xf32>
      %254 = arith.mulf %253, %251 : vector<8x32xf32>
      %255 = arith.mulf %244, %222 : vector<8x32xf32>
      %256 = arith.addf %254, %255 : vector<8x32xf32>
      %c0_74 = arith.constant 0 : index
      %c48_75 = arith.constant 48 : index
      %c0_76 = arith.constant 0 : index
      %257 = vector.load %arg6[%c0_74, %c48_75, %c0_76] : memref<1x64x32xf32, #tpu.memory_space<vmem>>, vector<1x8x32xf32>
      %258 = vector.shape_cast %257 : vector<1x8x32xf32> to vector<8x32xf32>
      %259 = vector.shape_cast %256 : vector<8x32xf32> to vector<1x8x32xf32>
      tpu.vector_store %arg6[%c0_74, %c48_75, %c0_76], %259 {strides = array<i32>} : memref<1x64x32xf32, #tpu.memory_space<vmem>>, vector<1x8x32xf32>,
      %c56 = arith.constant 56 : index
      %c0_77 = arith.constant 0 : index
      %260 = vector.load %arg8[%c56, %c0_77] : memref<64x96xf32, #tpu.memory_space<vmem>>, vector<8x96xf32>
      %261 = arith.truncf %256 : vector<8x32xf32> to vector<8x32xbf16>
      %cst_78 = arith.constant dense<0.000000e+00> : vector<8x96xf32>
      %262 = tpu.matmul %261, %12, %cst_78 {dimension_numbers = #tpu.dot_dimension_numbers<[1], [0], [0], [1], [0, 0, 1, 1], [], []>} : vector<8x32xbf16>, vector<32x96xbf16>, vector<8x96xf32> -> vector<8x96xf32>
      %263 = vector.extract_strided_slice %260 {offsets = [0, 0], sizes = [8, 32], strides = [1, 1]} : vector<8x96xf32> to vector<8x32xf32>
      %264 = vector.extract_strided_slice %262 {offsets = [0, 0], sizes = [8, 32], strides = [1, 1]} : vector<8x96xf32> to vector<8x32xf32>
      %265 = arith.addf %263, %264 : vector<8x32xf32>
      %266 = arith.negf %265 : vector<8x32xf32>
      %267 = math.exp %266 : vector<8x32xf32>
      %cst_79 = arith.constant 1.000000e+00 : f32
      %268 = vector.broadcast %cst_79 : f32 to vector<8x32xf32>
      %269 = arith.addf %268, %267 : vector<8x32xf32>
      %270 = arith.divf %268, %269 : vector<8x32xf32>
      %271 = vector.extract_strided_slice %260 {offsets = [0, 32], sizes = [8, 32], strides = [1, 1]} : vector<8x96xf32> to vector<8x32xf32>
      %272 = vector.extract_strided_slice %262 {offsets = [0, 32], sizes = [8, 32], strides = [1, 1]} : vector<8x96xf32> to vector<8x32xf32>
      %273 = arith.addf %271, %272 : vector<8x32xf32>
      %274 = arith.negf %273 : vector<8x32xf32>
      %275 = math.exp %274 : vector<8x32xf32>
      %cst_80 = arith.constant 1.000000e+00 : f32
      %276 = vector.broadcast %cst_80 : f32 to vector<8x32xf32>
      %277 = arith.addf %276, %275 : vector<8x32xf32>
      %278 = arith.divf %276, %277 : vector<8x32xf32>
      %279 = vector.extract_strided_slice %260 {offsets = [0, 64], sizes = [8, 32], strides = [1, 1]} : vector<8x96xf32> to vector<8x32xf32>
      %280 = vector.extract_strided_slice %262 {offsets = [0, 64], sizes = [8, 32], strides = [1, 1]} : vector<8x96xf32> to vector<8x32xf32>
      %281 = vector.broadcast %14 : vector<1x32xf32> to vector<8x32xf32>
      %282 = arith.addf %280, %281 : vector<8x32xf32>
      %283 = arith.mulf %270, %282 : vector<8x32xf32>
      %284 = arith.addf %279, %283 : vector<8x32xf32>
      %285 = math.tanh %284 : vector<8x32xf32>
      %cst_81 = arith.constant 1.000000e+00 : f32
      %286 = vector.broadcast %cst_81 : f32 to vector<8x32xf32>
      %287 = arith.subf %286, %278 : vector<8x32xf32>
      %288 = arith.mulf %287, %285 : vector<8x32xf32>
      %289 = arith.mulf %278, %256 : vector<8x32xf32>
      %290 = arith.addf %288, %289 : vector<8x32xf32>
      %c0_82 = arith.constant 0 : index
      %c56_83 = arith.constant 56 : index
      %c0_84 = arith.constant 0 : index
      %291 = vector.load %arg6[%c0_82, %c56_83, %c0_84] : memref<1x64x32xf32, #tpu.memory_space<vmem>>, vector<1x8x32xf32>
      %292 = vector.shape_cast %291 : vector<1x8x32xf32> to vector<8x32xf32>
      %293 = vector.shape_cast %290 : vector<8x32xf32> to vector<1x8x32xf32>
      tpu.vector_store %arg6[%c0_82, %c56_83, %c0_84], %293 {strides = array<i32>} : memref<1x64x32xf32, #tpu.memory_space<vmem>>, vector<1x8x32xf32>,
      %c0_85 = arith.constant 0 : index
      %c0_86 = arith.constant 0 : index
      %c0_87 = arith.constant 0 : index
      %294 = vector.load %arg7[%c0_85, %c0_86, %c0_87] : memref<1x8x32xf32, #tpu.memory_space<vmem>>, vector<1x8x32xf32>
      %295 = vector.shape_cast %294 : vector<1x8x32xf32> to vector<8x32xf32>
      %296 = vector.shape_cast %290 : vector<8x32xf32> to vector<1x8x32xf32>
      tpu.vector_store %arg7[%c0_85, %c0_86, %c0_87], %296 {strides = array<i32>} : memref<1x8x32xf32, #tpu.memory_space<vmem>>, vector<1x8x32xf32>,
    } else {
    }
    %c1_i32 = arith.constant 1 : i32
    %18 = arith.cmpi eq, %arg0, %c1_i32 : i32
    %19 = arith.extui %18 : i1 to i32
    %c0_i32_18 = arith.constant 0 : i32
    %20 = arith.cmpi ne, %19, %c0_i32_18 : i32
    scf.if %20 {
      %cst_19 = arith.constant 0.000000e+00 : f32
      %21 = vector.broadcast %cst_19 : f32 to vector<8x32xf32>
      %c56 = arith.constant 56 : index
      %c0_20 = arith.constant 0 : index
      %22 = vector.load %arg8[%c56, %c0_20] : memref<64x96xf32, #tpu.memory_space<vmem>>, vector<8x96xf32>
      %23 = arith.truncf %21 : vector<8x32xf32> to vector<8x32xbf16>
      %cst_21 = arith.constant dense<0.000000e+00> : vector<8x96xf32>
      %24 = tpu.matmul %23, %12, %cst_21 {dimension_numbers = #tpu.dot_dimension_numbers<[1], [0], [0], [1], [0, 0, 1, 1], [], []>} : vector<8x32xbf16>, vector<32x96xbf16>, vector<8x96xf32> -> vector<8x96xf32>
      %25 = vector.extract_strided_slice %22 {offsets = [0, 0], sizes = [8, 32], strides = [1, 1]} : vector<8x96xf32> to vector<8x32xf32>
      %26 = vector.extract_strided_slice %24 {offsets = [0, 0], sizes = [8, 32], strides = [1, 1]} : vector<8x96xf32> to vector<8x32xf32>
      %27 = arith.addf %25, %26 : vector<8x32xf32>
      %28 = arith.negf %27 : vector<8x32xf32>
      %29 = math.exp %28 : vector<8x32xf32>
      %cst_22 = arith.constant 1.000000e+00 : f32
      %30 = vector.broadcast %cst_22 : f32 to vector<8x32xf32>
      %31 = arith.addf %30, %29 : vector<8x32xf32>
      %32 = arith.divf %30, %31 : vector<8x32xf32>
      %33 = vector.extract_strided_slice %22 {offsets = [0, 32], sizes = [8, 32], strides = [1, 1]} : vector<8x96xf32> to vector<8x32xf32>
      %34 = vector.extract_strided_slice %24 {offsets = [0, 32], sizes = [8, 32], strides = [1, 1]} : vector<8x96xf32> to vector<8x32xf32>
      %35 = arith.addf %33, %34 : vector<8x32xf32>
      %36 = arith.negf %35 : vector<8x32xf32>
      %37 = math.exp %36 : vector<8x32xf32>
      %cst_23 = arith.constant 1.000000e+00 : f32
      %38 = vector.broadcast %cst_23 : f32 to vector<8x32xf32>
      %39 = arith.addf %38, %37 : vector<8x32xf32>
      %40 = arith.divf %38, %39 : vector<8x32xf32>
      %41 = vector.extract_strided_slice %22 {offsets = [0, 64], sizes = [8, 32], strides = [1, 1]} : vector<8x96xf32> to vector<8x32xf32>
      %42 = vector.extract_strided_slice %24 {offsets = [0, 64], sizes = [8, 32], strides = [1, 1]} : vector<8x96xf32> to vector<8x32xf32>
      %43 = vector.broadcast %14 : vector<1x32xf32> to vector<8x32xf32>
      %44 = arith.addf %42, %43 : vector<8x32xf32>
      %45 = arith.mulf %32, %44 : vector<8x32xf32>
      %46 = arith.addf %41, %45 : vector<8x32xf32>
      %47 = math.tanh %46 : vector<8x32xf32>
      %cst_24 = arith.constant 1.000000e+00 : f32
      %48 = vector.broadcast %cst_24 : f32 to vector<8x32xf32>
      %49 = arith.subf %48, %40 : vector<8x32xf32>
      %50 = arith.mulf %49, %47 : vector<8x32xf32>
      %51 = arith.mulf %40, %21 : vector<8x32xf32>
      %52 = arith.addf %50, %51 : vector<8x32xf32>
      %c0_25 = arith.constant 0 : index
      %c56_26 = arith.constant 56 : index
      %c0_27 = arith.constant 0 : index
      %53 = vector.load %arg6[%c0_25, %c56_26, %c0_27] : memref<1x64x32xf32, #tpu.memory_space<vmem>>, vector<1x8x32xf32>
      %54 = vector.shape_cast %53 : vector<1x8x32xf32> to vector<8x32xf32>
      %55 = vector.shape_cast %52 : vector<8x32xf32> to vector<1x8x32xf32>
      tpu.vector_store %arg6[%c0_25, %c56_26, %c0_27], %55 {strides = array<i32>} : memref<1x64x32xf32, #tpu.memory_space<vmem>>, vector<1x8x32xf32>,
      %c48 = arith.constant 48 : index
      %c0_28 = arith.constant 0 : index
      %56 = vector.load %arg8[%c48, %c0_28] : memref<64x96xf32, #tpu.memory_space<vmem>>, vector<8x96xf32>
      %57 = arith.truncf %52 : vector<8x32xf32> to vector<8x32xbf16>
      %cst_29 = arith.constant dense<0.000000e+00> : vector<8x96xf32>
      %58 = tpu.matmul %57, %12, %cst_29 {dimension_numbers = #tpu.dot_dimension_numbers<[1], [0], [0], [1], [0, 0, 1, 1], [], []>} : vector<8x32xbf16>, vector<32x96xbf16>, vector<8x96xf32> -> vector<8x96xf32>
      %59 = vector.extract_strided_slice %56 {offsets = [0, 0], sizes = [8, 32], strides = [1, 1]} : vector<8x96xf32> to vector<8x32xf32>
      %60 = vector.extract_strided_slice %58 {offsets = [0, 0], sizes = [8, 32], strides = [1, 1]} : vector<8x96xf32> to vector<8x32xf32>
      %61 = arith.addf %59, %60 : vector<8x32xf32>
      %62 = arith.negf %61 : vector<8x32xf32>
      %63 = math.exp %62 : vector<8x32xf32>
      %cst_30 = arith.constant 1.000000e+00 : f32
      %64 = vector.broadcast %cst_30 : f32 to vector<8x32xf32>
      %65 = arith.addf %64, %63 : vector<8x32xf32>
      %66 = arith.divf %64, %65 : vector<8x32xf32>
      %67 = vector.extract_strided_slice %56 {offsets = [0, 32], sizes = [8, 32], strides = [1, 1]} : vector<8x96xf32> to vector<8x32xf32>
      %68 = vector.extract_strided_slice %58 {offsets = [0, 32], sizes = [8, 32], strides = [1, 1]} : vector<8x96xf32> to vector<8x32xf32>
      %69 = arith.addf %67, %68 : vector<8x32xf32>
      %70 = arith.negf %69 : vector<8x32xf32>
      %71 = math.exp %70 : vector<8x32xf32>
      %cst_31 = arith.constant 1.000000e+00 : f32
      %72 = vector.broadcast %cst_31 : f32 to vector<8x32xf32>
      %73 = arith.addf %72, %71 : vector<8x32xf32>
      %74 = arith.divf %72, %73 : vector<8x32xf32>
      %75 = vector.extract_strided_slice %56 {offsets = [0, 64], sizes = [8, 32], strides = [1, 1]} : vector<8x96xf32> to vector<8x32xf32>
      %76 = vector.extract_strided_slice %58 {offsets = [0, 64], sizes = [8, 32], strides = [1, 1]} : vector<8x96xf32> to vector<8x32xf32>
      %77 = vector.broadcast %14 : vector<1x32xf32> to vector<8x32xf32>
      %78 = arith.addf %76, %77 : vector<8x32xf32>
      %79 = arith.mulf %66, %78 : vector<8x32xf32>
      %80 = arith.addf %75, %79 : vector<8x32xf32>
      %81 = math.tanh %80 : vector<8x32xf32>
      %cst_32 = arith.constant 1.000000e+00 : f32
      %82 = vector.broadcast %cst_32 : f32 to vector<8x32xf32>
      %83 = arith.subf %82, %74 : vector<8x32xf32>
      %84 = arith.mulf %83, %81 : vector<8x32xf32>
      %85 = arith.mulf %74, %52 : vector<8x32xf32>
      %86 = arith.addf %84, %85 : vector<8x32xf32>
      %c0_33 = arith.constant 0 : index
      %c48_34 = arith.constant 48 : index
      %c0_35 = arith.constant 0 : index
      %87 = vector.load %arg6[%c0_33, %c48_34, %c0_35] : memref<1x64x32xf32, #tpu.memory_space<vmem>>, vector<1x8x32xf32>
      %88 = vector.shape_cast %87 : vector<1x8x32xf32> to vector<8x32xf32>
      %89 = vector.shape_cast %86 : vector<8x32xf32> to vector<1x8x32xf32>
      tpu.vector_store %arg6[%c0_33, %c48_34, %c0_35], %89 {strides = array<i32>} : memref<1x64x32xf32, #tpu.memory_space<vmem>>, vector<1x8x32xf32>,
      %c40 = arith.constant 40 : index
      %c0_36 = arith.constant 0 : index
      %90 = vector.load %arg8[%c40, %c0_36] : memref<64x96xf32, #tpu.memory_space<vmem>>, vector<8x96xf32>
      %91 = arith.truncf %86 : vector<8x32xf32> to vector<8x32xbf16>
      %cst_37 = arith.constant dense<0.000000e+00> : vector<8x96xf32>
      %92 = tpu.matmul %91, %12, %cst_37 {dimension_numbers = #tpu.dot_dimension_numbers<[1], [0], [0], [1], [0, 0, 1, 1], [], []>} : vector<8x32xbf16>, vector<32x96xbf16>, vector<8x96xf32> -> vector<8x96xf32>
      %93 = vector.extract_strided_slice %90 {offsets = [0, 0], sizes = [8, 32], strides = [1, 1]} : vector<8x96xf32> to vector<8x32xf32>
      %94 = vector.extract_strided_slice %92 {offsets = [0, 0], sizes = [8, 32], strides = [1, 1]} : vector<8x96xf32> to vector<8x32xf32>
      %95 = arith.addf %93, %94 : vector<8x32xf32>
      %96 = arith.negf %95 : vector<8x32xf32>
      %97 = math.exp %96 : vector<8x32xf32>
      %cst_38 = arith.constant 1.000000e+00 : f32
      %98 = vector.broadcast %cst_38 : f32 to vector<8x32xf32>
      %99 = arith.addf %98, %97 : vector<8x32xf32>
      %100 = arith.divf %98, %99 : vector<8x32xf32>
      %101 = vector.extract_strided_slice %90 {offsets = [0, 32], sizes = [8, 32], strides = [1, 1]} : vector<8x96xf32> to vector<8x32xf32>
      %102 = vector.extract_strided_slice %92 {offsets = [0, 32], sizes = [8, 32], strides = [1, 1]} : vector<8x96xf32> to vector<8x32xf32>
      %103 = arith.addf %101, %102 : vector<8x32xf32>
      %104 = arith.negf %103 : vector<8x32xf32>
      %105 = math.exp %104 : vector<8x32xf32>
      %cst_39 = arith.constant 1.000000e+00 : f32
      %106 = vector.broadcast %cst_39 : f32 to vector<8x32xf32>
      %107 = arith.addf %106, %105 : vector<8x32xf32>
      %108 = arith.divf %106, %107 : vector<8x32xf32>
      %109 = vector.extract_strided_slice %90 {offsets = [0, 64], sizes = [8, 32], strides = [1, 1]} : vector<8x96xf32> to vector<8x32xf32>
      %110 = vector.extract_strided_slice %92 {offsets = [0, 64], sizes = [8, 32], strides = [1, 1]} : vector<8x96xf32> to vector<8x32xf32>
      %111 = vector.broadcast %14 : vector<1x32xf32> to vector<8x32xf32>
      %112 = arith.addf %110, %111 : vector<8x32xf32>
      %113 = arith.mulf %100, %112 : vector<8x32xf32>
      %114 = arith.addf %109, %113 : vector<8x32xf32>
      %115 = math.tanh %114 : vector<8x32xf32>
      %cst_40 = arith.constant 1.000000e+00 : f32
      %116 = vector.broadcast %cst_40 : f32 to vector<8x32xf32>
      %117 = arith.subf %116, %108 : vector<8x32xf32>
      %118 = arith.mulf %117, %115 : vector<8x32xf32>
      %119 = arith.mulf %108, %86 : vector<8x32xf32>
      %120 = arith.addf %118, %119 : vector<8x32xf32>
      %c0_41 = arith.constant 0 : index
      %c40_42 = arith.constant 40 : index
      %c0_43 = arith.constant 0 : index
      %121 = vector.load %arg6[%c0_41, %c40_42, %c0_43] : memref<1x64x32xf32, #tpu.memory_space<vmem>>, vector<1x8x32xf32>
      %122 = vector.shape_cast %121 : vector<1x8x32xf32> to vector<8x32xf32>
      %123 = vector.shape_cast %120 : vector<8x32xf32> to vector<1x8x32xf32>
      tpu.vector_store %arg6[%c0_41, %c40_42, %c0_43], %123 {strides = array<i32>} : memref<1x64x32xf32, #tpu.memory_space<vmem>>, vector<1x8x32xf32>,
      %c32 = arith.constant 32 : index
      %c0_44 = arith.constant 0 : index
      %124 = vector.load %arg8[%c32, %c0_44] : memref<64x96xf32, #tpu.memory_space<vmem>>, vector<8x96xf32>
      %125 = arith.truncf %120 : vector<8x32xf32> to vector<8x32xbf16>
      %cst_45 = arith.constant dense<0.000000e+00> : vector<8x96xf32>
      %126 = tpu.matmul %125, %12, %cst_45 {dimension_numbers = #tpu.dot_dimension_numbers<[1], [0], [0], [1], [0, 0, 1, 1], [], []>} : vector<8x32xbf16>, vector<32x96xbf16>, vector<8x96xf32> -> vector<8x96xf32>
      %127 = vector.extract_strided_slice %124 {offsets = [0, 0], sizes = [8, 32], strides = [1, 1]} : vector<8x96xf32> to vector<8x32xf32>
      %128 = vector.extract_strided_slice %126 {offsets = [0, 0], sizes = [8, 32], strides = [1, 1]} : vector<8x96xf32> to vector<8x32xf32>
      %129 = arith.addf %127, %128 : vector<8x32xf32>
      %130 = arith.negf %129 : vector<8x32xf32>
      %131 = math.exp %130 : vector<8x32xf32>
      %cst_46 = arith.constant 1.000000e+00 : f32
      %132 = vector.broadcast %cst_46 : f32 to vector<8x32xf32>
      %133 = arith.addf %132, %131 : vector<8x32xf32>
      %134 = arith.divf %132, %133 : vector<8x32xf32>
      %135 = vector.extract_strided_slice %124 {offsets = [0, 32], sizes = [8, 32], strides = [1, 1]} : vector<8x96xf32> to vector<8x32xf32>
      %136 = vector.extract_strided_slice %126 {offsets = [0, 32], sizes = [8, 32], strides = [1, 1]} : vector<8x96xf32> to vector<8x32xf32>
      %137 = arith.addf %135, %136 : vector<8x32xf32>
      %138 = arith.negf %137 : vector<8x32xf32>
      %139 = math.exp %138 : vector<8x32xf32>
      %cst_47 = arith.constant 1.000000e+00 : f32
      %140 = vector.broadcast %cst_47 : f32 to vector<8x32xf32>
      %141 = arith.addf %140, %139 : vector<8x32xf32>
      %142 = arith.divf %140, %141 : vector<8x32xf32>
      %143 = vector.extract_strided_slice %124 {offsets = [0, 64], sizes = [8, 32], strides = [1, 1]} : vector<8x96xf32> to vector<8x32xf32>
      %144 = vector.extract_strided_slice %126 {offsets = [0, 64], sizes = [8, 32], strides = [1, 1]} : vector<8x96xf32> to vector<8x32xf32>
      %145 = vector.broadcast %14 : vector<1x32xf32> to vector<8x32xf32>
      %146 = arith.addf %144, %145 : vector<8x32xf32>
      %147 = arith.mulf %134, %146 : vector<8x32xf32>
      %148 = arith.addf %143, %147 : vector<8x32xf32>
      %149 = math.tanh %148 : vector<8x32xf32>
      %cst_48 = arith.constant 1.000000e+00 : f32
      %150 = vector.broadcast %cst_48 : f32 to vector<8x32xf32>
      %151 = arith.subf %150, %142 : vector<8x32xf32>
      %152 = arith.mulf %151, %149 : vector<8x32xf32>
      %153 = arith.mulf %142, %120 : vector<8x32xf32>
      %154 = arith.addf %152, %153 : vector<8x32xf32>
      %c0_49 = arith.constant 0 : index
      %c32_50 = arith.constant 32 : index
      %c0_51 = arith.constant 0 : index
      %155 = vector.load %arg6[%c0_49, %c32_50, %c0_51] : memref<1x64x32xf32, #tpu.memory_space<vmem>>, vector<1x8x32xf32>
      %156 = vector.shape_cast %155 : vector<1x8x32xf32> to vector<8x32xf32>
      %157 = vector.shape_cast %154 : vector<8x32xf32> to vector<1x8x32xf32>
      tpu.vector_store %arg6[%c0_49, %c32_50, %c0_51], %157 {strides = array<i32>} : memref<1x64x32xf32, #tpu.memory_space<vmem>>, vector<1x8x32xf32>,
      %c24 = arith.constant 24 : index
      %c0_52 = arith.constant 0 : index
      %158 = vector.load %arg8[%c24, %c0_52] : memref<64x96xf32, #tpu.memory_space<vmem>>, vector<8x96xf32>
      %159 = arith.truncf %154 : vector<8x32xf32> to vector<8x32xbf16>
      %cst_53 = arith.constant dense<0.000000e+00> : vector<8x96xf32>
      %160 = tpu.matmul %159, %12, %cst_53 {dimension_numbers = #tpu.dot_dimension_numbers<[1], [0], [0], [1], [0, 0, 1, 1], [], []>} : vector<8x32xbf16>, vector<32x96xbf16>, vector<8x96xf32> -> vector<8x96xf32>
      %161 = vector.extract_strided_slice %158 {offsets = [0, 0], sizes = [8, 32], strides = [1, 1]} : vector<8x96xf32> to vector<8x32xf32>
      %162 = vector.extract_strided_slice %160 {offsets = [0, 0], sizes = [8, 32], strides = [1, 1]} : vector<8x96xf32> to vector<8x32xf32>
      %163 = arith.addf %161, %162 : vector<8x32xf32>
      %164 = arith.negf %163 : vector<8x32xf32>
      %165 = math.exp %164 : vector<8x32xf32>
      %cst_54 = arith.constant 1.000000e+00 : f32
      %166 = vector.broadcast %cst_54 : f32 to vector<8x32xf32>
      %167 = arith.addf %166, %165 : vector<8x32xf32>
      %168 = arith.divf %166, %167 : vector<8x32xf32>
      %169 = vector.extract_strided_slice %158 {offsets = [0, 32], sizes = [8, 32], strides = [1, 1]} : vector<8x96xf32> to vector<8x32xf32>
      %170 = vector.extract_strided_slice %160 {offsets = [0, 32], sizes = [8, 32], strides = [1, 1]} : vector<8x96xf32> to vector<8x32xf32>
      %171 = arith.addf %169, %170 : vector<8x32xf32>
      %172 = arith.negf %171 : vector<8x32xf32>
      %173 = math.exp %172 : vector<8x32xf32>
      %cst_55 = arith.constant 1.000000e+00 : f32
      %174 = vector.broadcast %cst_55 : f32 to vector<8x32xf32>
      %175 = arith.addf %174, %173 : vector<8x32xf32>
      %176 = arith.divf %174, %175 : vector<8x32xf32>
      %177 = vector.extract_strided_slice %158 {offsets = [0, 64], sizes = [8, 32], strides = [1, 1]} : vector<8x96xf32> to vector<8x32xf32>
      %178 = vector.extract_strided_slice %160 {offsets = [0, 64], sizes = [8, 32], strides = [1, 1]} : vector<8x96xf32> to vector<8x32xf32>
      %179 = vector.broadcast %14 : vector<1x32xf32> to vector<8x32xf32>
      %180 = arith.addf %178, %179 : vector<8x32xf32>
      %181 = arith.mulf %168, %180 : vector<8x32xf32>
      %182 = arith.addf %177, %181 : vector<8x32xf32>
      %183 = math.tanh %182 : vector<8x32xf32>
      %cst_56 = arith.constant 1.000000e+00 : f32
      %184 = vector.broadcast %cst_56 : f32 to vector<8x32xf32>
      %185 = arith.subf %184, %176 : vector<8x32xf32>
      %186 = arith.mulf %185, %183 : vector<8x32xf32>
      %187 = arith.mulf %176, %154 : vector<8x32xf32>
      %188 = arith.addf %186, %187 : vector<8x32xf32>
      %c0_57 = arith.constant 0 : index
      %c24_58 = arith.constant 24 : index
      %c0_59 = arith.constant 0 : index
      %189 = vector.load %arg6[%c0_57, %c24_58, %c0_59] : memref<1x64x32xf32, #tpu.memory_space<vmem>>, vector<1x8x32xf32>
      %190 = vector.shape_cast %189 : vector<1x8x32xf32> to vector<8x32xf32>
      %191 = vector.shape_cast %188 : vector<8x32xf32> to vector<1x8x32xf32>
      tpu.vector_store %arg6[%c0_57, %c24_58, %c0_59], %191 {strides = array<i32>} : memref<1x64x32xf32, #tpu.memory_space<vmem>>, vector<1x8x32xf32>,
      %c16 = arith.constant 16 : index
      %c0_60 = arith.constant 0 : index
      %192 = vector.load %arg8[%c16, %c0_60] : memref<64x96xf32, #tpu.memory_space<vmem>>, vector<8x96xf32>
      %193 = arith.truncf %188 : vector<8x32xf32> to vector<8x32xbf16>
      %cst_61 = arith.constant dense<0.000000e+00> : vector<8x96xf32>
      %194 = tpu.matmul %193, %12, %cst_61 {dimension_numbers = #tpu.dot_dimension_numbers<[1], [0], [0], [1], [0, 0, 1, 1], [], []>} : vector<8x32xbf16>, vector<32x96xbf16>, vector<8x96xf32> -> vector<8x96xf32>
      %195 = vector.extract_strided_slice %192 {offsets = [0, 0], sizes = [8, 32], strides = [1, 1]} : vector<8x96xf32> to vector<8x32xf32>
      %196 = vector.extract_strided_slice %194 {offsets = [0, 0], sizes = [8, 32], strides = [1, 1]} : vector<8x96xf32> to vector<8x32xf32>
      %197 = arith.addf %195, %196 : vector<8x32xf32>
      %198 = arith.negf %197 : vector<8x32xf32>
      %199 = math.exp %198 : vector<8x32xf32>
      %cst_62 = arith.constant 1.000000e+00 : f32
      %200 = vector.broadcast %cst_62 : f32 to vector<8x32xf32>
      %201 = arith.addf %200, %199 : vector<8x32xf32>
      %202 = arith.divf %200, %201 : vector<8x32xf32>
      %203 = vector.extract_strided_slice %192 {offsets = [0, 32], sizes = [8, 32], strides = [1, 1]} : vector<8x96xf32> to vector<8x32xf32>
      %204 = vector.extract_strided_slice %194 {offsets = [0, 32], sizes = [8, 32], strides = [1, 1]} : vector<8x96xf32> to vector<8x32xf32>
      %205 = arith.addf %203, %204 : vector<8x32xf32>
      %206 = arith.negf %205 : vector<8x32xf32>
      %207 = math.exp %206 : vector<8x32xf32>
      %cst_63 = arith.constant 1.000000e+00 : f32
      %208 = vector.broadcast %cst_63 : f32 to vector<8x32xf32>
      %209 = arith.addf %208, %207 : vector<8x32xf32>
      %210 = arith.divf %208, %209 : vector<8x32xf32>
      %211 = vector.extract_strided_slice %192 {offsets = [0, 64], sizes = [8, 32], strides = [1, 1]} : vector<8x96xf32> to vector<8x32xf32>
      %212 = vector.extract_strided_slice %194 {offsets = [0, 64], sizes = [8, 32], strides = [1, 1]} : vector<8x96xf32> to vector<8x32xf32>
      %213 = vector.broadcast %14 : vector<1x32xf32> to vector<8x32xf32>
      %214 = arith.addf %212, %213 : vector<8x32xf32>
      %215 = arith.mulf %202, %214 : vector<8x32xf32>
      %216 = arith.addf %211, %215 : vector<8x32xf32>
      %217 = math.tanh %216 : vector<8x32xf32>
      %cst_64 = arith.constant 1.000000e+00 : f32
      %218 = vector.broadcast %cst_64 : f32 to vector<8x32xf32>
      %219 = arith.subf %218, %210 : vector<8x32xf32>
      %220 = arith.mulf %219, %217 : vector<8x32xf32>
      %221 = arith.mulf %210, %188 : vector<8x32xf32>
      %222 = arith.addf %220, %221 : vector<8x32xf32>
      %c0_65 = arith.constant 0 : index
      %c16_66 = arith.constant 16 : index
      %c0_67 = arith.constant 0 : index
      %223 = vector.load %arg6[%c0_65, %c16_66, %c0_67] : memref<1x64x32xf32, #tpu.memory_space<vmem>>, vector<1x8x32xf32>
      %224 = vector.shape_cast %223 : vector<1x8x32xf32> to vector<8x32xf32>
      %225 = vector.shape_cast %222 : vector<8x32xf32> to vector<1x8x32xf32>
      tpu.vector_store %arg6[%c0_65, %c16_66, %c0_67], %225 {strides = array<i32>} : memref<1x64x32xf32, #tpu.memory_space<vmem>>, vector<1x8x32xf32>,
      %c8 = arith.constant 8 : index
      %c0_68 = arith.constant 0 : index
      %226 = vector.load %arg8[%c8, %c0_68] : memref<64x96xf32, #tpu.memory_space<vmem>>, vector<8x96xf32>
      %227 = arith.truncf %222 : vector<8x32xf32> to vector<8x32xbf16>
      %cst_69 = arith.constant dense<0.000000e+00> : vector<8x96xf32>
      %228 = tpu.matmul %227, %12, %cst_69 {dimension_numbers = #tpu.dot_dimension_numbers<[1], [0], [0], [1], [0, 0, 1, 1], [], []>} : vector<8x32xbf16>, vector<32x96xbf16>, vector<8x96xf32> -> vector<8x96xf32>
      %229 = vector.extract_strided_slice %226 {offsets = [0, 0], sizes = [8, 32], strides = [1, 1]} : vector<8x96xf32> to vector<8x32xf32>
      %230 = vector.extract_strided_slice %228 {offsets = [0, 0], sizes = [8, 32], strides = [1, 1]} : vector<8x96xf32> to vector<8x32xf32>
      %231 = arith.addf %229, %230 : vector<8x32xf32>
      %232 = arith.negf %231 : vector<8x32xf32>
      %233 = math.exp %232 : vector<8x32xf32>
      %cst_70 = arith.constant 1.000000e+00 : f32
      %234 = vector.broadcast %cst_70 : f32 to vector<8x32xf32>
      %235 = arith.addf %234, %233 : vector<8x32xf32>
      %236 = arith.divf %234, %235 : vector<8x32xf32>
      %237 = vector.extract_strided_slice %226 {offsets = [0, 32], sizes = [8, 32], strides = [1, 1]} : vector<8x96xf32> to vector<8x32xf32>
      %238 = vector.extract_strided_slice %228 {offsets = [0, 32], sizes = [8, 32], strides = [1, 1]} : vector<8x96xf32> to vector<8x32xf32>
      %239 = arith.addf %237, %238 : vector<8x32xf32>
      %240 = arith.negf %239 : vector<8x32xf32>
      %241 = math.exp %240 : vector<8x32xf32>
      %cst_71 = arith.constant 1.000000e+00 : f32
      %242 = vector.broadcast %cst_71 : f32 to vector<8x32xf32>
      %243 = arith.addf %242, %241 : vector<8x32xf32>
      %244 = arith.divf %242, %243 : vector<8x32xf32>
      %245 = vector.extract_strided_slice %226 {offsets = [0, 64], sizes = [8, 32], strides = [1, 1]} : vector<8x96xf32> to vector<8x32xf32>
      %246 = vector.extract_strided_slice %228 {offsets = [0, 64], sizes = [8, 32], strides = [1, 1]} : vector<8x96xf32> to vector<8x32xf32>
      %247 = vector.broadcast %14 : vector<1x32xf32> to vector<8x32xf32>
      %248 = arith.addf %246, %247 : vector<8x32xf32>
      %249 = arith.mulf %236, %248 : vector<8x32xf32>
      %250 = arith.addf %245, %249 : vector<8x32xf32>
      %251 = math.tanh %250 : vector<8x32xf32>
      %cst_72 = arith.constant 1.000000e+00 : f32
      %252 = vector.broadcast %cst_72 : f32 to vector<8x32xf32>
      %253 = arith.subf %252, %244 : vector<8x32xf32>
      %254 = arith.mulf %253, %251 : vector<8x32xf32>
      %255 = arith.mulf %244, %222 : vector<8x32xf32>
      %256 = arith.addf %254, %255 : vector<8x32xf32>
      %c0_73 = arith.constant 0 : index
      %c8_74 = arith.constant 8 : index
      %c0_75 = arith.constant 0 : index
      %257 = vector.load %arg6[%c0_73, %c8_74, %c0_75] : memref<1x64x32xf32, #tpu.memory_space<vmem>>, vector<1x8x32xf32>
      %258 = vector.shape_cast %257 : vector<1x8x32xf32> to vector<8x32xf32>
      %259 = vector.shape_cast %256 : vector<8x32xf32> to vector<1x8x32xf32>
      tpu.vector_store %arg6[%c0_73, %c8_74, %c0_75], %259 {strides = array<i32>} : memref<1x64x32xf32, #tpu.memory_space<vmem>>, vector<1x8x32xf32>,
      %c0_76 = arith.constant 0 : index
      %c0_77 = arith.constant 0 : index
      %260 = vector.load %arg8[%c0_76, %c0_77] : memref<64x96xf32, #tpu.memory_space<vmem>>, vector<8x96xf32>
      %261 = arith.truncf %256 : vector<8x32xf32> to vector<8x32xbf16>
      %cst_78 = arith.constant dense<0.000000e+00> : vector<8x96xf32>
      %262 = tpu.matmul %261, %12, %cst_78 {dimension_numbers = #tpu.dot_dimension_numbers<[1], [0], [0], [1], [0, 0, 1, 1], [], []>} : vector<8x32xbf16>, vector<32x96xbf16>, vector<8x96xf32> -> vector<8x96xf32>
      %263 = vector.extract_strided_slice %260 {offsets = [0, 0], sizes = [8, 32], strides = [1, 1]} : vector<8x96xf32> to vector<8x32xf32>
      %264 = vector.extract_strided_slice %262 {offsets = [0, 0], sizes = [8, 32], strides = [1, 1]} : vector<8x96xf32> to vector<8x32xf32>
      %265 = arith.addf %263, %264 : vector<8x32xf32>
      %266 = arith.negf %265 : vector<8x32xf32>
      %267 = math.exp %266 : vector<8x32xf32>
      %cst_79 = arith.constant 1.000000e+00 : f32
      %268 = vector.broadcast %cst_79 : f32 to vector<8x32xf32>
      %269 = arith.addf %268, %267 : vector<8x32xf32>
      %270 = arith.divf %268, %269 : vector<8x32xf32>
      %271 = vector.extract_strided_slice %260 {offsets = [0, 32], sizes = [8, 32], strides = [1, 1]} : vector<8x96xf32> to vector<8x32xf32>
      %272 = vector.extract_strided_slice %262 {offsets = [0, 32], sizes = [8, 32], strides = [1, 1]} : vector<8x96xf32> to vector<8x32xf32>
      %273 = arith.addf %271, %272 : vector<8x32xf32>
      %274 = arith.negf %273 : vector<8x32xf32>
      %275 = math.exp %274 : vector<8x32xf32>
      %cst_80 = arith.constant 1.000000e+00 : f32
      %276 = vector.broadcast %cst_80 : f32 to vector<8x32xf32>
      %277 = arith.addf %276, %275 : vector<8x32xf32>
      %278 = arith.divf %276, %277 : vector<8x32xf32>
      %279 = vector.extract_strided_slice %260 {offsets = [0, 64], sizes = [8, 32], strides = [1, 1]} : vector<8x96xf32> to vector<8x32xf32>
      %280 = vector.extract_strided_slice %262 {offsets = [0, 64], sizes = [8, 32], strides = [1, 1]} : vector<8x96xf32> to vector<8x32xf32>
      %281 = vector.broadcast %14 : vector<1x32xf32> to vector<8x32xf32>
      %282 = arith.addf %280, %281 : vector<8x32xf32>
      %283 = arith.mulf %270, %282 : vector<8x32xf32>
      %284 = arith.addf %279, %283 : vector<8x32xf32>
      %285 = math.tanh %284 : vector<8x32xf32>
      %cst_81 = arith.constant 1.000000e+00 : f32
      %286 = vector.broadcast %cst_81 : f32 to vector<8x32xf32>
      %287 = arith.subf %286, %278 : vector<8x32xf32>
      %288 = arith.mulf %287, %285 : vector<8x32xf32>
      %289 = arith.mulf %278, %256 : vector<8x32xf32>
      %290 = arith.addf %288, %289 : vector<8x32xf32>
      %c0_82 = arith.constant 0 : index
      %c0_83 = arith.constant 0 : index
      %c0_84 = arith.constant 0 : index
      %291 = vector.load %arg6[%c0_82, %c0_83, %c0_84] : memref<1x64x32xf32, #tpu.memory_space<vmem>>, vector<1x8x32xf32>
      %292 = vector.shape_cast %291 : vector<1x8x32xf32> to vector<8x32xf32>
      %293 = vector.shape_cast %290 : vector<8x32xf32> to vector<1x8x32xf32>
      tpu.vector_store %arg6[%c0_82, %c0_83, %c0_84], %293 {strides = array<i32>} : memref<1x64x32xf32, #tpu.memory_space<vmem>>, vector<1x8x32xf32>,
      %c0_85 = arith.constant 0 : index
      %c0_86 = arith.constant 0 : index
      %c0_87 = arith.constant 0 : index
      %294 = vector.load %arg7[%c0_85, %c0_86, %c0_87] : memref<1x8x32xf32, #tpu.memory_space<vmem>>, vector<1x8x32xf32>
      %295 = vector.shape_cast %294 : vector<1x8x32xf32> to vector<8x32xf32>
      %296 = vector.shape_cast %290 : vector<8x32xf32> to vector<1x8x32xf32>
      tpu.vector_store %arg7[%c0_85, %c0_86, %c0_87], %296 {strides = array<i32>} : memref<1x8x32xf32, #tpu.memory_space<vmem>>, vector<1x8x32xf32>,
    } else {
    }
    return
  }
  func.func @transform_0(%arg0: i32) -> (i32, i32, i32) {
    %c0_i32 = arith.constant 0 : i32
    %c0_i32_0 = arith.constant 0 : i32
    %c0_i32_1 = arith.constant 0 : i32
    %c0_i32_2 = arith.constant 0 : i32
    return %c0_i32, %c0_i32_0, %c0_i32_1 : i32, i32, i32
  }
  func.func @transform_1(%arg0: i32) -> (i32, i32, i32, i32) {
    %c0_i32 = arith.constant 0 : i32
    %c0_i32_0 = arith.constant 0 : i32
    %c0_i32_1 = arith.constant 0 : i32
    %c0_i32_2 = arith.constant 0 : i32
    return %arg0, %c0_i32, %c0_i32_0, %c0_i32_1 : i32, i32, i32, i32
  }
  func.func @transform_2(%arg0: i32) -> (i32, i32, i32) {
    %c0_i32 = arith.constant 0 : i32
    %c0_i32_0 = arith.constant 0 : i32
    %c0_i32_1 = arith.constant 0 : i32
    return %arg0, %c0_i32, %c0_i32_0 : i32, i32, i32
  }
  func.func @transform_3(%arg0: i32) -> (i32, i32, i32) {
    %c0_i32 = arith.constant 0 : i32
    %c0_i32_0 = arith.constant 0 : i32
    %c0_i32_1 = arith.constant 0 : i32
    return %arg0, %c0_i32, %c0_i32_0 : i32, i32, i32
  }
  func.func @transform_4(%arg0: i32) -> (i32, i32, i32) {
    %c0_i32 = arith.constant 0 : i32
    %c0_i32_0 = arith.constant 0 : i32
    %c0_i32_1 = arith.constant 0 : i32
    return %arg0, %c0_i32, %c0_i32_0 : i32, i32, i32
  }
  func.func @transform_5(%arg0: i32) -> (i32, i32, i32) {
    %c0_i32 = arith.constant 0 : i32
    %c0_i32_0 = arith.constant 0 : i32
    %c0_i32_1 = arith.constant 0 : i32
    return %arg0, %c0_i32, %c0_i32_0 : i32, i32, i32
  }
  func.func @transform_6(%arg0: i32) -> (i32, i32, i32) {
    %c0_i32 = arith.constant 0 : i32
    %c0_i32_0 = arith.constant 0 : i32
    %c0_i32_1 = arith.constant 0 : i32
    return %arg0, %c0_i32, %c0_i32_0 : i32, i32, i32
  }
}

</mosaic_0001>

<llo_original>
// kernel: rnn_encoder_forward.2
$region0: #{rnn_encoder_forward.2}
  #allocation0 [shape = 'u32[]', space=smem, size = 0x4, offset = 0x4, fixed_abs, tag = 'smem constant byte address 0x4 - core index']
  #allocation1 [shape = 'u32[144,128]{1,0:T(1,128)}', space=vmem, size = 0x12000, scoped, tag = 'internal scratch']
  #allocation2 [shape = 'f32[64,96]{1,0:T(8,128)}', space=vmem, size = 0x8000, scoped, tag = 'scratch operand']
  %s0 = inlined_call_operand.vmem [shape: f32[1,64,16], index: 0, kind: input, shape index: {}]
  %s1 = inlined_call_operand.vmem [shape: bf16[2,1,16,96], index: 1, kind: input, shape index: {}]
  %s2 = inlined_call_operand.vmem [shape: bf16[2,32,96], index: 2, kind: input, shape index: {}]
  %s3 = inlined_call_operand.vmem [shape: f32[2,1,96], index: 3, kind: input, shape index: {}]
  %s4 = inlined_call_operand.vmem [shape: f32[2,1,32], index: 4, kind: input, shape index: {}]
  %s5 = inlined_call_operand.vmem [shape: f32[2,64,32], index: 5, kind: output, shape index: {0}]
  %s6 = inlined_call_operand.vmem [shape: f32[2,8,32], index: 6, kind: output, shape index: {1}]
  %7 = xla_tuple %s5, %s6
  %s8 = sld [smem:[#allocation0]]
  $region69: #{rnn_encoder_forward.2} parent=0
    _
  %s10 = ssub.s32 1, %s8
  %s11 = scalar_select 0, %s10, %s8
  loop: start=0, step=1, limit=4
  $region2: #{rnn_encoder_forward.2} parent=0 // loop_pre_header
    _
  $region3: #{rnn_encoder_forward.2} parent=0 // loop_header
    %s13 = sphi 0, %s17
    %p14 = scmp.ge.s32.totalorder %s13, 4
    %s21 = sphi 0, %s21
    %s23 = sphi 0, %s21
    %s24 = sphi 0, %s23
    %s38 = sphi 0, %s24
    %s44 = sphi 0, %s46
    %s47 = sphi 0, %s44
    %s48 = sphi 0, %s47
    %s64 = sphi 0, %s48
    %s70 = sphi 0, %s72
    %s73 = sphi 0, %s70
    %s74 = sphi 0, %s73
    %s90 = sphi 0, %s74
    %s96 = sphi 0, %s98
    %s99 = sphi 0, %s96
    %s100 = sphi 0, %s99
    %s116 = sphi 0, %s100
    %s122 = sphi 0, %s124
    %s125 = sphi 0, %s122
    %s126 = sphi 0, %s125
    %s142 = sphi 0, %s126
    %s148 = sphi 0, %s150
    %s151 = sphi 0, %s148
    %s152 = sphi 0, %s151
    %s168 = sphi 0, %s152
    %s174 = sphi 0, %s176
    %s177 = sphi 0, %s174
    %s178 = sphi 0, %s177
    %s194 = sphi 0, %s178
  $region4: #{rnn_encoder_forward.2} parent=0 // loop_header_branch
    %16 = sbr.rel (%p14) target = $region8
  $region5: #{rnn_encoder_forward.2} parent=0 // loop_body
    %s18 = ssub.s32 %s13, 1
    %s19 = ssub.s32 %s13, 2
    %s20 = sadd.s32 %s13, 1
    %s22 = sadd.s32 %s21, 1
    %p25 = scmp.eq.s32.totalorder %s13, 1
    %p26 = scmp.ne.s32.totalorder %s21, %s23
    %p27 = scmp.eq.s32.totalorder %s13, 0
    %p28 = por %p26, %p27
    %p29 = scmp.ne.s32.totalorder %s21, %s23
    %p30 = scmp.eq.s32.totalorder %s18, 1
    %p31 = por %p29, %p30
    %p32 = scmp.ne.s32.totalorder %s23, %s24
    %p33 = scmp.eq.s32.totalorder %s18, 0
    %p34 = por %p32, %p33
    %p35 = scmp.ne.s32.totalorder %s23, %s24
    %p36 = scmp.eq.s32.totalorder %s19, 1
    %p37 = por %p35, %p36
    %p39 = scmp.ne.s32.totalorder %s24, %s38
    %p40 = scmp.eq.s32.totalorder %s19, 0
    %p41 = por %p39, %p40
    %s42 = ssub.s32 %s13, %s20
    %p43 = scmp.eq.s32.totalorder %s42, 0
    %s45 = sadd.s32 %s44, 1
    %s46 = scalar_select %p43, %s44, %s45
    %p49 = pneg %p43
    %p50 = scmp.eq.s32.totalorder %s13, 1
    %p51 = por %p49, %p50
    %p52 = scmp.ne.s32.totalorder %s44, %s47
    %p53 = scmp.eq.s32.totalorder %s13, 0
    %p54 = por %p52, %p53
    %p55 = scmp.ne.s32.totalorder %s44, %s47
    %p56 = scmp.eq.s32.totalorder %s18, 1
    %p57 = por %p55, %p56
    %p58 = scmp.ne.s32.totalorder %s47, %s48
    %p59 = scmp.eq.s32.totalorder %s18, 0
    %p60 = por %p58, %p59
    %p61 = scmp.ne.s32.totalorder %s47, %s48
    %p62 = scmp.eq.s32.totalorder %s19, 1
    %p63 = por %p61, %p62
    %p65 = scmp.ne.s32.totalorder %s48, %s64
    %p66 = scmp.eq.s32.totalorder %s19, 0
    %p67 = por %p65, %p66
    %s68 = ssub.s32 %s13, %s20
    %p69 = scmp.eq.s32.totalorder %s68, 0
    %s71 = sadd.s32 %s70, 1
    %s72 = scalar_select %p69, %s70, %s71
    %p75 = pneg %p69
    %p76 = scmp.eq.s32.totalorder %s13, 1
    %p77 = por %p75, %p76
    %p78 = scmp.ne.s32.totalorder %s70, %s73
    %p79 = scmp.eq.s32.totalorder %s13, 0
    %p80 = por %p78, %p79
    %p81 = scmp.ne.s32.totalorder %s70, %s73
    %p82 = scmp.eq.s32.totalorder %s18, 1
    %p83 = por %p81, %p82
    %p84 = scmp.ne.s32.totalorder %s73, %s74
    %p85 = scmp.eq.s32.totalorder %s18, 0
    %p86 = por %p84, %p85
    %p87 = scmp.ne.s32.totalorder %s73, %s74
    %p88 = scmp.eq.s32.totalorder %s19, 1
    %p89 = por %p87, %p88
    %p91 = scmp.ne.s32.totalorder %s74, %s90
    %p92 = scmp.eq.s32.totalorder %s19, 0
    %p93 = por %p91, %p92
    %s94 = ssub.s32 %s13, %s20
    %p95 = scmp.eq.s32.totalorder %s94, 0
    %s97 = sadd.s32 %s96, 1
    %s98 = scalar_select %p95, %s96, %s97
    %p101 = pneg %p95
    %p102 = scmp.eq.s32.totalorder %s13, 1
    %p103 = por %p101, %p102
    %p104 = scmp.ne.s32.totalorder %s96, %s99
    %p105 = scmp.eq.s32.totalorder %s13, 0
    %p106 = por %p104, %p105
    %p107 = scmp.ne.s32.totalorder %s96, %s99
    %p108 = scmp.eq.s32.totalorder %s18, 1
    %p109 = por %p107, %p108
    %p110 = scmp.ne.s32.totalorder %s99, %s100
    %p111 = scmp.eq.s32.totalorder %s18, 0
    %p112 = por %p110, %p111
    %p113 = scmp.ne.s32.totalorder %s99, %s100
    %p114 = scmp.eq.s32.totalorder %s19, 1
    %p115 = por %p113, %p114
    %p117 = scmp.ne.s32.totalorder %s100, %s116
    %p118 = scmp.eq.s32.totalorder %s19, 0
    %p119 = por %p117, %p118
    %s120 = ssub.s32 %s13, %s20
    %p121 = scmp.eq.s32.totalorder %s120, 0
    %s123 = sadd.s32 %s122, 1
    %s124 = scalar_select %p121, %s122, %s123
    %p127 = pneg %p121
    %p128 = scmp.eq.s32.totalorder %s13, 1
    %p129 = por %p127, %p128
    %p130 = scmp.ne.s32.totalorder %s122, %s125
    %p131 = scmp.eq.s32.totalorder %s13, 0
    %p132 = por %p130, %p131
    %p133 = scmp.ne.s32.totalorder %s122, %s125
    %p134 = scmp.eq.s32.totalorder %s18, 1
    %p135 = por %p133, %p134
    %p136 = scmp.ne.s32.totalorder %s125, %s126
    %p137 = scmp.eq.s32.totalorder %s18, 0
    %p138 = por %p136, %p137
    %p139 = scmp.ne.s32.totalorder %s125, %s126
    %p140 = scmp.eq.s32.totalorder %s19, 1
    %p141 = por %p139, %p140
    %p143 = scmp.ne.s32.totalorder %s126, %s142
    %p144 = scmp.eq.s32.totalorder %s19, 0
    %p145 = por %p143, %p144
    %s146 = ssub.s32 %s13, %s20
    %p147 = scmp.eq.s32.totalorder %s146, 0
    %s149 = sadd.s32 %s148, 1
    %s150 = scalar_select %p147, %s148, %s149
    %p153 = pneg %p147
    %p154 = scmp.eq.s32.totalorder %s13, 1
    %p155 = por %p153, %p154
    %p156 = scmp.ne.s32.totalorder %s148, %s151
    %p157 = scmp.eq.s32.totalorder %s13, 0
    %p158 = por %p156, %p157
    %p159 = scmp.ne.s32.totalorder %s148, %s151
    %p160 = scmp.eq.s32.totalorder %s18, 1
    %p161 = por %p159, %p160
    %p162 = scmp.ne.s32.totalorder %s151, %s152
    %p163 = scmp.eq.s32.totalorder %s18, 0
    %p164 = por %p162, %p163
    %p165 = scmp.ne.s32.totalorder %s151, %s152
    %p166 = scmp.eq.s32.totalorder %s19, 1
    %p167 = por %p165, %p166
    %p169 = scmp.ne.s32.totalorder %s152, %s168
    %p170 = scmp.eq.s32.totalorder %s19, 0
    %p171 = por %p169, %p170
    %s172 = ssub.s32 %s13, %s20
    %p173 = scmp.eq.s32.totalorder %s172, 0
    %s175 = sadd.s32 %s174, 1
    %s176 = scalar_select %p173, %s174, %s175
    %p179 = pneg %p173
    %p180 = scmp.eq.s32.totalorder %s13, 1
    %p181 = por %p179, %p180
    %p182 = scmp.ne.s32.totalorder %s174, %s177
    %p183 = scmp.eq.s32.totalorder %s13, 0
    %p184 = por %p182, %p183
    %p185 = scmp.ne.s32.totalorder %s174, %s177
    %p186 = scmp.eq.s32.totalorder %s18, 1
    %p187 = por %p185, %p186
    %p188 = scmp.ne.s32.totalorder %s177, %s178
    %p189 = scmp.eq.s32.totalorder %s18, 0
    %p190 = por %p188, %p189
    %p191 = scmp.ne.s32.totalorder %s177, %s178
    %p192 = scmp.eq.s32.totalorder %s19, 1
    %p193 = por %p191, %p192
    %p195 = scmp.ne.s32.totalorder %s178, %s194
    %p196 = scmp.eq.s32.totalorder %s19, 0
    %p197 = por %p195, %p196
    %p198 = scmp.le.s32.totalorder 1, %s13
    %p199 = scmp.lt.s32.totalorder %s13, 3
    %p200 = pnand %p198, %p199
    %p201 = pneg %p200
    // Predicated region
    $region9: #{rnn_encoder_forward.2} parent=5 // pred_check
      _
    $region10: #{rnn_encoder_forward.2} parent=5 // pred_check_branch
      %203 = sbr.rel (%p200) target = $region12
    $region11: #{rnn_encoder_forward.2} parent=5 // pred_region
      %s204 = ssub.s32 %s13, 1
      // Predicated region
      $region13: #{rnn_encoder_forward.2} parent=11 // pred_check
        %p205 = pneg %p34
      $region14: #{rnn_encoder_forward.2} parent=11 // pred_check_branch
        %207 = sbr.rel (%p205) target = $region16
      $region15: #{rnn_encoder_forward.2} parent=11 // pred_region
        _
      $region16: #{rnn_encoder_forward.2} parent=11 // pred_fallthru
        _
    $region12: #{rnn_encoder_forward.2} parent=5 // pred_fallthru
      _
    %p208 = scmp.lt.s32.totalorder %s13, 2
    // Predicated region
    $region17: #{rnn_encoder_forward.2} parent=5 // pred_check
      %p209 = pneg %p208
    $region18: #{rnn_encoder_forward.2} parent=5 // pred_check_branch
      %211 = sbr.rel (%p209) target = $region20
    $region19: #{rnn_encoder_forward.2} parent=5 // pred_region
      // Predicated region
      $region21: #{rnn_encoder_forward.2} parent=19 // pred_check
        %p212 = pneg %p54
      $region22: #{rnn_encoder_forward.2} parent=19 // pred_check_branch
        %214 = sbr.rel (%p212) target = $region24
      $region23: #{rnn_encoder_forward.2} parent=19 // pred_region
        %p215 = scmp.lt.s32.totalorder %s13, 1
        %s216 = scalar_select %p215, %s13, 1
        %s217 = smul.addr %s216, 2
        %s218 = smul.addr %s217, 4
        %s219 = scalar_lea.vmem %s1, %s218
      $region24: #{rnn_encoder_forward.2} parent=19 // pred_fallthru
        _
      // Predicated region
      $region25: #{rnn_encoder_forward.2} parent=19 // pred_check
        %p220 = pneg %p80
      $region26: #{rnn_encoder_forward.2} parent=19 // pred_check_branch
        %222 = sbr.rel (%p220) target = $region28
      $region27: #{rnn_encoder_forward.2} parent=19 // pred_region
        %p223 = scmp.lt.s32.totalorder %s13, 1
        %s224 = scalar_select %p223, %s13, 1
        %s225 = smul.addr %s224, 4
        %s226 = smul.addr %s225, 4
        %s227 = scalar_lea.vmem %s2, %s226
      $region28: #{rnn_encoder_forward.2} parent=19 // pred_fallthru
        _
      // Predicated region
      $region29: #{rnn_encoder_forward.2} parent=19 // pred_check
        %p228 = pneg %p106
      $region30: #{rnn_encoder_forward.2} parent=19 // pred_check_branch
        %230 = sbr.rel (%p228) target = $region32
      $region31: #{rnn_encoder_forward.2} parent=19 // pred_region
        %p231 = scmp.lt.s32.totalorder %s13, 1
        %s232 = scalar_select %p231, %s13, 1
        %s233 = scalar_lea.vmem %s3, %s232
      $region32: #{rnn_encoder_forward.2} parent=19 // pred_fallthru
        _
      // Predicated region
      $region33: #{rnn_encoder_forward.2} parent=19 // pred_check
        %p234 = pneg %p132
      $region34: #{rnn_encoder_forward.2} parent=19 // pred_check_branch
        %236 = sbr.rel (%p234) target = $region36
      $region35: #{rnn_encoder_forward.2} parent=19 // pred_region
        %p237 = scmp.lt.s32.totalorder %s13, 1
        %s238 = scalar_select %p237, %s13, 1
        %s239 = scalar_lea.vmem %s4, %s238
      $region36: #{rnn_encoder_forward.2} parent=19 // pred_fallthru
        _
    $region20: #{rnn_encoder_forward.2} parent=5 // pred_fallthru
      _
    %p240 = scmp.le.s32.totalorder 1, %s13
    %p241 = scmp.lt.s32.totalorder %s13, 3
    %p242 = pnand %p240, %p241
    %p243 = pneg %p242
    // Predicated region
    $region37: #{rnn_encoder_forward.2} parent=5 // pred_check
      _
    $region38: #{rnn_encoder_forward.2} parent=5 // pred_check_branch
      %245 = sbr.rel (%p242) target = $region40
    $region39: #{rnn_encoder_forward.2} parent=5 // pred_region
      %s246 = ssub.s32 %s13, 1
      %p247 = pneg %p34
      %p248 = pneg %p31
      %p249 = scmp.lt.s32.totalorder %s18, 1
      %s250 = scalar_select %p249, %s18, 1
      %s251 = smul.addr %s250, 2
      %s252 = smul.addr %s251, 4
      %s253 = scalar_lea.vmem %s1, %s252
      %p254 = pneg %p60
      %p255 = pneg %p57
      %p256 = scmp.lt.s32.totalorder %s18, 1
      %s257 = scalar_select %p256, %s18, 1
      %s258 = smul.addr %s257, 4
      %s259 = smul.addr %s258, 4
      %s260 = scalar_lea.vmem %s2, %s259
      %p261 = pneg %p86
      %p262 = pneg %p83
      %p263 = scmp.lt.s32.totalorder %s18, 1
      %s264 = scalar_select %p263, %s18, 1
      %s265 = scalar_lea.vmem %s3, %s264
      %p266 = pneg %p112
      %p267 = pneg %p109
      %p268 = scmp.lt.s32.totalorder %s18, 1
      %s269 = scalar_select %p268, %s18, 1
      %s270 = scalar_lea.vmem %s4, %s269
      %p271 = pneg %p138
      %p272 = pneg %p135
      %p273 = pneg %p164
      %p274 = pneg %p161
      %p275 = scmp.lt.s32.totalorder %s18, 1
      %s276 = scalar_select %p275, %s18, 1
      %s277 = smul.addr %s276, 8
      %s278 = smul.addr %s277, 8
      %s279 = scalar_lea.vmem %s5, %s278
      %p280 = pneg %p190
      %p281 = pneg %p187
      %p282 = scmp.lt.s32.totalorder %s18, 1
      %s283 = scalar_select %p282, %s18, 1
      %s284 = smul.addr %s283, 8
      %s285 = scalar_lea.vmem %s6, %s284
      %p286 = scmp.lt.s32.totalorder %s18, 1
      %s287 = scalar_select %p286, %s18, 1
      %s288 = smul.addr %s287, 2
      %s289 = smul.addr %s288, 4
      %s290 = scalar_lea.vmem %s1, %s289
      %p291 = scmp.lt.s32.totalorder %s18, 1
      %s292 = scalar_select %p291, %s18, 1
      %s293 = smul.addr %s292, 4
      %s294 = smul.addr %s293, 4
      %s295 = scalar_lea.vmem %s2, %s294
      %p296 = scmp.lt.s32.totalorder %s18, 1
      %s297 = scalar_select %p296, %s18, 1
      %s298 = scalar_lea.vmem %s3, %s297
      %p299 = scmp.lt.s32.totalorder %s18, 1
      %s300 = scalar_select %p299, %s18, 1
      %s301 = scalar_lea.vmem %s4, %s300
      %p302 = scmp.lt.s32.totalorder %s18, 1
      %s303 = scalar_select %p302, %s18, 1
      %s304 = smul.addr %s303, 8
      %s305 = smul.addr %s304, 8
      %s306 = scalar_lea.vmem %s5, %s305
      %p307 = scmp.lt.s32.totalorder %s18, 1
      %s308 = scalar_select %p307, %s18, 1
      %s309 = smul.addr %s308, 8
      %s310 = scalar_lea.vmem %s6, %s309
      %v312 = vld [vmem:[%s0] sm:$0xff]
      %v313 = vld [vmem:[%s0 + $0x8] sm:$0xff]
      %v314 = vld [vmem:[%s0 + $0x10] sm:$0xff]
      %v315 = vld [vmem:[%s0 + $0x18] sm:$0xff]
      %v316 = vld [vmem:[%s0 + $0x20] sm:$0xff]
      %v317 = vld [vmem:[%s0 + $0x28] sm:$0xff]
      %v318 = vld [vmem:[%s0 + $0x30] sm:$0xff]
      %v319 = vld [vmem:[%s0 + $0x38] sm:$0xff]
      %v320 = vpack.c.bf16 %v313, %v312
      %v321 = vpack.c.bf16 %v315, %v314
      %v322 = vpack.c.bf16 %v317, %v316
      %v323 = vpack.c.bf16 %v319, %v318
      %v324 = vld [vmem:[%s290] sm:$0xf]
      %v325 = vld [vmem:[%s290 + $0x4] sm:$0xf]
      %v326 = vld [vmem:[%s298] sm:$0x1]
      %v328 = vlaneseq
      %v329 = vshrl.u32 %v328, 7
      %v330 = vsub.s32 0, %v329
      %v331 = vrot.slane %v326, %v330
      %v335 = vunpack.c.l.b16 %v324
      %v336 = vunpack.c.l.b16 %v325
      %v337 = vpack.c.b16 %v336, %v335
      %vm339 = vcmask 130048
      %v341 = vsel %vm339, %v320, 0
      %v344 = vsel %vm339, %v321, 0
      %v347 = vsel %vm339, %v322, 0
      %v350 = vsel %vm339, %v323, 0
      %352 = vmatprep.subr.bf16.mxu0 0
      %353 = vmatpush1.bf16.msra.mxu0 %v337
      %354 = vmatprep.subr.bf16.mxu0 0
      %355 = vmatpush1.bf16.msra.mxu0 0
      %356 = vmatprep.subr.bf16.mxu0 0
      %357 = vmatpush1.bf16.msra.mxu0 0
      %358 = vmatprep.subr.bf16.mxu0 0
      %359 = vmatpush1.bf16.msra.mxu0 0
      %360 = vmatprep.subr.bf16.mxu0 0
      %361 = vmatpush1.bf16.msra.mxu0 0
      %362 = vmatprep.subr.bf16.mxu0 0
      %363 = vmatpush1.bf16.msra.mxu0 0
      %364 = vmatprep.subr.bf16.mxu0 0
      %365 = vmatpush1.bf16.msra.mxu0 0
      %366 = vmatprep.subr.bf16.mxu0 0
      %367 = vmatpush1.bf16.msra.mxu0 0
      %368 = vmatprep.subr.bf16.mxu0 0
      %369 = vmatpush1.bf16.msra.mxu0 0
      %370 = vmatprep.subr.bf16.mxu0 0
      %371 = vmatpush1.bf16.msra.mxu0 0
      %372 = vmatprep.subr.bf16.mxu0 0
      %373 = vmatpush1.bf16.msra.mxu0 0
      %374 = vmatprep.subr.bf16.mxu0 0
      %375 = vmatpush1.bf16.msra.mxu0 0
      %376 = vmatprep.subr.bf16.mxu0 0
      %377 = vmatpush1.bf16.msra.mxu0 0
      %378 = vmatprep.subr.bf16.mxu0 0
      %379 = vmatpush1.bf16.msra.mxu0 0
      %380 = vmatprep.subr.bf16.mxu0 0
      %381 = vmatpush1.bf16.msra.mxu0 0
      %382 = vmatprep.subr.bf16.mxu0 0
      %383 = vmatpush1.bf16.msra.mxu0 0
      %384 = vmatprep.mubr.bf16.mxu0 0
      %385 = vmatmul.mubr.bf16.gmra.mrb[0].mxu0 %v341
      %v386 = vpop.f32.mrb[0].mxu0
      %v387 = vadd.f32 %v331, %v386
      %v388 = vpop.f32.mrb[0].mxu0
      %v389 = vpop.f32.mrb[0].mxu0
      %v390 = vadd.f32 %v331, %v389
      %v391 = vpop.f32.mrb[0].mxu0
      %392 = vmatprep.mubr.bf16.mxu0 0
      %393 = vmatmul.mubr.bf16.gmra.mrb[0].mxu0 %v344
      %v394 = vpop.f32.mrb[0].mxu0
      %v395 = vadd.f32 %v331, %v394
      %v396 = vpop.f32.mrb[0].mxu0
      %v397 = vpop.f32.mrb[0].mxu0
      %v398 = vadd.f32 %v331, %v397
      %v399 = vpop.f32.mrb[0].mxu0
      %400 = vmatprep.mubr.bf16.mxu0 0
      %401 = vmatmul.mubr.bf16.gmra.mrb[0].mxu0 %v347
      %v402 = vpop.f32.mrb[0].mxu0
      %v403 = vadd.f32 %v331, %v402
      %v404 = vpop.f32.mrb[0].mxu0
      %v405 = vpop.f32.mrb[0].mxu0
      %v406 = vadd.f32 %v331, %v405
      %v407 = vpop.f32.mrb[0].mxu0
      %408 = vmatprep.mubr.bf16.mxu0 0
      %409 = vmatmul.mubr.bf16.gmra.mrb[0].mxu0 %v350
      %v410 = vpop.f32.mrb[0].mxu0
      %v411 = vadd.f32 %v331, %v410
      %v412 = vpop.f32.mrb[0].mxu0
      %v413 = vpop.f32.mrb[0].mxu0
      %v414 = vadd.f32 %v331, %v413
      %v415 = vpop.f32.mrb[0].mxu0
      %416 = vdwg.mxu0
      %vm417 = vcmask 785408
      %418 = vst.msk [vmem:[#allocation2] sm:$0xff] %vm417, %v387
      %419 = vst.msk [vmem:[#allocation2 + $0x8] sm:$0xff] %vm417, %v390
      %420 = vst.msk [vmem:[#allocation2 + $0x10] sm:$0xff] %vm417, %v395
      %421 = vst.msk [vmem:[#allocation2 + $0x18] sm:$0xff] %vm417, %v398
      %422 = vst.msk [vmem:[#allocation2 + $0x20] sm:$0xff] %vm417, %v403
      %423 = vst.msk [vmem:[#allocation2 + $0x28] sm:$0xff] %vm417, %v406
      %424 = vst.msk [vmem:[#allocation2 + $0x30] sm:$0xff] %vm417, %v411
      %425 = vst.msk [vmem:[#allocation2 + $0x38] sm:$0xff] %vm417, %v414
      %v426 = vld [vmem:[%s295] sm:$0xf]
      %v427 = vld [vmem:[%s295 + $0x4] sm:$0xf]
      %v428 = vld [vmem:[%s295 + $0x8] sm:$0xf]
      %v429 = vld [vmem:[%s295 + $0xc] sm:$0xf]
      %v430 = vld [vmem:[%s301] sm:$0x1]
      %p431 = scmp.eq.s32.totalorder %s18, 0
      // Predicated region
      $region41: #{rnn_encoder_forward.2} parent=39 // pred_check
        %p432 = pneg %p431
      $region42: #{rnn_encoder_forward.2} parent=39 // pred_check_branch
        %434 = sbr.rel (%p432) target = $region44
      $region43: #{rnn_encoder_forward.2} parent=39 // pred_region
        %v435 = vld [vmem:[#allocation2] sm:$0xff]
        %v440 = vunpack.c.l.b16 %v426
        %v441 = vunpack.c.l.b16 %v427
        %v442 = vunpack.c.l.b16 %v428
        %v443 = vunpack.c.l.b16 %v429
        %v444 = vpack.c.b16 %v441, %v440
        %v445 = vpack.c.b16 %v443, %v442
        %vm448 = vcmask 261120
        %v450 = vsel %vm448, 0, 0
        %452 = vmatprep.subr.bf16.mxu0 0
        %453 = vmatpush1.bf16.msra.mxu0 %v444
        %454 = vmatprep.subr.bf16.mxu0 0
        %455 = vmatpush1.bf16.msra.mxu0 %v445
        %456 = vmatprep.subr.bf16.mxu0 0
        %457 = vmatpush1.bf16.msra.mxu0 0
        %458 = vmatprep.subr.bf16.mxu0 0
        %459 = vmatpush1.bf16.msra.mxu0 0
        %460 = vmatprep.subr.bf16.mxu0 0
        %461 = vmatpush1.bf16.msra.mxu0 0
        %462 = vmatprep.subr.bf16.mxu0 0
        %463 = vmatpush1.bf16.msra.mxu0 0
        %464 = vmatprep.subr.bf16.mxu0 0
        %465 = vmatpush1.bf16.msra.mxu0 0
        %466 = vmatprep.subr.bf16.mxu0 0
        %467 = vmatpush1.bf16.msra.mxu0 0
        %468 = vmatprep.subr.bf16.mxu0 0
        %469 = vmatpush1.bf16.msra.mxu0 0
        %470 = vmatprep.subr.bf16.mxu0 0
        %471 = vmatpush1.bf16.msra.mxu0 0
        %472 = vmatprep.subr.bf16.mxu0 0
        %473 = vmatpush1.bf16.msra.mxu0 0
        %474 = vmatprep.subr.bf16.mxu0 0
        %475 = vmatpush1.bf16.msra.mxu0 0
        %476 = vmatprep.subr.bf16.mxu0 0
        %477 = vmatpush1.bf16.msra.mxu0 0
        %478 = vmatprep.subr.bf16.mxu0 0
        %479 = vmatpush1.bf16.msra.mxu0 0
        %480 = vmatprep.subr.bf16.mxu0 0
        %481 = vmatpush1.bf16.msra.mxu0 0
        %482 = vmatprep.subr.bf16.mxu0 0
        %483 = vmatpush1.bf16.msra.mxu0 0
        %484 = vmatprep.mubr.bf16.mxu0 0
        %485 = vmatmul.mubr.bf16.gmra.mrb[0].mxu0 %v450
        %v486 = vpop.f32.mrb[0].mxu0
        %v487 = vadd.f32 0.0, %v486
        %v488 = vpop.f32.mrb[0].mxu0
        %v489 = vpop.f32.mrb[0].mxu0
        %v490 = vpop.f32.mrb[0].mxu0
        %491 = vdwg.mxu0
        %v492 = vadd.f32 %v435, %v487
        %v493 = vxor.u32 %v492, 2147483648
        %v494 = vmul.f32 %v493, 1.442695
        %v495 = vpow.pop %v494
        %v496 = vadd.f32 %v495, 1.0
        %v497 = vrcp.pop %v496
        %v498 = vmul.f32 1.0, %v497
        %v500 = vlaneseq
        %v501 = vshrl.u32 %v500, 7
        %v502 = vsub.s32 0, %v501
        %v503 = vrot.slane %v430, %v502
        %504 = vrot.lane.b32.xlu0 %v503, 64
        %v505 = vpop.permute.xlu0 %504
        %v507 = vadd.f32 %v487, %v505
        %509 = vrot.lane.b32.xlu0 %v507, 64
        %v510 = vpop.permute.xlu0 %509
        %v512 = vmul.f32 %v498, %v510
        %514 = vrot.lane.b32.xlu0 %v512, 64
        %v515 = vpop.permute.xlu0 %514
        %v517 = vadd.f32 %v435, %v515
        %v518 = vtanh.pop %v517
        %v519 = vsub.f32 1.0, %v498
        %521 = vrot.lane.b32.xlu0 %v518, 96
        %v522 = vpop.permute.xlu0 %521
        %v524 = vmul.f32 %v519, %v522
        %v525 = vmul.f32 %v498, 0.0
        %v526 = vadd.f32 %v524, %v525
        %528 = vrot.lane.b32.xlu0 %v526, 96
        %v529 = vpop.permute.xlu0 %528
        %531 = vst.msk [vmem:[%s306] sm:$0xff] %vm448, %v529
        %v532 = vld [vmem:[#allocation2 + $0x8] sm:$0xff]
        %v533 = vpack.c.bf16 %v526, %v526
        %535 = vrot.lane.b32.xlu0 %v533, 96
        %v536 = vpop.permute.xlu0 %535
        %v538 = vsel %vm448, %v536, 0
        %540 = vmatprep.subr.bf16.mxu0 0
        %541 = vmatpush1.bf16.msra.mxu0 %v444
        %542 = vmatprep.subr.bf16.mxu0 0
        %543 = vmatpush1.bf16.msra.mxu0 %v445
        %544 = vmatprep.subr.bf16.mxu0 0
        %545 = vmatpush1.bf16.msra.mxu0 0
        %546 = vmatprep.subr.bf16.mxu0 0
        %547 = vmatpush1.bf16.msra.mxu0 0
        %548 = vmatprep.subr.bf16.mxu0 0
        %549 = vmatpush1.bf16.msra.mxu0 0
        %550 = vmatprep.subr.bf16.mxu0 0
        %551 = vmatpush1.bf16.msra.mxu0 0
        %552 = vmatprep.subr.bf16.mxu0 0
        %553 = vmatpush1.bf16.msra.mxu0 0
        %554 = vmatprep.subr.bf16.mxu0 0
        %555 = vmatpush1.bf16.msra.mxu0 0
        %556 = vmatprep.subr.bf16.mxu0 0
        %557 = vmatpush1.bf16.msra.mxu0 0
        %558 = vmatprep.subr.bf16.mxu0 0
        %559 = vmatpush1.bf16.msra.mxu0 0
        %560 = vmatprep.subr.bf16.mxu0 0
        %561 = vmatpush1.bf16.msra.mxu0 0
        %562 = vmatprep.subr.bf16.mxu0 0
        %563 = vmatpush1.bf16.msra.mxu0 0
        %564 = vmatprep.subr.bf16.mxu0 0
        %565 = vmatpush1.bf16.msra.mxu0 0
        %566 = vmatprep.subr.bf16.mxu0 0
        %567 = vmatpush1.bf16.msra.mxu0 0
        %568 = vmatprep.subr.bf16.mxu0 0
        %569 = vmatpush1.bf16.msra.mxu0 0
        %570 = vmatprep.subr.bf16.mxu0 0
        %571 = vmatpush1.bf16.msra.mxu0 0
        %572 = vmatprep.mubr.bf16.mxu0 0
        %573 = vmatmul.mubr.bf16.gmra.mrb[0].mxu0 %v538
        %v574 = vpop.f32.mrb[0].mxu0
        %v575 = vadd.f32 0.0, %v574
        %v576 = vpop.f32.mrb[0].mxu0
        %v577 = vpop.f32.mrb[0].mxu0
        %v578 = vpop.f32.mrb[0].mxu0
        %579 = vdwg.mxu0
        %v580 = vadd.f32 %v532, %v575
        %v581 = vxor.u32 %v580, 2147483648
        %v582 = vmul.f32 %v581, 1.442695
        %v583 = vpow.pop %v582
        %v584 = vadd.f32 %v583, 1.0
        %v585 = vrcp.pop %v584
        %v586 = vmul.f32 1.0, %v585
        %v587 = vadd.f32 %v575, %v505
        %589 = vrot.lane.b32.xlu0 %v587, 64
        %v590 = vpop.permute.xlu0 %589
        %v592 = vmul.f32 %v586, %v590
        %594 = vrot.lane.b32.xlu0 %v592, 64
        %v595 = vpop.permute.xlu0 %594
        %v597 = vadd.f32 %v532, %v595
        %v598 = vtanh.pop %v597
        %v599 = vsub.f32 1.0, %v586
        %601 = vrot.lane.b32.xlu0 %v598, 96
        %v602 = vpop.permute.xlu0 %601
        %v604 = vmul.f32 %v599, %v602
        %v605 = vmul.f32 %v586, %v526
        %v606 = vadd.f32 %v604, %v605
        %608 = vrot.lane.b32.xlu0 %v606, 96
        %v609 = vpop.permute.xlu0 %608
        %611 = vst.msk [vmem:[%s306 + $0x8] sm:$0xff] %vm448, %v609
        %v612 = vld [vmem:[#allocation2 + $0x10] sm:$0xff]
        %v613 = vpack.c.bf16 %v606, %v606
        %615 = vrot.lane.b32.xlu0 %v613, 96
        %v616 = vpop.permute.xlu0 %615
        %v618 = vsel %vm448, %v616, 0
        %620 = vmatprep.subr.bf16.mxu0 0
        %621 = vmatpush1.bf16.msra.mxu0 %v444
        %622 = vmatprep.subr.bf16.mxu0 0
        %623 = vmatpush1.bf16.msra.mxu0 %v445
        %624 = vmatprep.subr.bf16.mxu0 0
        %625 = vmatpush1.bf16.msra.mxu0 0
        %626 = vmatprep.subr.bf16.mxu0 0
        %627 = vmatpush1.bf16.msra.mxu0 0
        %628 = vmatprep.subr.bf16.mxu0 0
        %629 = vmatpush1.bf16.msra.mxu0 0
        %630 = vmatprep.subr.bf16.mxu0 0
        %631 = vmatpush1.bf16.msra.mxu0 0
        %632 = vmatprep.subr.bf16.mxu0 0
        %633 = vmatpush1.bf16.msra.mxu0 0
        %634 = vmatprep.subr.bf16.mxu0 0
        %635 = vmatpush1.bf16.msra.mxu0 0
        %636 = vmatprep.subr.bf16.mxu0 0
        %637 = vmatpush1.bf16.msra.mxu0 0
        %638 = vmatprep.subr.bf16.mxu0 0
        %639 = vmatpush1.bf16.msra.mxu0 0
        %640 = vmatprep.subr.bf16.mxu0 0
        %641 = vmatpush1.bf16.msra.mxu0 0
        %642 = vmatprep.subr.bf16.mxu0 0
        %643 = vmatpush1.bf16.msra.mxu0 0
        %644 = vmatprep.subr.bf16.mxu0 0
        %645 = vmatpush1.bf16.msra.mxu0 0
        %646 = vmatprep.subr.bf16.mxu0 0
        %647 = vmatpush1.bf16.msra.mxu0 0
        %648 = vmatprep.subr.bf16.mxu0 0
        %649 = vmatpush1.bf16.msra.mxu0 0
        %650 = vmatprep.subr.bf16.mxu0 0
        %651 = vmatpush1.bf16.msra.mxu0 0
        %652 = vmatprep.mubr.bf16.mxu0 0
        %653 = vmatmul.mubr.bf16.gmra.mrb[0].mxu0 %v618
        %v654 = vpop.f32.mrb[0].mxu0
        %v655 = vadd.f32 0.0, %v654
        %v656 = vpop.f32.mrb[0].mxu0
        %v657 = vpop.f32.mrb[0].mxu0
        %v658 = vpop.f32.mrb[0].mxu0
        %659 = vdwg.mxu0
        %v660 = vadd.f32 %v612, %v655
        %v661 = vxor.u32 %v660, 2147483648
        %v662 = vmul.f32 %v661, 1.442695
        %v663 = vpow.pop %v662
        %v664 = vadd.f32 %v663, 1.0
        %v665 = vrcp.pop %v664
        %v666 = vmul.f32 1.0, %v665
        %v667 = vadd.f32 %v655, %v505
        %669 = vrot.lane.b32.xlu0 %v667, 64
        %v670 = vpop.permute.xlu0 %669
        %v672 = vmul.f32 %v666, %v670
        %674 = vrot.lane.b32.xlu0 %v672, 64
        %v675 = vpop.permute.xlu0 %674
        %v677 = vadd.f32 %v612, %v675
        %v678 = vtanh.pop %v677
        %v679 = vsub.f32 1.0, %v666
        %681 = vrot.lane.b32.xlu0 %v678, 96
        %v682 = vpop.permute.xlu0 %681
        %v684 = vmul.f32 %v679, %v682
        %v685 = vmul.f32 %v666, %v606
        %v686 = vadd.f32 %v684, %v685
        %688 = vrot.lane.b32.xlu0 %v686, 96
        %v689 = vpop.permute.xlu0 %688
        %691 = vst.msk [vmem:[%s306 + $0x10] sm:$0xff] %vm448, %v689
        %v692 = vld [vmem:[#allocation2 + $0x18] sm:$0xff]
        %v693 = vpack.c.bf16 %v686, %v686
        %695 = vrot.lane.b32.xlu0 %v693, 96
        %v696 = vpop.permute.xlu0 %695
        %v698 = vsel %vm448, %v696, 0
        %700 = vmatprep.subr.bf16.mxu0 0
        %701 = vmatpush1.bf16.msra.mxu0 %v444
        %702 = vmatprep.subr.bf16.mxu0 0
        %703 = vmatpush1.bf16.msra.mxu0 %v445
        %704 = vmatprep.subr.bf16.mxu0 0
        %705 = vmatpush1.bf16.msra.mxu0 0
        %706 = vmatprep.subr.bf16.mxu0 0
        %707 = vmatpush1.bf16.msra.mxu0 0
        %708 = vmatprep.subr.bf16.mxu0 0
        %709 = vmatpush1.bf16.msra.mxu0 0
        %710 = vmatprep.subr.bf16.mxu0 0
        %711 = vmatpush1.bf16.msra.mxu0 0
        %712 = vmatprep.subr.bf16.mxu0 0
        %713 = vmatpush1.bf16.msra.mxu0 0
        %714 = vmatprep.subr.bf16.mxu0 0
        %715 = vmatpush1.bf16.msra.mxu0 0
        %716 = vmatprep.subr.bf16.mxu0 0
        %717 = vmatpush1.bf16.msra.mxu0 0
        %718 = vmatprep.subr.bf16.mxu0 0
        %719 = vmatpush1.bf16.msra.mxu0 0
        %720 = vmatprep.subr.bf16.mxu0 0
        %721 = vmatpush1.bf16.msra.mxu0 0
        %722 = vmatprep.subr.bf16.mxu0 0
        %723 = vmatpush1.bf16.msra.mxu0 0
        %724 = vmatprep.subr.bf16.mxu0 0
        %725 = vmatpush1.bf16.msra.mxu0 0
        %726 = vmatprep.subr.bf16.mxu0 0
        %727 = vmatpush1.bf16.msra.mxu0 0
        %728 = vmatprep.subr.bf16.mxu0 0
        %729 = vmatpush1.bf16.msra.mxu0 0
        %730 = vmatprep.subr.bf16.mxu0 0
        %731 = vmatpush1.bf16.msra.mxu0 0
        %732 = vmatprep.mubr.bf16.mxu0 0
        %733 = vmatmul.mubr.bf16.gmra.mrb[0].mxu0 %v698
        %v734 = vpop.f32.mrb[0].mxu0
        %v735 = vadd.f32 0.0, %v734
        %v736 = vpop.f32.mrb[0].mxu0
        %v737 = vpop.f32.mrb[0].mxu0
        %v738 = vpop.f32.mrb[0].mxu0
        %739 = vdwg.mxu0
        %v740 = vadd.f32 %v692, %v735
        %v741 = vxor.u32 %v740, 2147483648
        %v742 = vmul.f32 %v741, 1.442695
        %v743 = vpow.pop %v742
        %v744 = vadd.f32 %v743, 1.0
        %v745 = vrcp.pop %v744
        %v746 = vmul.f32 1.0, %v745
        %v747 = vadd.f32 %v735, %v505
        %749 = vrot.lane.b32.xlu0 %v747, 64
        %v750 = vpop.permute.xlu0 %749
        %v752 = vmul.f32 %v746, %v750
        %754 = vrot.lane.b32.xlu0 %v752, 64
        %v755 = vpop.permute.xlu0 %754
        %v757 = vadd.f32 %v692, %v755
        %v758 = vtanh.pop %v757
        %v759 = vsub.f32 1.0, %v746
        %761 = vrot.lane.b32.xlu0 %v758, 96
        %v762 = vpop.permute.xlu0 %761
        %v764 = vmul.f32 %v759, %v762
        %v765 = vmul.f32 %v746, %v686
        %v766 = vadd.f32 %v764, %v765
        %768 = vrot.lane.b32.xlu0 %v766, 96
        %v769 = vpop.permute.xlu0 %768
        %771 = vst.msk [vmem:[%s306 + $0x18] sm:$0xff] %vm448, %v769
        %v772 = vld [vmem:[#allocation2 + $0x20] sm:$0xff]
        %v773 = vpack.c.bf16 %v766, %v766
        %775 = vrot.lane.b32.xlu0 %v773, 96
        %v776 = vpop.permute.xlu0 %775
        %v778 = vsel %vm448, %v776, 0
        %780 = vmatprep.subr.bf16.mxu0 0
        %781 = vmatpush1.bf16.msra.mxu0 %v444
        %782 = vmatprep.subr.bf16.mxu0 0
        %783 = vmatpush1.bf16.msra.mxu0 %v445
        %784 = vmatprep.subr.bf16.mxu0 0
        %785 = vmatpush1.bf16.msra.mxu0 0
        %786 = vmatprep.subr.bf16.mxu0 0
        %787 = vmatpush1.bf16.msra.mxu0 0
        %788 = vmatprep.subr.bf16.mxu0 0
        %789 = vmatpush1.bf16.msra.mxu0 0
        %790 = vmatprep.subr.bf16.mxu0 0
        %791 = vmatpush1.bf16.msra.mxu0 0
        %792 = vmatprep.subr.bf16.mxu0 0
        %793 = vmatpush1.bf16.msra.mxu0 0
        %794 = vmatprep.subr.bf16.mxu0 0
        %795 = vmatpush1.bf16.msra.mxu0 0
        %796 = vmatprep.subr.bf16.mxu0 0
        %797 = vmatpush1.bf16.msra.mxu0 0
        %798 = vmatprep.subr.bf16.mxu0 0
        %799 = vmatpush1.bf16.msra.mxu0 0
        %800 = vmatprep.subr.bf16.mxu0 0
        %801 = vmatpush1.bf16.msra.mxu0 0
        %802 = vmatprep.subr.bf16.mxu0 0
        %803 = vmatpush1.bf16.msra.mxu0 0
        %804 = vmatprep.subr.bf16.mxu0 0
        %805 = vmatpush1.bf16.msra.mxu0 0
        %806 = vmatprep.subr.bf16.mxu0 0
        %807 = vmatpush1.bf16.msra.mxu0 0
        %808 = vmatprep.subr.bf16.mxu0 0
        %809 = vmatpush1.bf16.msra.mxu0 0
        %810 = vmatprep.subr.bf16.mxu0 0
        %811 = vmatpush1.bf16.msra.mxu0 0
        %812 = vmatprep.mubr.bf16.mxu0 0
        %813 = vmatmul.mubr.bf16.gmra.mrb[0].mxu0 %v778
        %v814 = vpop.f32.mrb[0].mxu0
        %v815 = vadd.f32 0.0, %v814
        %v816 = vpop.f32.mrb[0].mxu0
        %v817 = vpop.f32.mrb[0].mxu0
        %v818 = vpop.f32.mrb[0].mxu0
        %819 = vdwg.mxu0
        %v820 = vadd.f32 %v772, %v815
        %v821 = vxor.u32 %v820, 2147483648
        %v822 = vmul.f32 %v821, 1.442695
        %v823 = vpow.pop %v822
        %v824 = vadd.f32 %v823, 1.0
        %v825 = vrcp.pop %v824
        %v826 = vmul.f32 1.0, %v825
        %v827 = vadd.f32 %v815, %v505
        %829 = vrot.lane.b32.xlu0 %v827, 64
        %v830 = vpop.permute.xlu0 %829
        %v832 = vmul.f32 %v826, %v830
        %834 = vrot.lane.b32.xlu0 %v832, 64
        %v835 = vpop.permute.xlu0 %834
        %v837 = vadd.f32 %v772, %v835
        %v838 = vtanh.pop %v837
        %v839 = vsub.f32 1.0, %v826
        %841 = vrot.lane.b32.xlu0 %v838, 96
        %v842 = vpop.permute.xlu0 %841
        %v844 = vmul.f32 %v839, %v842
        %v845 = vmul.f32 %v826, %v766
        %v846 = vadd.f32 %v844, %v845
        %848 = vrot.lane.b32.xlu0 %v846, 96
        %v849 = vpop.permute.xlu0 %848
        %851 = vst.msk [vmem:[%s306 + $0x20] sm:$0xff] %vm448, %v849
        %v852 = vld [vmem:[#allocation2 + $0x28] sm:$0xff]
        %v853 = vpack.c.bf16 %v846, %v846
        %855 = vrot.lane.b32.xlu0 %v853, 96
        %v856 = vpop.permute.xlu0 %855
        %v858 = vsel %vm448, %v856, 0
        %860 = vmatprep.subr.bf16.mxu0 0
        %861 = vmatpush1.bf16.msra.mxu0 %v444
        %862 = vmatprep.subr.bf16.mxu0 0
        %863 = vmatpush1.bf16.msra.mxu0 %v445
        %864 = vmatprep.subr.bf16.mxu0 0
        %865 = vmatpush1.bf16.msra.mxu0 0
        %866 = vmatprep.subr.bf16.mxu0 0
        %867 = vmatpush1.bf16.msra.mxu0 0
        %868 = vmatprep.subr.bf16.mxu0 0
        %869 = vmatpush1.bf16.msra.mxu0 0
        %870 = vmatprep.subr.bf16.mxu0 0
        %871 = vmatpush1.bf16.msra.mxu0 0
        %872 = vmatprep.subr.bf16.mxu0 0
        %873 = vmatpush1.bf16.msra.mxu0 0
        %874 = vmatprep.subr.bf16.mxu0 0
        %875 = vmatpush1.bf16.msra.mxu0 0
        %876 = vmatprep.subr.bf16.mxu0 0
        %877 = vmatpush1.bf16.msra.mxu0 0
        %878 = vmatprep.subr.bf16.mxu0 0
        %879 = vmatpush1.bf16.msra.mxu0 0
        %880 = vmatprep.subr.bf16.mxu0 0
        %881 = vmatpush1.bf16.msra.mxu0 0
        %882 = vmatprep.subr.bf16.mxu0 0
        %883 = vmatpush1.bf16.msra.mxu0 0
        %884 = vmatprep.subr.bf16.mxu0 0
        %885 = vmatpush1.bf16.msra.mxu0 0
        %886 = vmatprep.subr.bf16.mxu0 0
        %887 = vmatpush1.bf16.msra.mxu0 0
        %888 = vmatprep.subr.bf16.mxu0 0
        %889 = vmatpush1.bf16.msra.mxu0 0
        %890 = vmatprep.subr.bf16.mxu0 0
        %891 = vmatpush1.bf16.msra.mxu0 0
        %892 = vmatprep.mubr.bf16.mxu0 0
        %893 = vmatmul.mubr.bf16.gmra.mrb[0].mxu0 %v858
        %v894 = vpop.f32.mrb[0].mxu0
        %v895 = vadd.f32 0.0, %v894
        %v896 = vpop.f32.mrb[0].mxu0
        %v897 = vpop.f32.mrb[0].mxu0
        %v898 = vpop.f32.mrb[0].mxu0
        %899 = vdwg.mxu0
        %v900 = vadd.f32 %v852, %v895
        %v901 = vxor.u32 %v900, 2147483648
        %v902 = vmul.f32 %v901, 1.442695
        %v903 = vpow.pop %v902
        %v904 = vadd.f32 %v903, 1.0
        %v905 = vrcp.pop %v904
        %v906 = vmul.f32 1.0, %v905
        %v907 = vadd.f32 %v895, %v505
        %909 = vrot.lane.b32.xlu0 %v907, 64
        %v910 = vpop.permute.xlu0 %909
        %v912 = vmul.f32 %v906, %v910
        %914 = vrot.lane.b32.xlu0 %v912, 64
        %v915 = vpop.permute.xlu0 %914
        %v917 = vadd.f32 %v852, %v915
        %v918 = vtanh.pop %v917
        %v919 = vsub.f32 1.0, %v906
        %921 = vrot.lane.b32.xlu0 %v918, 96
        %v922 = vpop.permute.xlu0 %921
        %v924 = vmul.f32 %v919, %v922
        %v925 = vmul.f32 %v906, %v846
        %v926 = vadd.f32 %v924, %v925
        %928 = vrot.lane.b32.xlu0 %v926, 96
        %v929 = vpop.permute.xlu0 %928
        %931 = vst.msk [vmem:[%s306 + $0x28] sm:$0xff] %vm448, %v929
        %v932 = vld [vmem:[#allocation2 + $0x30] sm:$0xff]
        %v933 = vpack.c.bf16 %v926, %v926
        %935 = vrot.lane.b32.xlu0 %v933, 96
        %v936 = vpop.permute.xlu0 %935
        %v938 = vsel %vm448, %v936, 0
        %940 = vmatprep.subr.bf16.mxu0 0
        %941 = vmatpush1.bf16.msra.mxu0 %v444
        %942 = vmatprep.subr.bf16.mxu0 0
        %943 = vmatpush1.bf16.msra.mxu0 %v445
        %944 = vmatprep.subr.bf16.mxu0 0
        %945 = vmatpush1.bf16.msra.mxu0 0
        %946 = vmatprep.subr.bf16.mxu0 0
        %947 = vmatpush1.bf16.msra.mxu0 0
        %948 = vmatprep.subr.bf16.mxu0 0
        %949 = vmatpush1.bf16.msra.mxu0 0
        %950 = vmatprep.subr.bf16.mxu0 0
        %951 = vmatpush1.bf16.msra.mxu0 0
        %952 = vmatprep.subr.bf16.mxu0 0
        %953 = vmatpush1.bf16.msra.mxu0 0
        %954 = vmatprep.subr.bf16.mxu0 0
        %955 = vmatpush1.bf16.msra.mxu0 0
        %956 = vmatprep.subr.bf16.mxu0 0
        %957 = vmatpush1.bf16.msra.mxu0 0
        %958 = vmatprep.subr.bf16.mxu0 0
        %959 = vmatpush1.bf16.msra.mxu0 0
        %960 = vmatprep.subr.bf16.mxu0 0
        %961 = vmatpush1.bf16.msra.mxu0 0
        %962 = vmatprep.subr.bf16.mxu0 0
        %963 = vmatpush1.bf16.msra.mxu0 0
        %964 = vmatprep.subr.bf16.mxu0 0
        %965 = vmatpush1.bf16.msra.mxu0 0
        %966 = vmatprep.subr.bf16.mxu0 0
        %967 = vmatpush1.bf16.msra.mxu0 0
        %968 = vmatprep.subr.bf16.mxu0 0
        %969 = vmatpush1.bf16.msra.mxu0 0
        %970 = vmatprep.subr.bf16.mxu0 0
        %971 = vmatpush1.bf16.msra.mxu0 0
        %972 = vmatprep.mubr.bf16.mxu0 0
        %973 = vmatmul.mubr.bf16.gmra.mrb[0].mxu0 %v938
        %v974 = vpop.f32.mrb[0].mxu0
        %v975 = vadd.f32 0.0, %v974
        %v976 = vpop.f32.mrb[0].mxu0
        %v977 = vpop.f32.mrb[0].mxu0
        %v978 = vpop.f32.mrb[0].mxu0
        %979 = vdwg.mxu0
        %v980 = vadd.f32 %v932, %v975
        %v981 = vxor.u32 %v980, 2147483648
        %v982 = vmul.f32 %v981, 1.442695
        %v983 = vpow.pop %v982
        %v984 = vadd.f32 %v983, 1.0
        %v985 = vrcp.pop %v984
        %v986 = vmul.f32 1.0, %v985
        %v987 = vadd.f32 %v975, %v505
        %989 = vrot.lane.b32.xlu0 %v987, 64
        %v990 = vpop.permute.xlu0 %989
        %v992 = vmul.f32 %v986, %v990
        %994 = vrot.lane.b32.xlu0 %v992, 64
        %v995 = vpop.permute.xlu0 %994
        %v997 = vadd.f32 %v932, %v995
        %v998 = vtanh.pop %v997
        %v999 = vsub.f32 1.0, %v986
        %1001 = vrot.lane.b32.xlu0 %v998, 96
        %v1002 = vpop.permute.xlu0 %1001
        %v1004 = vmul.f32 %v999, %v1002
        %v1005 = vmul.f32 %v986, %v926
        %v1006 = vadd.f32 %v1004, %v1005
        %1008 = vrot.lane.b32.xlu0 %v1006, 96
        %v1009 = vpop.permute.xlu0 %1008
        %1011 = vst.msk [vmem:[%s306 + $0x30] sm:$0xff] %vm448, %v1009
        %v1012 = vld [vmem:[#allocation2 + $0x38] sm:$0xff]
        %v1013 = vpack.c.bf16 %v1006, %v1006
        %1015 = vrot.lane.b32.xlu0 %v1013, 96
        %v1016 = vpop.permute.xlu0 %1015
        %v1018 = vsel %vm448, %v1016, 0
        %1020 = vmatprep.subr.bf16.mxu0 0
        %1021 = vmatpush1.bf16.msra.mxu0 %v444
        %1022 = vmatprep.subr.bf16.mxu0 0
        %1023 = vmatpush1.bf16.msra.mxu0 %v445
        %1024 = vmatprep.subr.bf16.mxu0 0
        %1025 = vmatpush1.bf16.msra.mxu0 0
        %1026 = vmatprep.subr.bf16.mxu0 0
        %1027 = vmatpush1.bf16.msra.mxu0 0
        %1028 = vmatprep.subr.bf16.mxu0 0
        %1029 = vmatpush1.bf16.msra.mxu0 0
        %1030 = vmatprep.subr.bf16.mxu0 0
        %1031 = vmatpush1.bf16.msra.mxu0 0
        %1032 = vmatprep.subr.bf16.mxu0 0
        %1033 = vmatpush1.bf16.msra.mxu0 0
        %1034 = vmatprep.subr.bf16.mxu0 0
        %1035 = vmatpush1.bf16.msra.mxu0 0
        %1036 = vmatprep.subr.bf16.mxu0 0
        %1037 = vmatpush1.bf16.msra.mxu0 0
        %1038 = vmatprep.subr.bf16.mxu0 0
        %1039 = vmatpush1.bf16.msra.mxu0 0
        %1040 = vmatprep.subr.bf16.mxu0 0
        %1041 = vmatpush1.bf16.msra.mxu0 0
        %1042 = vmatprep.subr.bf16.mxu0 0
        %1043 = vmatpush1.bf16.msra.mxu0 0
        %1044 = vmatprep.subr.bf16.mxu0 0
        %1045 = vmatpush1.bf16.msra.mxu0 0
        %1046 = vmatprep.subr.bf16.mxu0 0
        %1047 = vmatpush1.bf16.msra.mxu0 0
        %1048 = vmatprep.subr.bf16.mxu0 0
        %1049 = vmatpush1.bf16.msra.mxu0 0
        %1050 = vmatprep.subr.bf16.mxu0 0
        %1051 = vmatpush1.bf16.msra.mxu0 0
        %1052 = vmatprep.mubr.bf16.mxu0 0
        %1053 = vmatmul.mubr.bf16.gmra.mrb[0].mxu0 %v1018
        %v1054 = vpop.f32.mrb[0].mxu0
        %v1055 = vadd.f32 0.0, %v1054
        %v1056 = vpop.f32.mrb[0].mxu0
        %v1057 = vpop.f32.mrb[0].mxu0
        %v1058 = vpop.f32.mrb[0].mxu0
        %1059 = vdwg.mxu0
        %v1060 = vadd.f32 %v1012, %v1055
        %v1061 = vxor.u32 %v1060, 2147483648
        %v1062 = vmul.f32 %v1061, 1.442695
        %v1063 = vpow.pop %v1062
        %v1064 = vadd.f32 %v1063, 1.0
        %v1065 = vrcp.pop %v1064
        %v1066 = vmul.f32 1.0, %v1065
        %v1067 = vadd.f32 %v1055, %v505
        %1069 = vrot.lane.b32.xlu0 %v1067, 64
        %v1070 = vpop.permute.xlu0 %1069
        %v1072 = vmul.f32 %v1066, %v1070
        %1074 = vrot.lane.b32.xlu0 %v1072, 64
        %v1075 = vpop.permute.xlu0 %1074
        %v1077 = vadd.f32 %v1012, %v1075
        %v1078 = vtanh.pop %v1077
        %v1079 = vsub.f32 1.0, %v1066
        %1081 = vrot.lane.b32.xlu0 %v1078, 96
        %v1082 = vpop.permute.xlu0 %1081
        %v1084 = vmul.f32 %v1079, %v1082
        %v1085 = vmul.f32 %v1066, %v1006
        %v1086 = vadd.f32 %v1084, %v1085
        %1088 = vrot.lane.b32.xlu0 %v1086, 96
        %v1089 = vpop.permute.xlu0 %1088
        %1091 = vst.msk [vmem:[%s306 + $0x38] sm:$0xff] %vm448, %v1089
        %1092 = vst.msk [vmem:[%s310] sm:$0xff] %vm448, %v1089
      $region44: #{rnn_encoder_forward.2} parent=39 // pred_fallthru
        _
      %p1093 = scmp.eq.s32.totalorder %s18, 1
      // Predicated region
      $region45: #{rnn_encoder_forward.2} parent=39 // pred_check
        %p1094 = pneg %p1093
      $region46: #{rnn_encoder_forward.2} parent=39 // pred_check_branch
        %1096 = sbr.rel (%p1094) target = $region48
      $region47: #{rnn_encoder_forward.2} parent=39 // pred_region
        %v1097 = vld [vmem:[#allocation2 + $0x38] sm:$0xff]
        %v1102 = vunpack.c.l.b16 %v426
        %v1103 = vunpack.c.l.b16 %v427
        %v1104 = vunpack.c.l.b16 %v428
        %v1105 = vunpack.c.l.b16 %v429
        %v1106 = vpack.c.b16 %v1103, %v1102
        %v1107 = vpack.c.b16 %v1105, %v1104
        %vm1110 = vcmask 261120
        %v1112 = vsel %vm1110, 0, 0
        %1114 = vmatprep.subr.bf16.mxu0 0
        %1115 = vmatpush1.bf16.msra.mxu0 %v1106
        %1116 = vmatprep.subr.bf16.mxu0 0
        %1117 = vmatpush1.bf16.msra.mxu0 %v1107
        %1118 = vmatprep.subr.bf16.mxu0 0
        %1119 = vmatpush1.bf16.msra.mxu0 0
        %1120 = vmatprep.subr.bf16.mxu0 0
        %1121 = vmatpush1.bf16.msra.mxu0 0
        %1122 = vmatprep.subr.bf16.mxu0 0
        %1123 = vmatpush1.bf16.msra.mxu0 0
        %1124 = vmatprep.subr.bf16.mxu0 0
        %1125 = vmatpush1.bf16.msra.mxu0 0
        %1126 = vmatprep.subr.bf16.mxu0 0
        %1127 = vmatpush1.bf16.msra.mxu0 0
        %1128 = vmatprep.subr.bf16.mxu0 0
        %1129 = vmatpush1.bf16.msra.mxu0 0
        %1130 = vmatprep.subr.bf16.mxu0 0
        %1131 = vmatpush1.bf16.msra.mxu0 0
        %1132 = vmatprep.subr.bf16.mxu0 0
        %1133 = vmatpush1.bf16.msra.mxu0 0
        %1134 = vmatprep.subr.bf16.mxu0 0
        %1135 = vmatpush1.bf16.msra.mxu0 0
        %1136 = vmatprep.subr.bf16.mxu0 0
        %1137 = vmatpush1.bf16.msra.mxu0 0
        %1138 = vmatprep.subr.bf16.mxu0 0
        %1139 = vmatpush1.bf16.msra.mxu0 0
        %1140 = vmatprep.subr.bf16.mxu0 0
        %1141 = vmatpush1.bf16.msra.mxu0 0
        %1142 = vmatprep.subr.bf16.mxu0 0
        %1143 = vmatpush1.bf16.msra.mxu0 0
        %1144 = vmatprep.subr.bf16.mxu0 0
        %1145 = vmatpush1.bf16.msra.mxu0 0
        %1146 = vmatprep.mubr.bf16.mxu0 0
        %1147 = vmatmul.mubr.bf16.gmra.mrb[0].mxu0 %v1112
        %v1148 = vpop.f32.mrb[0].mxu0
        %v1149 = vadd.f32 0.0, %v1148
        %v1150 = vpop.f32.mrb[0].mxu0
        %v1151 = vpop.f32.mrb[0].mxu0
        %v1152 = vpop.f32.mrb[0].mxu0
        %1153 = vdwg.mxu0
        %v1154 = vadd.f32 %v1097, %v1149
        %v1155 = vxor.u32 %v1154, 2147483648
        %v1156 = vmul.f32 %v1155, 1.442695
        %v1157 = vpow.pop %v1156
        %v1158 = vadd.f32 %v1157, 1.0
        %v1159 = vrcp.pop %v1158
        %v1160 = vmul.f32 1.0, %v1159
        %v1162 = vlaneseq
        %v1163 = vshrl.u32 %v1162, 7
        %v1164 = vsub.s32 0, %v1163
        %v1165 = vrot.slane %v430, %v1164
        %1166 = vrot.lane.b32.xlu0 %v1165, 64
        %v1167 = vpop.permute.xlu0 %1166
        %v1169 = vadd.f32 %v1149, %v1167
        %1171 = vrot.lane.b32.xlu0 %v1169, 64
        %v1172 = vpop.permute.xlu0 %1171
        %v1174 = vmul.f32 %v1160, %v1172
        %1176 = vrot.lane.b32.xlu0 %v1174, 64
        %v1177 = vpop.permute.xlu0 %1176
        %v1179 = vadd.f32 %v1097, %v1177
        %v1180 = vtanh.pop %v1179
        %v1181 = vsub.f32 1.0, %v1160
        %1183 = vrot.lane.b32.xlu0 %v1180, 96
        %v1184 = vpop.permute.xlu0 %1183
        %v1186 = vmul.f32 %v1181, %v1184
        %v1187 = vmul.f32 %v1160, 0.0
        %v1188 = vadd.f32 %v1186, %v1187
        %1190 = vrot.lane.b32.xlu0 %v1188, 96
        %v1191 = vpop.permute.xlu0 %1190
        %1193 = vst.msk [vmem:[%s306 + $0x38] sm:$0xff] %vm1110, %v1191
        %v1194 = vld [vmem:[#allocation2 + $0x30] sm:$0xff]
        %v1195 = vpack.c.bf16 %v1188, %v1188
        %1197 = vrot.lane.b32.xlu0 %v1195, 96
        %v1198 = vpop.permute.xlu0 %1197
        %v1200 = vsel %vm1110, %v1198, 0
        %1202 = vmatprep.subr.bf16.mxu0 0
        %1203 = vmatpush1.bf16.msra.mxu0 %v1106
        %1204 = vmatprep.subr.bf16.mxu0 0
        %1205 = vmatpush1.bf16.msra.mxu0 %v1107
        %1206 = vmatprep.subr.bf16.mxu0 0
        %1207 = vmatpush1.bf16.msra.mxu0 0
        %1208 = vmatprep.subr.bf16.mxu0 0
        %1209 = vmatpush1.bf16.msra.mxu0 0
        %1210 = vmatprep.subr.bf16.mxu0 0
        %1211 = vmatpush1.bf16.msra.mxu0 0
        %1212 = vmatprep.subr.bf16.mxu0 0
        %1213 = vmatpush1.bf16.msra.mxu0 0
        %1214 = vmatprep.subr.bf16.mxu0 0
        %1215 = vmatpush1.bf16.msra.mxu0 0
        %1216 = vmatprep.subr.bf16.mxu0 0
        %1217 = vmatpush1.bf16.msra.mxu0 0
        %1218 = vmatprep.subr.bf16.mxu0 0
        %1219 = vmatpush1.bf16.msra.mxu0 0
        %1220 = vmatprep.subr.bf16.mxu0 0
        %1221 = vmatpush1.bf16.msra.mxu0 0
        %1222 = vmatprep.subr.bf16.mxu0 0
        %1223 = vmatpush1.bf16.msra.mxu0 0
        %1224 = vmatprep.subr.bf16.mxu0 0
        %1225 = vmatpush1.bf16.msra.mxu0 0
        %1226 = vmatprep.subr.bf16.mxu0 0
        %1227 = vmatpush1.bf16.msra.mxu0 0
        %1228 = vmatprep.subr.bf16.mxu0 0
        %1229 = vmatpush1.bf16.msra.mxu0 0
        %1230 = vmatprep.subr.bf16.mxu0 0
        %1231 = vmatpush1.bf16.msra.mxu0 0
        %1232 = vmatprep.subr.bf16.mxu0 0
        %1233 = vmatpush1.bf16.msra.mxu0 0
        %1234 = vmatprep.mubr.bf16.mxu0 0
        %1235 = vmatmul.mubr.bf16.gmra.mrb[0].mxu0 %v1200
        %v1236 = vpop.f32.mrb[0].mxu0
        %v1237 = vadd.f32 0.0, %v1236
        %v1238 = vpop.f32.mrb[0].mxu0
        %v1239 = vpop.f32.mrb[0].mxu0
        %v1240 = vpop.f32.mrb[0].mxu0
        %1241 = vdwg.mxu0
        %v1242 = vadd.f32 %v1194, %v1237
        %v1243 = vxor.u32 %v1242, 2147483648
        %v1244 = vmul.f32 %v1243, 1.442695
        %v1245 = vpow.pop %v1244
        %v1246 = vadd.f32 %v1245, 1.0
        %v1247 = vrcp.pop %v1246
        %v1248 = vmul.f32 1.0, %v1247
        %v1249 = vadd.f32 %v1237, %v1167
        %1251 = vrot.lane.b32.xlu0 %v1249, 64
        %v1252 = vpop.permute.xlu0 %1251
        %v1254 = vmul.f32 %v1248, %v1252
        %1256 = vrot.lane.b32.xlu0 %v1254, 64
        %v1257 = vpop.permute.xlu0 %1256
        %v1259 = vadd.f32 %v1194, %v1257
        %v1260 = vtanh.pop %v1259
        %v1261 = vsub.f32 1.0, %v1248
        %1263 = vrot.lane.b32.xlu0 %v1260, 96
        %v1264 = vpop.permute.xlu0 %1263
        %v1266 = vmul.f32 %v1261, %v1264
        %v1267 = vmul.f32 %v1248, %v1188
        %v1268 = vadd.f32 %v1266, %v1267
        %1270 = vrot.lane.b32.xlu0 %v1268, 96
        %v1271 = vpop.permute.xlu0 %1270
        %1273 = vst.msk [vmem:[%s306 + $0x30] sm:$0xff] %vm1110, %v1271
        %v1274 = vld [vmem:[#allocation2 + $0x28] sm:$0xff]
        %v1275 = vpack.c.bf16 %v1268, %v1268
        %1277 = vrot.lane.b32.xlu0 %v1275, 96
        %v1278 = vpop.permute.xlu0 %1277
        %v1280 = vsel %vm1110, %v1278, 0
        %1282 = vmatprep.subr.bf16.mxu0 0
        %1283 = vmatpush1.bf16.msra.mxu0 %v1106
        %1284 = vmatprep.subr.bf16.mxu0 0
        %1285 = vmatpush1.bf16.msra.mxu0 %v1107
        %1286 = vmatprep.subr.bf16.mxu0 0
        %1287 = vmatpush1.bf16.msra.mxu0 0
        %1288 = vmatprep.subr.bf16.mxu0 0
        %1289 = vmatpush1.bf16.msra.mxu0 0
        %1290 = vmatprep.subr.bf16.mxu0 0
        %1291 = vmatpush1.bf16.msra.mxu0 0
        %1292 = vmatprep.subr.bf16.mxu0 0
        %1293 = vmatpush1.bf16.msra.mxu0 0
        %1294 = vmatprep.subr.bf16.mxu0 0
        %1295 = vmatpush1.bf16.msra.mxu0 0
        %1296 = vmatprep.subr.bf16.mxu0 0
        %1297 = vmatpush1.bf16.msra.mxu0 0
        %1298 = vmatprep.subr.bf16.mxu0 0
        %1299 = vmatpush1.bf16.msra.mxu0 0
        %1300 = vmatprep.subr.bf16.mxu0 0
        %1301 = vmatpush1.bf16.msra.mxu0 0
        %1302 = vmatprep.subr.bf16.mxu0 0
        %1303 = vmatpush1.bf16.msra.mxu0 0
        %1304 = vmatprep.subr.bf16.mxu0 0
        %1305 = vmatpush1.bf16.msra.mxu0 0
        %1306 = vmatprep.subr.bf16.mxu0 0
        %1307 = vmatpush1.bf16.msra.mxu0 0
        %1308 = vmatprep.subr.bf16.mxu0 0
        %1309 = vmatpush1.bf16.msra.mxu0 0
        %1310 = vmatprep.subr.bf16.mxu0 0
        %1311 = vmatpush1.bf16.msra.mxu0 0
        %1312 = vmatprep.subr.bf16.mxu0 0
        %1313 = vmatpush1.bf16.msra.mxu0 0
        %1314 = vmatprep.mubr.bf16.mxu0 0
        %1315 = vmatmul.mubr.bf16.gmra.mrb[0].mxu0 %v1280
        %v1316 = vpop.f32.mrb[0].mxu0
        %v1317 = vadd.f32 0.0, %v1316
        %v1318 = vpop.f32.mrb[0].mxu0
        %v1319 = vpop.f32.mrb[0].mxu0
        %v1320 = vpop.f32.mrb[0].mxu0
        %1321 = vdwg.mxu0
        %v1322 = vadd.f32 %v1274, %v1317
        %v1323 = vxor.u32 %v1322, 2147483648
        %v1324 = vmul.f32 %v1323, 1.442695
        %v1325 = vpow.pop %v1324
        %v1326 = vadd.f32 %v1325, 1.0
        %v1327 = vrcp.pop %v1326
        %v1328 = vmul.f32 1.0, %v1327
        %v1329 = vadd.f32 %v1317, %v1167
        %1331 = vrot.lane.b32.xlu0 %v1329, 64
        %v1332 = vpop.permute.xlu0 %1331
        %v1334 = vmul.f32 %v1328, %v1332
        %1336 = vrot.lane.b32.xlu0 %v1334, 64
        %v1337 = vpop.permute.xlu0 %1336
        %v1339 = vadd.f32 %v1274, %v1337
        %v1340 = vtanh.pop %v1339
        %v1341 = vsub.f32 1.0, %v1328
        %1343 = vrot.lane.b32.xlu0 %v1340, 96
        %v1344 = vpop.permute.xlu0 %1343
        %v1346 = vmul.f32 %v1341, %v1344
        %v1347 = vmul.f32 %v1328, %v1268
        %v1348 = vadd.f32 %v1346, %v1347
        %1350 = vrot.lane.b32.xlu0 %v1348, 96
        %v1351 = vpop.permute.xlu0 %1350
        %1353 = vst.msk [vmem:[%s306 + $0x28] sm:$0xff] %vm1110, %v1351
        %v1354 = vld [vmem:[#allocation2 + $0x20] sm:$0xff]
        %v1355 = vpack.c.bf16 %v1348, %v1348
        %1357 = vrot.lane.b32.xlu0 %v1355, 96
        %v1358 = vpop.permute.xlu0 %1357
        %v1360 = vsel %vm1110, %v1358, 0
        %1362 = vmatprep.subr.bf16.mxu0 0
        %1363 = vmatpush1.bf16.msra.mxu0 %v1106
        %1364 = vmatprep.subr.bf16.mxu0 0
        %1365 = vmatpush1.bf16.msra.mxu0 %v1107
        %1366 = vmatprep.subr.bf16.mxu0 0
        %1367 = vmatpush1.bf16.msra.mxu0 0
        %1368 = vmatprep.subr.bf16.mxu0 0
        %1369 = vmatpush1.bf16.msra.mxu0 0
        %1370 = vmatprep.subr.bf16.mxu0 0
        %1371 = vmatpush1.bf16.msra.mxu0 0
        %1372 = vmatprep.subr.bf16.mxu0 0
        %1373 = vmatpush1.bf16.msra.mxu0 0
        %1374 = vmatprep.subr.bf16.mxu0 0
        %1375 = vmatpush1.bf16.msra.mxu0 0
        %1376 = vmatprep.subr.bf16.mxu0 0
        %1377 = vmatpush1.bf16.msra.mxu0 0
        %1378 = vmatprep.subr.bf16.mxu0 0
        %1379 = vmatpush1.bf16.msra.mxu0 0
        %1380 = vmatprep.subr.bf16.mxu0 0
        %1381 = vmatpush1.bf16.msra.mxu0 0
        %1382 = vmatprep.subr.bf16.mxu0 0
        %1383 = vmatpush1.bf16.msra.mxu0 0
        %1384 = vmatprep.subr.bf16.mxu0 0
        %1385 = vmatpush1.bf16.msra.mxu0 0
        %1386 = vmatprep.subr.bf16.mxu0 0
        %1387 = vmatpush1.bf16.msra.mxu0 0
        %1388 = vmatprep.subr.bf16.mxu0 0
        %1389 = vmatpush1.bf16.msra.mxu0 0
        %1390 = vmatprep.subr.bf16.mxu0 0
        %1391 = vmatpush1.bf16.msra.mxu0 0
        %1392 = vmatprep.subr.bf16.mxu0 0
        %1393 = vmatpush1.bf16.msra.mxu0 0
        %1394 = vmatprep.mubr.bf16.mxu0 0
        %1395 = vmatmul.mubr.bf16.gmra.mrb[0].mxu0 %v1360
        %v1396 = vpop.f32.mrb[0].mxu0
        %v1397 = vadd.f32 0.0, %v1396
        %v1398 = vpop.f32.mrb[0].mxu0
        %v1399 = vpop.f32.mrb[0].mxu0
        %v1400 = vpop.f32.mrb[0].mxu0
        %1401 = vdwg.mxu0
        %v1402 = vadd.f32 %v1354, %v1397
        %v1403 = vxor.u32 %v1402, 2147483648
        %v1404 = vmul.f32 %v1403, 1.442695
        %v1405 = vpow.pop %v1404
        %v1406 = vadd.f32 %v1405, 1.0
        %v1407 = vrcp.pop %v1406
        %v1408 = vmul.f32 1.0, %v1407
        %v1409 = vadd.f32 %v1397, %v1167
        %1411 = vrot.lane.b32.xlu0 %v1409, 64
        %v1412 = vpop.permute.xlu0 %1411
        %v1414 = vmul.f32 %v1408, %v1412
        %1416 = vrot.lane.b32.xlu0 %v1414, 64
        %v1417 = vpop.permute.xlu0 %1416
        %v1419 = vadd.f32 %v1354, %v1417
        %v1420 = vtanh.pop %v1419
        %v1421 = vsub.f32 1.0, %v1408
        %1423 = vrot.lane.b32.xlu0 %v1420, 96
        %v1424 = vpop.permute.xlu0 %1423
        %v1426 = vmul.f32 %v1421, %v1424
        %v1427 = vmul.f32 %v1408, %v1348
        %v1428 = vadd.f32 %v1426, %v1427
        %1430 = vrot.lane.b32.xlu0 %v1428, 96
        %v1431 = vpop.permute.xlu0 %1430
        %1433 = vst.msk [vmem:[%s306 + $0x20] sm:$0xff] %vm1110, %v1431
        %v1434 = vld [vmem:[#allocation2 + $0x18] sm:$0xff]
        %v1435 = vpack.c.bf16 %v1428, %v1428
        %1437 = vrot.lane.b32.xlu0 %v1435, 96
        %v1438 = vpop.permute.xlu0 %1437
        %v1440 = vsel %vm1110, %v1438, 0
        %1442 = vmatprep.subr.bf16.mxu0 0
        %1443 = vmatpush1.bf16.msra.mxu0 %v1106
        %1444 = vmatprep.subr.bf16.mxu0 0
        %1445 = vmatpush1.bf16.msra.mxu0 %v1107
        %1446 = vmatprep.subr.bf16.mxu0 0
        %1447 = vmatpush1.bf16.msra.mxu0 0
        %1448 = vmatprep.subr.bf16.mxu0 0
        %1449 = vmatpush1.bf16.msra.mxu0 0
        %1450 = vmatprep.subr.bf16.mxu0 0
        %1451 = vmatpush1.bf16.msra.mxu0 0
        %1452 = vmatprep.subr.bf16.mxu0 0
        %1453 = vmatpush1.bf16.msra.mxu0 0
        %1454 = vmatprep.subr.bf16.mxu0 0
        %1455 = vmatpush1.bf16.msra.mxu0 0
        %1456 = vmatprep.subr.bf16.mxu0 0
        %1457 = vmatpush1.bf16.msra.mxu0 0
        %1458 = vmatprep.subr.bf16.mxu0 0
        %1459 = vmatpush1.bf16.msra.mxu0 0
        %1460 = vmatprep.subr.bf16.mxu0 0
        %1461 = vmatpush1.bf16.msra.mxu0 0
        %1462 = vmatprep.subr.bf16.mxu0 0
        %1463 = vmatpush1.bf16.msra.mxu0 0
        %1464 = vmatprep.subr.bf16.mxu0 0
        %1465 = vmatpush1.bf16.msra.mxu0 0
        %1466 = vmatprep.subr.bf16.mxu0 0
        %1467 = vmatpush1.bf16.msra.mxu0 0
        %1468 = vmatprep.subr.bf16.mxu0 0
        %1469 = vmatpush1.bf16.msra.mxu0 0
        %1470 = vmatprep.subr.bf16.mxu0 0
        %1471 = vmatpush1.bf16.msra.mxu0 0
        %1472 = vmatprep.subr.bf16.mxu0 0
        %1473 = vmatpush1.bf16.msra.mxu0 0
        %1474 = vmatprep.mubr.bf16.mxu0 0
        %1475 = vmatmul.mubr.bf16.gmra.mrb[0].mxu0 %v1440
        %v1476 = vpop.f32.mrb[0].mxu0
        %v1477 = vadd.f32 0.0, %v1476
        %v1478 = vpop.f32.mrb[0].mxu0
        %v1479 = vpop.f32.mrb[0].mxu0
        %v1480 = vpop.f32.mrb[0].mxu0
        %1481 = vdwg.mxu0
        %v1482 = vadd.f32 %v1434, %v1477
        %v1483 = vxor.u32 %v1482, 2147483648
        %v1484 = vmul.f32 %v1483, 1.442695
        %v1485 = vpow.pop %v1484
        %v1486 = vadd.f32 %v1485, 1.0
        %v1487 = vrcp.pop %v1486
        %v1488 = vmul.f32 1.0, %v1487
        %v1489 = vadd.f32 %v1477, %v1167
        %1491 = vrot.lane.b32.xlu0 %v1489, 64
        %v1492 = vpop.permute.xlu0 %1491
        %v1494 = vmul.f32 %v1488, %v1492
        %1496 = vrot.lane.b32.xlu0 %v1494, 64
        %v1497 = vpop.permute.xlu0 %1496
        %v1499 = vadd.f32 %v1434, %v1497
        %v1500 = vtanh.pop %v1499
        %v1501 = vsub.f32 1.0, %v1488
        %1503 = vrot.lane.b32.xlu0 %v1500, 96
        %v1504 = vpop.permute.xlu0 %1503
        %v1506 = vmul.f32 %v1501, %v1504
        %v1507 = vmul.f32 %v1488, %v1428
        %v1508 = vadd.f32 %v1506, %v1507
        %1510 = vrot.lane.b32.xlu0 %v1508, 96
        %v1511 = vpop.permute.xlu0 %1510
        %1513 = vst.msk [vmem:[%s306 + $0x18] sm:$0xff] %vm1110, %v1511
        %v1514 = vld [vmem:[#allocation2 + $0x10] sm:$0xff]
        %v1515 = vpack.c.bf16 %v1508, %v1508
        %1517 = vrot.lane.b32.xlu0 %v1515, 96
        %v1518 = vpop.permute.xlu0 %1517
        %v1520 = vsel %vm1110, %v1518, 0
        %1522 = vmatprep.subr.bf16.mxu0 0
        %1523 = vmatpush1.bf16.msra.mxu0 %v1106
        %1524 = vmatprep.subr.bf16.mxu0 0
        %1525 = vmatpush1.bf16.msra.mxu0 %v1107
        %1526 = vmatprep.subr.bf16.mxu0 0
        %1527 = vmatpush1.bf16.msra.mxu0 0
        %1528 = vmatprep.subr.bf16.mxu0 0
        %1529 = vmatpush1.bf16.msra.mxu0 0
        %1530 = vmatprep.subr.bf16.mxu0 0
        %1531 = vmatpush1.bf16.msra.mxu0 0
        %1532 = vmatprep.subr.bf16.mxu0 0
        %1533 = vmatpush1.bf16.msra.mxu0 0
        %1534 = vmatprep.subr.bf16.mxu0 0
        %1535 = vmatpush1.bf16.msra.mxu0 0
        %1536 = vmatprep.subr.bf16.mxu0 0
        %1537 = vmatpush1.bf16.msra.mxu0 0
        %1538 = vmatprep.subr.bf16.mxu0 0
        %1539 = vmatpush1.bf16.msra.mxu0 0
        %1540 = vmatprep.subr.bf16.mxu0 0
        %1541 = vmatpush1.bf16.msra.mxu0 0
        %1542 = vmatprep.subr.bf16.mxu0 0
        %1543 = vmatpush1.bf16.msra.mxu0 0
        %1544 = vmatprep.subr.bf16.mxu0 0
        %1545 = vmatpush1.bf16.msra.mxu0 0
        %1546 = vmatprep.subr.bf16.mxu0 0
        %1547 = vmatpush1.bf16.msra.mxu0 0
        %1548 = vmatprep.subr.bf16.mxu0 0
        %1549 = vmatpush1.bf16.msra.mxu0 0
        %1550 = vmatprep.subr.bf16.mxu0 0
        %1551 = vmatpush1.bf16.msra.mxu0 0
        %1552 = vmatprep.subr.bf16.mxu0 0
        %1553 = vmatpush1.bf16.msra.mxu0 0
        %1554 = vmatprep.mubr.bf16.mxu0 0
        %1555 = vmatmul.mubr.bf16.gmra.mrb[0].mxu0 %v1520
        %v1556 = vpop.f32.mrb[0].mxu0
        %v1557 = vadd.f32 0.0, %v1556
        %v1558 = vpop.f32.mrb[0].mxu0
        %v1559 = vpop.f32.mrb[0].mxu0
        %v1560 = vpop.f32.mrb[0].mxu0
        %1561 = vdwg.mxu0
        %v1562 = vadd.f32 %v1514, %v1557
        %v1563 = vxor.u32 %v1562, 2147483648
        %v1564 = vmul.f32 %v1563, 1.442695
        %v1565 = vpow.pop %v1564
        %v1566 = vadd.f32 %v1565, 1.0
        %v1567 = vrcp.pop %v1566
        %v1568 = vmul.f32 1.0, %v1567
        %v1569 = vadd.f32 %v1557, %v1167
        %1571 = vrot.lane.b32.xlu0 %v1569, 64
        %v1572 = vpop.permute.xlu0 %1571
        %v1574 = vmul.f32 %v1568, %v1572
        %1576 = vrot.lane.b32.xlu0 %v1574, 64
        %v1577 = vpop.permute.xlu0 %1576
        %v1579 = vadd.f32 %v1514, %v1577
        %v1580 = vtanh.pop %v1579
        %v1581 = vsub.f32 1.0, %v1568
        %1583 = vrot.lane.b32.xlu0 %v1580, 96
        %v1584 = vpop.permute.xlu0 %1583
        %v1586 = vmul.f32 %v1581, %v1584
        %v1587 = vmul.f32 %v1568, %v1508
        %v1588 = vadd.f32 %v1586, %v1587
        %1590 = vrot.lane.b32.xlu0 %v1588, 96
        %v1591 = vpop.permute.xlu0 %1590
        %1593 = vst.msk [vmem:[%s306 + $0x10] sm:$0xff] %vm1110, %v1591
        %v1594 = vld [vmem:[#allocation2 + $0x8] sm:$0xff]
        %v1595 = vpack.c.bf16 %v1588, %v1588
        %1597 = vrot.lane.b32.xlu0 %v1595, 96
        %v1598 = vpop.permute.xlu0 %1597
        %v1600 = vsel %vm1110, %v1598, 0
        %1602 = vmatprep.subr.bf16.mxu0 0
        %1603 = vmatpush1.bf16.msra.mxu0 %v1106
        %1604 = vmatprep.subr.bf16.mxu0 0
        %1605 = vmatpush1.bf16.msra.mxu0 %v1107
        %1606 = vmatprep.subr.bf16.mxu0 0
        %1607 = vmatpush1.bf16.msra.mxu0 0
        %1608 = vmatprep.subr.bf16.mxu0 0
        %1609 = vmatpush1.bf16.msra.mxu0 0
        %1610 = vmatprep.subr.bf16.mxu0 0
        %1611 = vmatpush1.bf16.msra.mxu0 0
        %1612 = vmatprep.subr.bf16.mxu0 0
        %1613 = vmatpush1.bf16.msra.mxu0 0
        %1614 = vmatprep.subr.bf16.mxu0 0
        %1615 = vmatpush1.bf16.msra.mxu0 0
        %1616 = vmatprep.subr.bf16.mxu0 0
        %1617 = vmatpush1.bf16.msra.mxu0 0
        %1618 = vmatprep.subr.bf16.mxu0 0
        %1619 = vmatpush1.bf16.msra.mxu0 0
        %1620 = vmatprep.subr.bf16.mxu0 0
        %1621 = vmatpush1.bf16.msra.mxu0 0
        %1622 = vmatprep.subr.bf16.mxu0 0
        %1623 = vmatpush1.bf16.msra.mxu0 0
        %1624 = vmatprep.subr.bf16.mxu0 0
        %1625 = vmatpush1.bf16.msra.mxu0 0
        %1626 = vmatprep.subr.bf16.mxu0 0
        %1627 = vmatpush1.bf16.msra.mxu0 0
        %1628 = vmatprep.subr.bf16.mxu0 0
        %1629 = vmatpush1.bf16.msra.mxu0 0
        %1630 = vmatprep.subr.bf16.mxu0 0
        %1631 = vmatpush1.bf16.msra.mxu0 0
        %1632 = vmatprep.subr.bf16.mxu0 0
        %1633 = vmatpush1.bf16.msra.mxu0 0
        %1634 = vmatprep.mubr.bf16.mxu0 0
        %1635 = vmatmul.mubr.bf16.gmra.mrb[0].mxu0 %v1600
        %v1636 = vpop.f32.mrb[0].mxu0
        %v1637 = vadd.f32 0.0, %v1636
        %v1638 = vpop.f32.mrb[0].mxu0
        %v1639 = vpop.f32.mrb[0].mxu0
        %v1640 = vpop.f32.mrb[0].mxu0
        %1641 = vdwg.mxu0
        %v1642 = vadd.f32 %v1594, %v1637
        %v1643 = vxor.u32 %v1642, 2147483648
        %v1644 = vmul.f32 %v1643, 1.442695
        %v1645 = vpow.pop %v1644
        %v1646 = vadd.f32 %v1645, 1.0
        %v1647 = vrcp.pop %v1646
        %v1648 = vmul.f32 1.0, %v1647
        %v1649 = vadd.f32 %v1637, %v1167
        %1651 = vrot.lane.b32.xlu0 %v1649, 64
        %v1652 = vpop.permute.xlu0 %1651
        %v1654 = vmul.f32 %v1648, %v1652
        %1656 = vrot.lane.b32.xlu0 %v1654, 64
        %v1657 = vpop.permute.xlu0 %1656
        %v1659 = vadd.f32 %v1594, %v1657
        %v1660 = vtanh.pop %v1659
        %v1661 = vsub.f32 1.0, %v1648
        %1663 = vrot.lane.b32.xlu0 %v1660, 96
        %v1664 = vpop.permute.xlu0 %1663
        %v1666 = vmul.f32 %v1661, %v1664
        %v1667 = vmul.f32 %v1648, %v1588
        %v1668 = vadd.f32 %v1666, %v1667
        %1670 = vrot.lane.b32.xlu0 %v1668, 96
        %v1671 = vpop.permute.xlu0 %1670
        %1673 = vst.msk [vmem:[%s306 + $0x8] sm:$0xff] %vm1110, %v1671
        %v1674 = vld [vmem:[#allocation2] sm:$0xff]
        %v1675 = vpack.c.bf16 %v1668, %v1668
        %1677 = vrot.lane.b32.xlu0 %v1675, 96
        %v1678 = vpop.permute.xlu0 %1677
        %v1680 = vsel %vm1110, %v1678, 0
        %1682 = vmatprep.subr.bf16.mxu0 0
        %1683 = vmatpush1.bf16.msra.mxu0 %v1106
        %1684 = vmatprep.subr.bf16.mxu0 0
        %1685 = vmatpush1.bf16.msra.mxu0 %v1107
        %1686 = vmatprep.subr.bf16.mxu0 0
        %1687 = vmatpush1.bf16.msra.mxu0 0
        %1688 = vmatprep.subr.bf16.mxu0 0
        %1689 = vmatpush1.bf16.msra.mxu0 0
        %1690 = vmatprep.subr.bf16.mxu0 0
        %1691 = vmatpush1.bf16.msra.mxu0 0
        %1692 = vmatprep.subr.bf16.mxu0 0
        %1693 = vmatpush1.bf16.msra.mxu0 0
        %1694 = vmatprep.subr.bf16.mxu0 0
        %1695 = vmatpush1.bf16.msra.mxu0 0
        %1696 = vmatprep.subr.bf16.mxu0 0
        %1697 = vmatpush1.bf16.msra.mxu0 0
        %1698 = vmatprep.subr.bf16.mxu0 0
        %1699 = vmatpush1.bf16.msra.mxu0 0
        %1700 = vmatprep.subr.bf16.mxu0 0
        %1701 = vmatpush1.bf16.msra.mxu0 0
        %1702 = vmatprep.subr.bf16.mxu0 0
        %1703 = vmatpush1.bf16.msra.mxu0 0
        %1704 = vmatprep.subr.bf16.mxu0 0
        %1705 = vmatpush1.bf16.msra.mxu0 0
        %1706 = vmatprep.subr.bf16.mxu0 0
        %1707 = vmatpush1.bf16.msra.mxu0 0
        %1708 = vmatprep.subr.bf16.mxu0 0
        %1709 = vmatpush1.bf16.msra.mxu0 0
        %1710 = vmatprep.subr.bf16.mxu0 0
        %1711 = vmatpush1.bf16.msra.mxu0 0
        %1712 = vmatprep.subr.bf16.mxu0 0
        %1713 = vmatpush1.bf16.msra.mxu0 0
        %1714 = vmatprep.mubr.bf16.mxu0 0
        %1715 = vmatmul.mubr.bf16.gmra.mrb[0].mxu0 %v1680
        %v1716 = vpop.f32.mrb[0].mxu0
        %v1717 = vadd.f32 0.0, %v1716
        %v1718 = vpop.f32.mrb[0].mxu0
        %v1719 = vpop.f32.mrb[0].mxu0
        %v1720 = vpop.f32.mrb[0].mxu0
        %1721 = vdwg.mxu0
        %v1722 = vadd.f32 %v1674, %v1717
        %v1723 = vxor.u32 %v1722, 2147483648
        %v1724 = vmul.f32 %v1723, 1.442695
        %v1725 = vpow.pop %v1724
        %v1726 = vadd.f32 %v1725, 1.0
        %v1727 = vrcp.pop %v1726
        %v1728 = vmul.f32 1.0, %v1727
        %v1729 = vadd.f32 %v1717, %v1167
        %1731 = vrot.lane.b32.xlu0 %v1729, 64
        %v1732 = vpop.permute.xlu0 %1731
        %v1734 = vmul.f32 %v1728, %v1732
        %1736 = vrot.lane.b32.xlu0 %v1734, 64
        %v1737 = vpop.permute.xlu0 %1736
        %v1739 = vadd.f32 %v1674, %v1737
        %v1740 = vtanh.pop %v1739
        %v1741 = vsub.f32 1.0, %v1728
        %1743 = vrot.lane.b32.xlu0 %v1740, 96
        %v1744 = vpop.permute.xlu0 %1743
        %v1746 = vmul.f32 %v1741, %v1744
        %v1747 = vmul.f32 %v1728, %v1668
        %v1748 = vadd.f32 %v1746, %v1747
        %1750 = vrot.lane.b32.xlu0 %v1748, 96
        %v1751 = vpop.permute.xlu0 %1750
        %1753 = vst.msk [vmem:[%s306] sm:$0xff] %vm1110, %v1751
        %1754 = vst.msk [vmem:[%s310] sm:$0xff] %vm1110, %v1751
      $region48: #{rnn_encoder_forward.2} parent=39 // pred_fallthru
        _
      %p1755 = scmp.lt.s32.totalorder %s18, 1
      %s1756 = scalar_select %p1755, %s18, 1
      %s1757 = smul.addr %s1756, 8
      %s1758 = smul.addr %s1757, 8
      %s1759 = scalar_lea.vmem %s5, %s1758
      %p1760 = scmp.lt.s32.totalorder %s18, 1
      %s1761 = scalar_select %p1760, %s18, 1
      %s1762 = smul.addr %s1761, 8
      %s1763 = scalar_lea.vmem %s6, %s1762
      // Predicated region
      $region49: #{rnn_encoder_forward.2} parent=39 // pred_check
        %p1764 = pneg %p161
      $region50: #{rnn_encoder_forward.2} parent=39 // pred_check_branch
        %1766 = sbr.rel (%p1764) target = $region52
      $region51: #{rnn_encoder_forward.2} parent=39 // pred_region
        _
      $region52: #{rnn_encoder_forward.2} parent=39 // pred_fallthru
        _
      // Predicated region
      $region53: #{rnn_encoder_forward.2} parent=39 // pred_check
        %p1767 = pneg %p187
      $region54: #{rnn_encoder_forward.2} parent=39 // pred_check_branch
        %1769 = sbr.rel (%p1767) target = $region56
      $region55: #{rnn_encoder_forward.2} parent=39 // pred_region
        _
      $region56: #{rnn_encoder_forward.2} parent=39 // pred_fallthru
        _
    $region40: #{rnn_encoder_forward.2} parent=5 // pred_fallthru
      _
    %p1770 = scmp.le.s32.totalorder 2, %s13
    // Predicated region
    $region57: #{rnn_encoder_forward.2} parent=5 // pred_check
      %p1771 = pneg %p1770
    $region58: #{rnn_encoder_forward.2} parent=5 // pred_check_branch
      %1773 = sbr.rel (%p1771) target = $region60
    $region59: #{rnn_encoder_forward.2} parent=5 // pred_region
      %s1774 = ssub.s32 %s13, 2
      // Predicated region
      $region61: #{rnn_encoder_forward.2} parent=59 // pred_check
        %p1775 = pneg %p167
      $region62: #{rnn_encoder_forward.2} parent=59 // pred_check_branch
        %1777 = sbr.rel (%p1775) target = $region64
      $region63: #{rnn_encoder_forward.2} parent=59 // pred_region
        %p1778 = scmp.lt.s32.totalorder %s19, 1
        %s1779 = scalar_select %p1778, %s19, 1
        %s1780 = smul.addr %s1779, 8
        %s1781 = smul.addr %s1780, 8
        %s1782 = scalar_lea.vmem %s5, %s1781
      $region64: #{rnn_encoder_forward.2} parent=59 // pred_fallthru
        _
      // Predicated region
      $region65: #{rnn_encoder_forward.2} parent=59 // pred_check
        %p1783 = pneg %p193
      $region66: #{rnn_encoder_forward.2} parent=59 // pred_check_branch
        %1785 = sbr.rel (%p1783) target = $region68
      $region67: #{rnn_encoder_forward.2} parent=59 // pred_region
        %p1786 = scmp.lt.s32.totalorder %s19, 1
        %s1787 = scalar_select %p1786, %s19, 1
        %s1788 = smul.addr %s1787, 8
        %s1789 = scalar_lea.vmem %s6, %s1788
      $region68: #{rnn_encoder_forward.2} parent=59 // pred_fallthru
        _
    $region60: #{rnn_encoder_forward.2} parent=5 // pred_fallthru
      _
  $region6: #{rnn_encoder_forward.2} parent=0 // loop_footer
    %s17 = sadd.s32 1, %s13
  $region7: #{rnn_encoder_forward.2} parent=0 // loop_footer_branch
    %12 = sbr.rel target = $region3
  $region8: #{rnn_encoder_forward.2} parent=0 // loop_exit
    _

// kernel: rnn_encoder_forward.3
$region0: #{rnn_encoder_forward.3}
  #allocation0 [shape = 'u32[]', space=smem, size = 0x4, offset = 0x4, fixed_abs, tag = 'smem constant byte address 0x4 - core index']
  #allocation1 [shape = 'u32[144,128]{1,0:T(1,128)}', space=vmem, size = 0x12000, scoped, tag = 'internal scratch']
  #allocation2 [shape = 'f32[64,96]{1,0:T(8,128)}', space=vmem, size = 0x8000, scoped, tag = 'scratch operand']
  %s0 = inlined_call_operand.vmem [shape: f32[2,64,32], index: 0, kind: input, shape index: {}]
  %s1 = inlined_call_operand.vmem [shape: bf16[2,2,32,96], index: 1, kind: input, shape index: {}]
  %s2 = inlined_call_operand.vmem [shape: bf16[2,32,96], index: 2, kind: input, shape index: {}]
  %s3 = inlined_call_operand.vmem [shape: f32[2,1,96], index: 3, kind: input, shape index: {}]
  %s4 = inlined_call_operand.vmem [shape: f32[2,1,32], index: 4, kind: input, shape index: {}]
  %s5 = inlined_call_operand.vmem [shape: f32[2,64,32], index: 5, kind: output, shape index: {0}]
  %s6 = inlined_call_operand.vmem [shape: f32[2,8,32], index: 6, kind: output, shape index: {1}]
  %7 = xla_tuple %s5, %s6
  %s8 = sld [smem:[#allocation0]]
  $region69: #{rnn_encoder_forward.3} parent=0
    _
  %s10 = ssub.s32 1, %s8
  %s11 = scalar_select 0, %s10, %s8
  loop: start=0, step=1, limit=4
  $region2: #{rnn_encoder_forward.3} parent=0 // loop_pre_header
    _
  $region3: #{rnn_encoder_forward.3} parent=0 // loop_header
    %s13 = sphi 0, %s17
    %p14 = scmp.ge.s32.totalorder %s13, 4
    %s21 = sphi 0, %s21
    %s23 = sphi 0, %s21
    %s24 = sphi 0, %s23
    %s38 = sphi 0, %s24
    %s44 = sphi 0, %s46
    %s47 = sphi 0, %s44
    %s48 = sphi 0, %s47
    %s64 = sphi 0, %s48
    %s70 = sphi 0, %s72
    %s73 = sphi 0, %s70
    %s74 = sphi 0, %s73
    %s90 = sphi 0, %s74
    %s96 = sphi 0, %s98
    %s99 = sphi 0, %s96
    %s100 = sphi 0, %s99
    %s116 = sphi 0, %s100
    %s122 = sphi 0, %s124
    %s125 = sphi 0, %s122
    %s126 = sphi 0, %s125
    %s142 = sphi 0, %s126
    %s148 = sphi 0, %s150
    %s151 = sphi 0, %s148
    %s152 = sphi 0, %s151
    %s168 = sphi 0, %s152
    %s174 = sphi 0, %s176
    %s177 = sphi 0, %s174
    %s178 = sphi 0, %s177
    %s194 = sphi 0, %s178
  $region4: #{rnn_encoder_forward.3} parent=0 // loop_header_branch
    %16 = sbr.rel (%p14) target = $region8
  $region5: #{rnn_encoder_forward.3} parent=0 // loop_body
    %s18 = ssub.s32 %s13, 1
    %s19 = ssub.s32 %s13, 2
    %s20 = sadd.s32 %s13, 1
    %s22 = sadd.s32 %s21, 1
    %p25 = scmp.eq.s32.totalorder %s13, 1
    %p26 = scmp.ne.s32.totalorder %s21, %s23
    %p27 = scmp.eq.s32.totalorder %s13, 0
    %p28 = por %p26, %p27
    %p29 = scmp.ne.s32.totalorder %s21, %s23
    %p30 = scmp.eq.s32.totalorder %s18, 1
    %p31 = por %p29, %p30
    %p32 = scmp.ne.s32.totalorder %s23, %s24
    %p33 = scmp.eq.s32.totalorder %s18, 0
    %p34 = por %p32, %p33
    %p35 = scmp.ne.s32.totalorder %s23, %s24
    %p36 = scmp.eq.s32.totalorder %s19, 1
    %p37 = por %p35, %p36
    %p39 = scmp.ne.s32.totalorder %s24, %s38
    %p40 = scmp.eq.s32.totalorder %s19, 0
    %p41 = por %p39, %p40
    %s42 = ssub.s32 %s13, %s20
    %p43 = scmp.eq.s32.totalorder %s42, 0
    %s45 = sadd.s32 %s44, 1
    %s46 = scalar_select %p43, %s44, %s45
    %p49 = pneg %p43
    %p50 = scmp.eq.s32.totalorder %s13, 1
    %p51 = por %p49, %p50
    %p52 = scmp.ne.s32.totalorder %s44, %s47
    %p53 = scmp.eq.s32.totalorder %s13, 0
    %p54 = por %p52, %p53
    %p55 = scmp.ne.s32.totalorder %s44, %s47
    %p56 = scmp.eq.s32.totalorder %s18, 1
    %p57 = por %p55, %p56
    %p58 = scmp.ne.s32.totalorder %s47, %s48
    %p59 = scmp.eq.s32.totalorder %s18, 0
    %p60 = por %p58, %p59
    %p61 = scmp.ne.s32.totalorder %s47, %s48
    %p62 = scmp.eq.s32.totalorder %s19, 1
    %p63 = por %p61, %p62
    %p65 = scmp.ne.s32.totalorder %s48, %s64
    %p66 = scmp.eq.s32.totalorder %s19, 0
    %p67 = por %p65, %p66
    %s68 = ssub.s32 %s13, %s20
    %p69 = scmp.eq.s32.totalorder %s68, 0
    %s71 = sadd.s32 %s70, 1
    %s72 = scalar_select %p69, %s70, %s71
    %p75 = pneg %p69
    %p76 = scmp.eq.s32.totalorder %s13, 1
    %p77 = por %p75, %p76
    %p78 = scmp.ne.s32.totalorder %s70, %s73
    %p79 = scmp.eq.s32.totalorder %s13, 0
    %p80 = por %p78, %p79
    %p81 = scmp.ne.s32.totalorder %s70, %s73
    %p82 = scmp.eq.s32.totalorder %s18, 1
    %p83 = por %p81, %p82
    %p84 = scmp.ne.s32.totalorder %s73, %s74
    %p85 = scmp.eq.s32.totalorder %s18, 0
    %p86 = por %p84, %p85
    %p87 = scmp.ne.s32.totalorder %s73, %s74
    %p88 = scmp.eq.s32.totalorder %s19, 1
    %p89 = por %p87, %p88
    %p91 = scmp.ne.s32.totalorder %s74, %s90
    %p92 = scmp.eq.s32.totalorder %s19, 0
    %p93 = por %p91, %p92
    %s94 = ssub.s32 %s13, %s20
    %p95 = scmp.eq.s32.totalorder %s94, 0
    %s97 = sadd.s32 %s96, 1
    %s98 = scalar_select %p95, %s96, %s97
    %p101 = pneg %p95
    %p102 = scmp.eq.s32.totalorder %s13, 1
    %p103 = por %p101, %p102
    %p104 = scmp.ne.s32.totalorder %s96, %s99
    %p105 = scmp.eq.s32.totalorder %s13, 0
    %p106 = por %p104, %p105
    %p107 = scmp.ne.s32.totalorder %s96, %s99
    %p108 = scmp.eq.s32.totalorder %s18, 1
    %p109 = por %p107, %p108
    %p110 = scmp.ne.s32.totalorder %s99, %s100
    %p111 = scmp.eq.s32.totalorder %s18, 0
    %p112 = por %p110, %p111
    %p113 = scmp.ne.s32.totalorder %s99, %s100
    %p114 = scmp.eq.s32.totalorder %s19, 1
    %p115 = por %p113, %p114
    %p117 = scmp.ne.s32.totalorder %s100, %s116
    %p118 = scmp.eq.s32.totalorder %s19, 0
    %p119 = por %p117, %p118
    %s120 = ssub.s32 %s13, %s20
    %p121 = scmp.eq.s32.totalorder %s120, 0
    %s123 = sadd.s32 %s122, 1
    %s124 = scalar_select %p121, %s122, %s123
    %p127 = pneg %p121
    %p128 = scmp.eq.s32.totalorder %s13, 1
    %p129 = por %p127, %p128
    %p130 = scmp.ne.s32.totalorder %s122, %s125
    %p131 = scmp.eq.s32.totalorder %s13, 0
    %p132 = por %p130, %p131
    %p133 = scmp.ne.s32.totalorder %s122, %s125
    %p134 = scmp.eq.s32.totalorder %s18, 1
    %p135 = por %p133, %p134
    %p136 = scmp.ne.s32.totalorder %s125, %s126
    %p137 = scmp.eq.s32.totalorder %s18, 0
    %p138 = por %p136, %p137
    %p139 = scmp.ne.s32.totalorder %s125, %s126
    %p140 = scmp.eq.s32.totalorder %s19, 1
    %p141 = por %p139, %p140
    %p143 = scmp.ne.s32.totalorder %s126, %s142
    %p144 = scmp.eq.s32.totalorder %s19, 0
    %p145 = por %p143, %p144
    %s146 = ssub.s32 %s13, %s20
    %p147 = scmp.eq.s32.totalorder %s146, 0
    %s149 = sadd.s32 %s148, 1
    %s150 = scalar_select %p147, %s148, %s149
    %p153 = pneg %p147
    %p154 = scmp.eq.s32.totalorder %s13, 1
    %p155 = por %p153, %p154
    %p156 = scmp.ne.s32.totalorder %s148, %s151
    %p157 = scmp.eq.s32.totalorder %s13, 0
    %p158 = por %p156, %p157
    %p159 = scmp.ne.s32.totalorder %s148, %s151
    %p160 = scmp.eq.s32.totalorder %s18, 1
    %p161 = por %p159, %p160
    %p162 = scmp.ne.s32.totalorder %s151, %s152
    %p163 = scmp.eq.s32.totalorder %s18, 0
    %p164 = por %p162, %p163
    %p165 = scmp.ne.s32.totalorder %s151, %s152
    %p166 = scmp.eq.s32.totalorder %s19, 1
    %p167 = por %p165, %p166
    %p169 = scmp.ne.s32.totalorder %s152, %s168
    %p170 = scmp.eq.s32.totalorder %s19, 0
    %p171 = por %p169, %p170
    %s172 = ssub.s32 %s13, %s20
    %p173 = scmp.eq.s32.totalorder %s172, 0
    %s175 = sadd.s32 %s174, 1
    %s176 = scalar_select %p173, %s174, %s175
    %p179 = pneg %p173
    %p180 = scmp.eq.s32.totalorder %s13, 1
    %p181 = por %p179, %p180
    %p182 = scmp.ne.s32.totalorder %s174, %s177
    %p183 = scmp.eq.s32.totalorder %s13, 0
    %p184 = por %p182, %p183
    %p185 = scmp.ne.s32.totalorder %s174, %s177
    %p186 = scmp.eq.s32.totalorder %s18, 1
    %p187 = por %p185, %p186
    %p188 = scmp.ne.s32.totalorder %s177, %s178
    %p189 = scmp.eq.s32.totalorder %s18, 0
    %p190 = por %p188, %p189
    %p191 = scmp.ne.s32.totalorder %s177, %s178
    %p192 = scmp.eq.s32.totalorder %s19, 1
    %p193 = por %p191, %p192
    %p195 = scmp.ne.s32.totalorder %s178, %s194
    %p196 = scmp.eq.s32.totalorder %s19, 0
    %p197 = por %p195, %p196
    %p198 = scmp.le.s32.totalorder 1, %s13
    %p199 = scmp.lt.s32.totalorder %s13, 3
    %p200 = pnand %p198, %p199
    %p201 = pneg %p200
    // Predicated region
    $region9: #{rnn_encoder_forward.3} parent=5 // pred_check
      _
    $region10: #{rnn_encoder_forward.3} parent=5 // pred_check_branch
      %203 = sbr.rel (%p200) target = $region12
    $region11: #{rnn_encoder_forward.3} parent=5 // pred_region
      %s204 = ssub.s32 %s13, 1
      // Predicated region
      $region13: #{rnn_encoder_forward.3} parent=11 // pred_check
        %p205 = pneg %p34
      $region14: #{rnn_encoder_forward.3} parent=11 // pred_check_branch
        %207 = sbr.rel (%p205) target = $region16
      $region15: #{rnn_encoder_forward.3} parent=11 // pred_region
        _
      $region16: #{rnn_encoder_forward.3} parent=11 // pred_fallthru
        _
    $region12: #{rnn_encoder_forward.3} parent=5 // pred_fallthru
      _
    %p208 = scmp.lt.s32.totalorder %s13, 2
    // Predicated region
    $region17: #{rnn_encoder_forward.3} parent=5 // pred_check
      %p209 = pneg %p208
    $region18: #{rnn_encoder_forward.3} parent=5 // pred_check_branch
      %211 = sbr.rel (%p209) target = $region20
    $region19: #{rnn_encoder_forward.3} parent=5 // pred_region
      // Predicated region
      $region21: #{rnn_encoder_forward.3} parent=19 // pred_check
        %p212 = pneg %p54
      $region22: #{rnn_encoder_forward.3} parent=19 // pred_check_branch
        %214 = sbr.rel (%p212) target = $region24
      $region23: #{rnn_encoder_forward.3} parent=19 // pred_region
        %p215 = scmp.lt.s32.totalorder %s13, 1
        %s216 = scalar_select %p215, %s13, 1
        %s217 = smul.addr %s216, 8
        %s218 = smul.addr %s217, 4
        %s219 = scalar_lea.vmem %s1, %s218
      $region24: #{rnn_encoder_forward.3} parent=19 // pred_fallthru
        _
      // Predicated region
      $region25: #{rnn_encoder_forward.3} parent=19 // pred_check
        %p220 = pneg %p80
      $region26: #{rnn_encoder_forward.3} parent=19 // pred_check_branch
        %222 = sbr.rel (%p220) target = $region28
      $region27: #{rnn_encoder_forward.3} parent=19 // pred_region
        %p223 = scmp.lt.s32.totalorder %s13, 1
        %s224 = scalar_select %p223, %s13, 1
        %s225 = smul.addr %s224, 4
        %s226 = smul.addr %s225, 4
        %s227 = scalar_lea.vmem %s2, %s226
      $region28: #{rnn_encoder_forward.3} parent=19 // pred_fallthru
        _
      // Predicated region
      $region29: #{rnn_encoder_forward.3} parent=19 // pred_check
        %p228 = pneg %p106
      $region30: #{rnn_encoder_forward.3} parent=19 // pred_check_branch
        %230 = sbr.rel (%p228) target = $region32
      $region31: #{rnn_encoder_forward.3} parent=19 // pred_region
        %p231 = scmp.lt.s32.totalorder %s13, 1
        %s232 = scalar_select %p231, %s13, 1
        %s233 = scalar_lea.vmem %s3, %s232
      $region32: #{rnn_encoder_forward.3} parent=19 // pred_fallthru
        _
      // Predicated region
      $region33: #{rnn_encoder_forward.3} parent=19 // pred_check
        %p234 = pneg %p132
      $region34: #{rnn_encoder_forward.3} parent=19 // pred_check_branch
        %236 = sbr.rel (%p234) target = $region36
      $region35: #{rnn_encoder_forward.3} parent=19 // pred_region
        %p237 = scmp.lt.s32.totalorder %s13, 1
        %s238 = scalar_select %p237, %s13, 1
        %s239 = scalar_lea.vmem %s4, %s238
      $region36: #{rnn_encoder_forward.3} parent=19 // pred_fallthru
        _
    $region20: #{rnn_encoder_forward.3} parent=5 // pred_fallthru
      _
    %p240 = scmp.le.s32.totalorder 1, %s13
    %p241 = scmp.lt.s32.totalorder %s13, 3
    %p242 = pnand %p240, %p241
    %p243 = pneg %p242
    // Predicated region
    $region37: #{rnn_encoder_forward.3} parent=5 // pred_check
      _
    $region38: #{rnn_encoder_forward.3} parent=5 // pred_check_branch
      %245 = sbr.rel (%p242) target = $region40
    $region39: #{rnn_encoder_forward.3} parent=5 // pred_region
      %s246 = ssub.s32 %s13, 1
      %p247 = pneg %p34
      %p248 = pneg %p31
      %p249 = scmp.lt.s32.totalorder %s18, 1
      %s250 = scalar_select %p249, %s18, 1
      %s251 = smul.addr %s250, 8
      %s252 = smul.addr %s251, 4
      %s253 = scalar_lea.vmem %s1, %s252
      %p254 = pneg %p60
      %p255 = pneg %p57
      %p256 = scmp.lt.s32.totalorder %s18, 1
      %s257 = scalar_select %p256, %s18, 1
      %s258 = smul.addr %s257, 4
      %s259 = smul.addr %s258, 4
      %s260 = scalar_lea.vmem %s2, %s259
      %p261 = pneg %p86
      %p262 = pneg %p83
      %p263 = scmp.lt.s32.totalorder %s18, 1
      %s264 = scalar_select %p263, %s18, 1
      %s265 = scalar_lea.vmem %s3, %s264
      %p266 = pneg %p112
      %p267 = pneg %p109
      %p268 = scmp.lt.s32.totalorder %s18, 1
      %s269 = scalar_select %p268, %s18, 1
      %s270 = scalar_lea.vmem %s4, %s269
      %p271 = pneg %p138
      %p272 = pneg %p135
      %p273 = pneg %p164
      %p274 = pneg %p161
      %p275 = scmp.lt.s32.totalorder %s18, 1
      %s276 = scalar_select %p275, %s18, 1
      %s277 = smul.addr %s276, 8
      %s278 = smul.addr %s277, 8
      %s279 = scalar_lea.vmem %s5, %s278
      %p280 = pneg %p190
      %p281 = pneg %p187
      %p282 = scmp.lt.s32.totalorder %s18, 1
      %s283 = scalar_select %p282, %s18, 1
      %s284 = smul.addr %s283, 8
      %s285 = scalar_lea.vmem %s6, %s284
      %p286 = scmp.lt.s32.totalorder %s18, 1
      %s287 = scalar_select %p286, %s18, 1
      %s288 = smul.addr %s287, 8
      %s289 = smul.addr %s288, 4
      %s290 = scalar_lea.vmem %s1, %s289
      %p291 = scmp.lt.s32.totalorder %s18, 1
      %s292 = scalar_select %p291, %s18, 1
      %s293 = smul.addr %s292, 4
      %s294 = smul.addr %s293, 4
      %s295 = scalar_lea.vmem %s2, %s294
      %p296 = scmp.lt.s32.totalorder %s18, 1
      %s297 = scalar_select %p296, %s18, 1
      %s298 = scalar_lea.vmem %s3, %s297
      %p299 = scmp.lt.s32.totalorder %s18, 1
      %s300 = scalar_select %p299, %s18, 1
      %s301 = scalar_lea.vmem %s4, %s300
      %p302 = scmp.lt.s32.totalorder %s18, 1
      %s303 = scalar_select %p302, %s18, 1
      %s304 = smul.addr %s303, 8
      %s305 = smul.addr %s304, 8
      %s306 = scalar_lea.vmem %s5, %s305
      %p307 = scmp.lt.s32.totalorder %s18, 1
      %s308 = scalar_select %p307, %s18, 1
      %s309 = smul.addr %s308, 8
      %s310 = scalar_lea.vmem %s6, %s309
      %v312 = vld [vmem:[%s0] sm:$0xff]
      %v313 = vld [vmem:[%s0 + $0x8] sm:$0xff]
      %v314 = vld [vmem:[%s0 + $0x10] sm:$0xff]
      %v315 = vld [vmem:[%s0 + $0x18] sm:$0xff]
      %v316 = vld [vmem:[%s0 + $0x20] sm:$0xff]
      %v317 = vld [vmem:[%s0 + $0x28] sm:$0xff]
      %v318 = vld [vmem:[%s0 + $0x30] sm:$0xff]
      %v319 = vld [vmem:[%s0 + $0x38] sm:$0xff]
      %v320 = vpack.c.bf16 %v313, %v312
      %v321 = vpack.c.bf16 %v315, %v314
      %v322 = vpack.c.bf16 %v317, %v316
      %v323 = vpack.c.bf16 %v319, %v318
      %v324 = vld [vmem:[%s290] sm:$0xf]
      %v325 = vld [vmem:[%s290 + $0x4] sm:$0xf]
      %v326 = vld [vmem:[%s290 + $0x8] sm:$0xf]
      %v327 = vld [vmem:[%s290 + $0xc] sm:$0xf]
      %s328 = scalar_lea.vmem %s0, 64
      %v329 = vld [vmem:[%s328] sm:$0xff]
      %v330 = vld [vmem:[%s328 + $0x8] sm:$0xff]
      %v331 = vld [vmem:[%s328 + $0x10] sm:$0xff]
      %v332 = vld [vmem:[%s328 + $0x18] sm:$0xff]
      %v333 = vld [vmem:[%s328 + $0x20] sm:$0xff]
      %v334 = vld [vmem:[%s328 + $0x28] sm:$0xff]
      %v335 = vld [vmem:[%s328 + $0x30] sm:$0xff]
      %v336 = vld [vmem:[%s328 + $0x38] sm:$0xff]
      %v337 = vpack.c.bf16 %v330, %v329
      %v338 = vpack.c.bf16 %v332, %v331
      %v339 = vpack.c.bf16 %v334, %v333
      %v340 = vpack.c.bf16 %v336, %v335
      %s341 = scalar_lea.vmem %s290, 16
      %v342 = vld [vmem:[%s341] sm:$0xf]
      %v343 = vld [vmem:[%s341 + $0x4] sm:$0xf]
      %v344 = vld [vmem:[%s341 + $0x8] sm:$0xf]
      %v345 = vld [vmem:[%s341 + $0xc] sm:$0xf]
      %v350 = vunpack.c.l.b16 %v342
      %v351 = vunpack.c.l.b16 %v343
      %v352 = vunpack.c.l.b16 %v344
      %v353 = vunpack.c.l.b16 %v345
      %v354 = vpack.c.b16 %v351, %v350
      %v355 = vpack.c.b16 %v353, %v352
      %vm358 = vcmask 261120
      %v360 = vsel %vm358, %v337, 0
      %v363 = vsel %vm358, %v338, 0
      %v366 = vsel %vm358, %v339, 0
      %v369 = vsel %vm358, %v340, 0
      %371 = vmatprep.subr.bf16.mxu0 0
      %372 = vmatpush1.bf16.msra.mxu0 %v354
      %373 = vmatprep.subr.bf16.mxu0 0
      %374 = vmatpush1.bf16.msra.mxu0 %v355
      %375 = vmatprep.subr.bf16.mxu0 0
      %376 = vmatpush1.bf16.msra.mxu0 0
      %377 = vmatprep.subr.bf16.mxu0 0
      %378 = vmatpush1.bf16.msra.mxu0 0
      %379 = vmatprep.subr.bf16.mxu0 0
      %380 = vmatpush1.bf16.msra.mxu0 0
      %381 = vmatprep.subr.bf16.mxu0 0
      %382 = vmatpush1.bf16.msra.mxu0 0
      %383 = vmatprep.subr.bf16.mxu0 0
      %384 = vmatpush1.bf16.msra.mxu0 0
      %385 = vmatprep.subr.bf16.mxu0 0
      %386 = vmatpush1.bf16.msra.mxu0 0
      %387 = vmatprep.subr.bf16.mxu0 0
      %388 = vmatpush1.bf16.msra.mxu0 0
      %389 = vmatprep.subr.bf16.mxu0 0
      %390 = vmatpush1.bf16.msra.mxu0 0
      %391 = vmatprep.subr.bf16.mxu0 0
      %392 = vmatpush1.bf16.msra.mxu0 0
      %393 = vmatprep.subr.bf16.mxu0 0
      %394 = vmatpush1.bf16.msra.mxu0 0
      %395 = vmatprep.subr.bf16.mxu0 0
      %396 = vmatpush1.bf16.msra.mxu0 0
      %397 = vmatprep.subr.bf16.mxu0 0
      %398 = vmatpush1.bf16.msra.mxu0 0
      %399 = vmatprep.subr.bf16.mxu0 0
      %400 = vmatpush1.bf16.msra.mxu0 0
      %401 = vmatprep.subr.bf16.mxu0 0
      %402 = vmatpush1.bf16.msra.mxu0 0
      %403 = vmatprep.mubr.bf16.mxu0 0
      %404 = vmatmul.mubr.bf16.gmra.mrb[0].mxu0 %v360
      %v405 = vpop.f32.mrb[0].mxu0
      %v406 = vadd.f32 0.0, %v405
      %v407 = vpop.f32.mrb[0].mxu0
      %v408 = vpop.f32.mrb[0].mxu0
      %v409 = vadd.f32 0.0, %v408
      %v410 = vpop.f32.mrb[0].mxu0
      %411 = vmatprep.mubr.bf16.mxu0 0
      %412 = vmatmul.mubr.bf16.gmra.mrb[0].mxu0 %v363
      %v413 = vpop.f32.mrb[0].mxu0
      %v414 = vadd.f32 0.0, %v413
      %v415 = vpop.f32.mrb[0].mxu0
      %v416 = vpop.f32.mrb[0].mxu0
      %v417 = vadd.f32 0.0, %v416
      %v418 = vpop.f32.mrb[0].mxu0
      %419 = vmatprep.mubr.bf16.mxu0 0
      %420 = vmatmul.mubr.bf16.gmra.mrb[0].mxu0 %v366
      %v421 = vpop.f32.mrb[0].mxu0
      %v422 = vadd.f32 0.0, %v421
      %v423 = vpop.f32.mrb[0].mxu0
      %v424 = vpop.f32.mrb[0].mxu0
      %v425 = vadd.f32 0.0, %v424
      %v426 = vpop.f32.mrb[0].mxu0
      %427 = vmatprep.mubr.bf16.mxu0 0
      %428 = vmatmul.mubr.bf16.gmra.mrb[0].mxu0 %v369
      %v429 = vpop.f32.mrb[0].mxu0
      %v430 = vadd.f32 0.0, %v429
      %v431 = vpop.f32.mrb[0].mxu0
      %v432 = vpop.f32.mrb[0].mxu0
      %v433 = vadd.f32 0.0, %v432
      %v434 = vpop.f32.mrb[0].mxu0
      %435 = vdwg.mxu0
      %v440 = vunpack.c.l.b16 %v324
      %v441 = vunpack.c.l.b16 %v325
      %v442 = vunpack.c.l.b16 %v326
      %v443 = vunpack.c.l.b16 %v327
      %v444 = vpack.c.b16 %v441, %v440
      %v445 = vpack.c.b16 %v443, %v442
      %v449 = vsel %vm358, %v320, 0
      %v452 = vsel %vm358, %v321, 0
      %v455 = vsel %vm358, %v322, 0
      %v458 = vsel %vm358, %v323, 0
      %460 = vmatprep.subr.bf16.mxu0 0
      %461 = vmatpush1.bf16.msra.mxu0 %v444
      %462 = vmatprep.subr.bf16.mxu0 0
      %463 = vmatpush1.bf16.msra.mxu0 %v445
      %464 = vmatprep.subr.bf16.mxu0 0
      %465 = vmatpush1.bf16.msra.mxu0 0
      %466 = vmatprep.subr.bf16.mxu0 0
      %467 = vmatpush1.bf16.msra.mxu0 0
      %468 = vmatprep.subr.bf16.mxu0 0
      %469 = vmatpush1.bf16.msra.mxu0 0
      %470 = vmatprep.subr.bf16.mxu0 0
      %471 = vmatpush1.bf16.msra.mxu0 0
      %472 = vmatprep.subr.bf16.mxu0 0
      %473 = vmatpush1.bf16.msra.mxu0 0
      %474 = vmatprep.subr.bf16.mxu0 0
      %475 = vmatpush1.bf16.msra.mxu0 0
      %476 = vmatprep.subr.bf16.mxu0 0
      %477 = vmatpush1.bf16.msra.mxu0 0
      %478 = vmatprep.subr.bf16.mxu0 0
      %479 = vmatpush1.bf16.msra.mxu0 0
      %480 = vmatprep.subr.bf16.mxu0 0
      %481 = vmatpush1.bf16.msra.mxu0 0
      %482 = vmatprep.subr.bf16.mxu0 0
      %483 = vmatpush1.bf16.msra.mxu0 0
      %484 = vmatprep.subr.bf16.mxu0 0
      %485 = vmatpush1.bf16.msra.mxu0 0
      %486 = vmatprep.subr.bf16.mxu0 0
      %487 = vmatpush1.bf16.msra.mxu0 0
      %488 = vmatprep.subr.bf16.mxu0 0
      %489 = vmatpush1.bf16.msra.mxu0 0
      %490 = vmatprep.subr.bf16.mxu0 0
      %491 = vmatpush1.bf16.msra.mxu0 0
      %492 = vmatprep.mubr.bf16.mxu0 0
      %493 = vmatmul.mubr.bf16.gmra.mrb[0].mxu0 %v449
      %v494 = vpop.f32.mrb[0].mxu0
      %v495 = vadd.f32 %v406, %v494
      %v496 = vpop.f32.mrb[0].mxu0
      %v497 = vpop.f32.mrb[0].mxu0
      %v498 = vadd.f32 %v409, %v497
      %v499 = vpop.f32.mrb[0].mxu0
      %500 = vmatprep.mubr.bf16.mxu0 0
      %501 = vmatmul.mubr.bf16.gmra.mrb[0].mxu0 %v452
      %v502 = vpop.f32.mrb[0].mxu0
      %v503 = vadd.f32 %v414, %v502
      %v504 = vpop.f32.mrb[0].mxu0
      %v505 = vpop.f32.mrb[0].mxu0
      %v506 = vadd.f32 %v417, %v505
      %v507 = vpop.f32.mrb[0].mxu0
      %508 = vmatprep.mubr.bf16.mxu0 0
      %509 = vmatmul.mubr.bf16.gmra.mrb[0].mxu0 %v455
      %v510 = vpop.f32.mrb[0].mxu0
      %v511 = vadd.f32 %v422, %v510
      %v512 = vpop.f32.mrb[0].mxu0
      %v513 = vpop.f32.mrb[0].mxu0
      %v514 = vadd.f32 %v425, %v513
      %v515 = vpop.f32.mrb[0].mxu0
      %516 = vmatprep.mubr.bf16.mxu0 0
      %517 = vmatmul.mubr.bf16.gmra.mrb[0].mxu0 %v458
      %v518 = vpop.f32.mrb[0].mxu0
      %v519 = vadd.f32 %v430, %v518
      %v520 = vpop.f32.mrb[0].mxu0
      %v521 = vpop.f32.mrb[0].mxu0
      %v522 = vadd.f32 %v433, %v521
      %v523 = vpop.f32.mrb[0].mxu0
      %524 = vdwg.mxu0
      %v525 = vld [vmem:[%s298] sm:$0x1]
      %v527 = vlaneseq
      %v528 = vshrl.u32 %v527, 7
      %v529 = vsub.s32 0, %v528
      %v530 = vrot.slane %v525, %v529
      %v532 = vadd.f32 %v495, %v530
      %v533 = vadd.f32 %v498, %v530
      %v534 = vadd.f32 %v503, %v530
      %v535 = vadd.f32 %v506, %v530
      %v536 = vadd.f32 %v511, %v530
      %v537 = vadd.f32 %v514, %v530
      %v538 = vadd.f32 %v519, %v530
      %v539 = vadd.f32 %v522, %v530
      %vm540 = vcmask 785408
      %541 = vst.msk [vmem:[#allocation2] sm:$0xff] %vm540, %v532
      %542 = vst.msk [vmem:[#allocation2 + $0x8] sm:$0xff] %vm540, %v533
      %543 = vst.msk [vmem:[#allocation2 + $0x10] sm:$0xff] %vm540, %v534
      %544 = vst.msk [vmem:[#allocation2 + $0x18] sm:$0xff] %vm540, %v535
      %545 = vst.msk [vmem:[#allocation2 + $0x20] sm:$0xff] %vm540, %v536
      %546 = vst.msk [vmem:[#allocation2 + $0x28] sm:$0xff] %vm540, %v537
      %547 = vst.msk [vmem:[#allocation2 + $0x30] sm:$0xff] %vm540, %v538
      %548 = vst.msk [vmem:[#allocation2 + $0x38] sm:$0xff] %vm540, %v539
      %v549 = vld [vmem:[%s295] sm:$0xf]
      %v550 = vld [vmem:[%s295 + $0x4] sm:$0xf]
      %v551 = vld [vmem:[%s295 + $0x8] sm:$0xf]
      %v552 = vld [vmem:[%s295 + $0xc] sm:$0xf]
      %v553 = vld [vmem:[%s301] sm:$0x1]
      %p554 = scmp.eq.s32.totalorder %s18, 0
      // Predicated region
      $region41: #{rnn_encoder_forward.3} parent=39 // pred_check
        %p555 = pneg %p554
      $region42: #{rnn_encoder_forward.3} parent=39 // pred_check_branch
        %557 = sbr.rel (%p555) target = $region44
      $region43: #{rnn_encoder_forward.3} parent=39 // pred_region
        %v558 = vld [vmem:[#allocation2] sm:$0xff]
        %v563 = vunpack.c.l.b16 %v549
        %v564 = vunpack.c.l.b16 %v550
        %v565 = vunpack.c.l.b16 %v551
        %v566 = vunpack.c.l.b16 %v552
        %v567 = vpack.c.b16 %v564, %v563
        %v568 = vpack.c.b16 %v566, %v565
        %v572 = vsel %vm358, 0, 0
        %574 = vmatprep.subr.bf16.mxu0 0
        %575 = vmatpush1.bf16.msra.mxu0 %v567
        %576 = vmatprep.subr.bf16.mxu0 0
        %577 = vmatpush1.bf16.msra.mxu0 %v568
        %578 = vmatprep.subr.bf16.mxu0 0
        %579 = vmatpush1.bf16.msra.mxu0 0
        %580 = vmatprep.subr.bf16.mxu0 0
        %581 = vmatpush1.bf16.msra.mxu0 0
        %582 = vmatprep.subr.bf16.mxu0 0
        %583 = vmatpush1.bf16.msra.mxu0 0
        %584 = vmatprep.subr.bf16.mxu0 0
        %585 = vmatpush1.bf16.msra.mxu0 0
        %586 = vmatprep.subr.bf16.mxu0 0
        %587 = vmatpush1.bf16.msra.mxu0 0
        %588 = vmatprep.subr.bf16.mxu0 0
        %589 = vmatpush1.bf16.msra.mxu0 0
        %590 = vmatprep.subr.bf16.mxu0 0
        %591 = vmatpush1.bf16.msra.mxu0 0
        %592 = vmatprep.subr.bf16.mxu0 0
        %593 = vmatpush1.bf16.msra.mxu0 0
        %594 = vmatprep.subr.bf16.mxu0 0
        %595 = vmatpush1.bf16.msra.mxu0 0
        %596 = vmatprep.subr.bf16.mxu0 0
        %597 = vmatpush1.bf16.msra.mxu0 0
        %598 = vmatprep.subr.bf16.mxu0 0
        %599 = vmatpush1.bf16.msra.mxu0 0
        %600 = vmatprep.subr.bf16.mxu0 0
        %601 = vmatpush1.bf16.msra.mxu0 0
        %602 = vmatprep.subr.bf16.mxu0 0
        %603 = vmatpush1.bf16.msra.mxu0 0
        %604 = vmatprep.subr.bf16.mxu0 0
        %605 = vmatpush1.bf16.msra.mxu0 0
        %606 = vmatprep.mubr.bf16.mxu0 0
        %607 = vmatmul.mubr.bf16.gmra.mrb[0].mxu0 %v572
        %v608 = vpop.f32.mrb[0].mxu0
        %v609 = vadd.f32 0.0, %v608
        %v610 = vpop.f32.mrb[0].mxu0
        %v611 = vpop.f32.mrb[0].mxu0
        %v612 = vpop.f32.mrb[0].mxu0
        %613 = vdwg.mxu0
        %v614 = vadd.f32 %v558, %v609
        %v615 = vxor.u32 %v614, 2147483648
        %v616 = vmul.f32 %v615, 1.442695
        %v617 = vpow.pop %v616
        %v618 = vadd.f32 %v617, 1.0
        %v619 = vrcp.pop %v618
        %v620 = vmul.f32 1.0, %v619
        %v622 = vlaneseq
        %v623 = vshrl.u32 %v622, 7
        %v624 = vsub.s32 0, %v623
        %v625 = vrot.slane %v553, %v624
        %626 = vrot.lane.b32.xlu0 %v625, 64
        %v627 = vpop.permute.xlu0 %626
        %v629 = vadd.f32 %v609, %v627
        %631 = vrot.lane.b32.xlu0 %v629, 64
        %v632 = vpop.permute.xlu0 %631
        %v634 = vmul.f32 %v620, %v632
        %636 = vrot.lane.b32.xlu0 %v634, 64
        %v637 = vpop.permute.xlu0 %636
        %v639 = vadd.f32 %v558, %v637
        %v640 = vtanh.pop %v639
        %v641 = vsub.f32 1.0, %v620
        %643 = vrot.lane.b32.xlu0 %v640, 96
        %v644 = vpop.permute.xlu0 %643
        %v646 = vmul.f32 %v641, %v644
        %v647 = vmul.f32 %v620, 0.0
        %v648 = vadd.f32 %v646, %v647
        %650 = vrot.lane.b32.xlu0 %v648, 96
        %v651 = vpop.permute.xlu0 %650
        %653 = vst.msk [vmem:[%s306] sm:$0xff] %vm358, %v651
        %v654 = vld [vmem:[#allocation2 + $0x8] sm:$0xff]
        %v655 = vpack.c.bf16 %v648, %v648
        %657 = vrot.lane.b32.xlu0 %v655, 96
        %v658 = vpop.permute.xlu0 %657
        %v660 = vsel %vm358, %v658, 0
        %662 = vmatprep.subr.bf16.mxu0 0
        %663 = vmatpush1.bf16.msra.mxu0 %v567
        %664 = vmatprep.subr.bf16.mxu0 0
        %665 = vmatpush1.bf16.msra.mxu0 %v568
        %666 = vmatprep.subr.bf16.mxu0 0
        %667 = vmatpush1.bf16.msra.mxu0 0
        %668 = vmatprep.subr.bf16.mxu0 0
        %669 = vmatpush1.bf16.msra.mxu0 0
        %670 = vmatprep.subr.bf16.mxu0 0
        %671 = vmatpush1.bf16.msra.mxu0 0
        %672 = vmatprep.subr.bf16.mxu0 0
        %673 = vmatpush1.bf16.msra.mxu0 0
        %674 = vmatprep.subr.bf16.mxu0 0
        %675 = vmatpush1.bf16.msra.mxu0 0
        %676 = vmatprep.subr.bf16.mxu0 0
        %677 = vmatpush1.bf16.msra.mxu0 0
        %678 = vmatprep.subr.bf16.mxu0 0
        %679 = vmatpush1.bf16.msra.mxu0 0
        %680 = vmatprep.subr.bf16.mxu0 0
        %681 = vmatpush1.bf16.msra.mxu0 0
        %682 = vmatprep.subr.bf16.mxu0 0
        %683 = vmatpush1.bf16.msra.mxu0 0
        %684 = vmatprep.subr.bf16.mxu0 0
        %685 = vmatpush1.bf16.msra.mxu0 0
        %686 = vmatprep.subr.bf16.mxu0 0
        %687 = vmatpush1.bf16.msra.mxu0 0
        %688 = vmatprep.subr.bf16.mxu0 0
        %689 = vmatpush1.bf16.msra.mxu0 0
        %690 = vmatprep.subr.bf16.mxu0 0
        %691 = vmatpush1.bf16.msra.mxu0 0
        %692 = vmatprep.subr.bf16.mxu0 0
        %693 = vmatpush1.bf16.msra.mxu0 0
        %694 = vmatprep.mubr.bf16.mxu0 0
        %695 = vmatmul.mubr.bf16.gmra.mrb[0].mxu0 %v660
        %v696 = vpop.f32.mrb[0].mxu0
        %v697 = vadd.f32 0.0, %v696
        %v698 = vpop.f32.mrb[0].mxu0
        %v699 = vpop.f32.mrb[0].mxu0
        %v700 = vpop.f32.mrb[0].mxu0
        %701 = vdwg.mxu0
        %v702 = vadd.f32 %v654, %v697
        %v703 = vxor.u32 %v702, 2147483648
        %v704 = vmul.f32 %v703, 1.442695
        %v705 = vpow.pop %v704
        %v706 = vadd.f32 %v705, 1.0
        %v707 = vrcp.pop %v706
        %v708 = vmul.f32 1.0, %v707
        %v709 = vadd.f32 %v697, %v627
        %711 = vrot.lane.b32.xlu0 %v709, 64
        %v712 = vpop.permute.xlu0 %711
        %v714 = vmul.f32 %v708, %v712
        %716 = vrot.lane.b32.xlu0 %v714, 64
        %v717 = vpop.permute.xlu0 %716
        %v719 = vadd.f32 %v654, %v717
        %v720 = vtanh.pop %v719
        %v721 = vsub.f32 1.0, %v708
        %723 = vrot.lane.b32.xlu0 %v720, 96
        %v724 = vpop.permute.xlu0 %723
        %v726 = vmul.f32 %v721, %v724
        %v727 = vmul.f32 %v708, %v648
        %v728 = vadd.f32 %v726, %v727
        %730 = vrot.lane.b32.xlu0 %v728, 96
        %v731 = vpop.permute.xlu0 %730
        %733 = vst.msk [vmem:[%s306 + $0x8] sm:$0xff] %vm358, %v731
        %v734 = vld [vmem:[#allocation2 + $0x10] sm:$0xff]
        %v735 = vpack.c.bf16 %v728, %v728
        %737 = vrot.lane.b32.xlu0 %v735, 96
        %v738 = vpop.permute.xlu0 %737
        %v740 = vsel %vm358, %v738, 0
        %742 = vmatprep.subr.bf16.mxu0 0
        %743 = vmatpush1.bf16.msra.mxu0 %v567
        %744 = vmatprep.subr.bf16.mxu0 0
        %745 = vmatpush1.bf16.msra.mxu0 %v568
        %746 = vmatprep.subr.bf16.mxu0 0
        %747 = vmatpush1.bf16.msra.mxu0 0
        %748 = vmatprep.subr.bf16.mxu0 0
        %749 = vmatpush1.bf16.msra.mxu0 0
        %750 = vmatprep.subr.bf16.mxu0 0
        %751 = vmatpush1.bf16.msra.mxu0 0
        %752 = vmatprep.subr.bf16.mxu0 0
        %753 = vmatpush1.bf16.msra.mxu0 0
        %754 = vmatprep.subr.bf16.mxu0 0
        %755 = vmatpush1.bf16.msra.mxu0 0
        %756 = vmatprep.subr.bf16.mxu0 0
        %757 = vmatpush1.bf16.msra.mxu0 0
        %758 = vmatprep.subr.bf16.mxu0 0
        %759 = vmatpush1.bf16.msra.mxu0 0
        %760 = vmatprep.subr.bf16.mxu0 0
        %761 = vmatpush1.bf16.msra.mxu0 0
        %762 = vmatprep.subr.bf16.mxu0 0
        %763 = vmatpush1.bf16.msra.mxu0 0
        %764 = vmatprep.subr.bf16.mxu0 0
        %765 = vmatpush1.bf16.msra.mxu0 0
        %766 = vmatprep.subr.bf16.mxu0 0
        %767 = vmatpush1.bf16.msra.mxu0 0
        %768 = vmatprep.subr.bf16.mxu0 0
        %769 = vmatpush1.bf16.msra.mxu0 0
        %770 = vmatprep.subr.bf16.mxu0 0
        %771 = vmatpush1.bf16.msra.mxu0 0
        %772 = vmatprep.subr.bf16.mxu0 0
        %773 = vmatpush1.bf16.msra.mxu0 0
        %774 = vmatprep.mubr.bf16.mxu0 0
        %775 = vmatmul.mubr.bf16.gmra.mrb[0].mxu0 %v740
        %v776 = vpop.f32.mrb[0].mxu0
        %v777 = vadd.f32 0.0, %v776
        %v778 = vpop.f32.mrb[0].mxu0
        %v779 = vpop.f32.mrb[0].mxu0
        %v780 = vpop.f32.mrb[0].mxu0
        %781 = vdwg.mxu0
        %v782 = vadd.f32 %v734, %v777
        %v783 = vxor.u32 %v782, 2147483648
        %v784 = vmul.f32 %v783, 1.442695
        %v785 = vpow.pop %v784
        %v786 = vadd.f32 %v785, 1.0
        %v787 = vrcp.pop %v786
        %v788 = vmul.f32 1.0, %v787
        %v789 = vadd.f32 %v777, %v627
        %791 = vrot.lane.b32.xlu0 %v789, 64
        %v792 = vpop.permute.xlu0 %791
        %v794 = vmul.f32 %v788, %v792
        %796 = vrot.lane.b32.xlu0 %v794, 64
        %v797 = vpop.permute.xlu0 %796
        %v799 = vadd.f32 %v734, %v797
        %v800 = vtanh.pop %v799
        %v801 = vsub.f32 1.0, %v788
        %803 = vrot.lane.b32.xlu0 %v800, 96
        %v804 = vpop.permute.xlu0 %803
        %v806 = vmul.f32 %v801, %v804
        %v807 = vmul.f32 %v788, %v728
        %v808 = vadd.f32 %v806, %v807
        %810 = vrot.lane.b32.xlu0 %v808, 96
        %v811 = vpop.permute.xlu0 %810
        %813 = vst.msk [vmem:[%s306 + $0x10] sm:$0xff] %vm358, %v811
        %v814 = vld [vmem:[#allocation2 + $0x18] sm:$0xff]
        %v815 = vpack.c.bf16 %v808, %v808
        %817 = vrot.lane.b32.xlu0 %v815, 96
        %v818 = vpop.permute.xlu0 %817
        %v820 = vsel %vm358, %v818, 0
        %822 = vmatprep.subr.bf16.mxu0 0
        %823 = vmatpush1.bf16.msra.mxu0 %v567
        %824 = vmatprep.subr.bf16.mxu0 0
        %825 = vmatpush1.bf16.msra.mxu0 %v568
        %826 = vmatprep.subr.bf16.mxu0 0
        %827 = vmatpush1.bf16.msra.mxu0 0
        %828 = vmatprep.subr.bf16.mxu0 0
        %829 = vmatpush1.bf16.msra.mxu0 0
        %830 = vmatprep.subr.bf16.mxu0 0
        %831 = vmatpush1.bf16.msra.mxu0 0
        %832 = vmatprep.subr.bf16.mxu0 0
        %833 = vmatpush1.bf16.msra.mxu0 0
        %834 = vmatprep.subr.bf16.mxu0 0
        %835 = vmatpush1.bf16.msra.mxu0 0
        %836 = vmatprep.subr.bf16.mxu0 0
        %837 = vmatpush1.bf16.msra.mxu0 0
        %838 = vmatprep.subr.bf16.mxu0 0
        %839 = vmatpush1.bf16.msra.mxu0 0
        %840 = vmatprep.subr.bf16.mxu0 0
        %841 = vmatpush1.bf16.msra.mxu0 0
        %842 = vmatprep.subr.bf16.mxu0 0
        %843 = vmatpush1.bf16.msra.mxu0 0
        %844 = vmatprep.subr.bf16.mxu0 0
        %845 = vmatpush1.bf16.msra.mxu0 0
        %846 = vmatprep.subr.bf16.mxu0 0
        %847 = vmatpush1.bf16.msra.mxu0 0
        %848 = vmatprep.subr.bf16.mxu0 0
        %849 = vmatpush1.bf16.msra.mxu0 0
        %850 = vmatprep.subr.bf16.mxu0 0
        %851 = vmatpush1.bf16.msra.mxu0 0
        %852 = vmatprep.subr.bf16.mxu0 0
        %853 = vmatpush1.bf16.msra.mxu0 0
        %854 = vmatprep.mubr.bf16.mxu0 0
        %855 = vmatmul.mubr.bf16.gmra.mrb[0].mxu0 %v820
        %v856 = vpop.f32.mrb[0].mxu0
        %v857 = vadd.f32 0.0, %v856
        %v858 = vpop.f32.mrb[0].mxu0
        %v859 = vpop.f32.mrb[0].mxu0
        %v860 = vpop.f32.mrb[0].mxu0
        %861 = vdwg.mxu0
        %v862 = vadd.f32 %v814, %v857
        %v863 = vxor.u32 %v862, 2147483648
        %v864 = vmul.f32 %v863, 1.442695
        %v865 = vpow.pop %v864
        %v866 = vadd.f32 %v865, 1.0
        %v867 = vrcp.pop %v866
        %v868 = vmul.f32 1.0, %v867
        %v869 = vadd.f32 %v857, %v627
        %871 = vrot.lane.b32.xlu0 %v869, 64
        %v872 = vpop.permute.xlu0 %871
        %v874 = vmul.f32 %v868, %v872
        %876 = vrot.lane.b32.xlu0 %v874, 64
        %v877 = vpop.permute.xlu0 %876
        %v879 = vadd.f32 %v814, %v877
        %v880 = vtanh.pop %v879
        %v881 = vsub.f32 1.0, %v868
        %883 = vrot.lane.b32.xlu0 %v880, 96
        %v884 = vpop.permute.xlu0 %883
        %v886 = vmul.f32 %v881, %v884
        %v887 = vmul.f32 %v868, %v808
        %v888 = vadd.f32 %v886, %v887
        %890 = vrot.lane.b32.xlu0 %v888, 96
        %v891 = vpop.permute.xlu0 %890
        %893 = vst.msk [vmem:[%s306 + $0x18] sm:$0xff] %vm358, %v891
        %v894 = vld [vmem:[#allocation2 + $0x20] sm:$0xff]
        %v895 = vpack.c.bf16 %v888, %v888
        %897 = vrot.lane.b32.xlu0 %v895, 96
        %v898 = vpop.permute.xlu0 %897
        %v900 = vsel %vm358, %v898, 0
        %902 = vmatprep.subr.bf16.mxu0 0
        %903 = vmatpush1.bf16.msra.mxu0 %v567
        %904 = vmatprep.subr.bf16.mxu0 0
        %905 = vmatpush1.bf16.msra.mxu0 %v568
        %906 = vmatprep.subr.bf16.mxu0 0
        %907 = vmatpush1.bf16.msra.mxu0 0
        %908 = vmatprep.subr.bf16.mxu0 0
        %909 = vmatpush1.bf16.msra.mxu0 0
        %910 = vmatprep.subr.bf16.mxu0 0
        %911 = vmatpush1.bf16.msra.mxu0 0
        %912 = vmatprep.subr.bf16.mxu0 0
        %913 = vmatpush1.bf16.msra.mxu0 0
        %914 = vmatprep.subr.bf16.mxu0 0
        %915 = vmatpush1.bf16.msra.mxu0 0
        %916 = vmatprep.subr.bf16.mxu0 0
        %917 = vmatpush1.bf16.msra.mxu0 0
        %918 = vmatprep.subr.bf16.mxu0 0
        %919 = vmatpush1.bf16.msra.mxu0 0
        %920 = vmatprep.subr.bf16.mxu0 0
        %921 = vmatpush1.bf16.msra.mxu0 0
        %922 = vmatprep.subr.bf16.mxu0 0
        %923 = vmatpush1.bf16.msra.mxu0 0
        %924 = vmatprep.subr.bf16.mxu0 0
        %925 = vmatpush1.bf16.msra.mxu0 0
        %926 = vmatprep.subr.bf16.mxu0 0
        %927 = vmatpush1.bf16.msra.mxu0 0
        %928 = vmatprep.subr.bf16.mxu0 0
        %929 = vmatpush1.bf16.msra.mxu0 0
        %930 = vmatprep.subr.bf16.mxu0 0
        %931 = vmatpush1.bf16.msra.mxu0 0
        %932 = vmatprep.subr.bf16.mxu0 0
        %933 = vmatpush1.bf16.msra.mxu0 0
        %934 = vmatprep.mubr.bf16.mxu0 0
        %935 = vmatmul.mubr.bf16.gmra.mrb[0].mxu0 %v900
        %v936 = vpop.f32.mrb[0].mxu0
        %v937 = vadd.f32 0.0, %v936
        %v938 = vpop.f32.mrb[0].mxu0
        %v939 = vpop.f32.mrb[0].mxu0
        %v940 = vpop.f32.mrb[0].mxu0
        %941 = vdwg.mxu0
        %v942 = vadd.f32 %v894, %v937
        %v943 = vxor.u32 %v942, 2147483648
        %v944 = vmul.f32 %v943, 1.442695
        %v945 = vpow.pop %v944
        %v946 = vadd.f32 %v945, 1.0
        %v947 = vrcp.pop %v946
        %v948 = vmul.f32 1.0, %v947
        %v949 = vadd.f32 %v937, %v627
        %951 = vrot.lane.b32.xlu0 %v949, 64
        %v952 = vpop.permute.xlu0 %951
        %v954 = vmul.f32 %v948, %v952
        %956 = vrot.lane.b32.xlu0 %v954, 64
        %v957 = vpop.permute.xlu0 %956
        %v959 = vadd.f32 %v894, %v957
        %v960 = vtanh.pop %v959
        %v961 = vsub.f32 1.0, %v948
        %963 = vrot.lane.b32.xlu0 %v960, 96
        %v964 = vpop.permute.xlu0 %963
        %v966 = vmul.f32 %v961, %v964
        %v967 = vmul.f32 %v948, %v888
        %v968 = vadd.f32 %v966, %v967
        %970 = vrot.lane.b32.xlu0 %v968, 96
        %v971 = vpop.permute.xlu0 %970
        %973 = vst.msk [vmem:[%s306 + $0x20] sm:$0xff] %vm358, %v971
        %v974 = vld [vmem:[#allocation2 + $0x28] sm:$0xff]
        %v975 = vpack.c.bf16 %v968, %v968
        %977 = vrot.lane.b32.xlu0 %v975, 96
        %v978 = vpop.permute.xlu0 %977
        %v980 = vsel %vm358, %v978, 0
        %982 = vmatprep.subr.bf16.mxu0 0
        %983 = vmatpush1.bf16.msra.mxu0 %v567
        %984 = vmatprep.subr.bf16.mxu0 0
        %985 = vmatpush1.bf16.msra.mxu0 %v568
        %986 = vmatprep.subr.bf16.mxu0 0
        %987 = vmatpush1.bf16.msra.mxu0 0
        %988 = vmatprep.subr.bf16.mxu0 0
        %989 = vmatpush1.bf16.msra.mxu0 0
        %990 = vmatprep.subr.bf16.mxu0 0
        %991 = vmatpush1.bf16.msra.mxu0 0
        %992 = vmatprep.subr.bf16.mxu0 0
        %993 = vmatpush1.bf16.msra.mxu0 0
        %994 = vmatprep.subr.bf16.mxu0 0
        %995 = vmatpush1.bf16.msra.mxu0 0
        %996 = vmatprep.subr.bf16.mxu0 0
        %997 = vmatpush1.bf16.msra.mxu0 0
        %998 = vmatprep.subr.bf16.mxu0 0
        %999 = vmatpush1.bf16.msra.mxu0 0
        %1000 = vmatprep.subr.bf16.mxu0 0
        %1001 = vmatpush1.bf16.msra.mxu0 0
        %1002 = vmatprep.subr.bf16.mxu0 0
        %1003 = vmatpush1.bf16.msra.mxu0 0
        %1004 = vmatprep.subr.bf16.mxu0 0
        %1005 = vmatpush1.bf16.msra.mxu0 0
        %1006 = vmatprep.subr.bf16.mxu0 0
        %1007 = vmatpush1.bf16.msra.mxu0 0
        %1008 = vmatprep.subr.bf16.mxu0 0
        %1009 = vmatpush1.bf16.msra.mxu0 0
        %1010 = vmatprep.subr.bf16.mxu0 0
        %1011 = vmatpush1.bf16.msra.mxu0 0
        %1012 = vmatprep.subr.bf16.mxu0 0
        %1013 = vmatpush1.bf16.msra.mxu0 0
        %1014 = vmatprep.mubr.bf16.mxu0 0
        %1015 = vmatmul.mubr.bf16.gmra.mrb[0].mxu0 %v980
        %v1016 = vpop.f32.mrb[0].mxu0
        %v1017 = vadd.f32 0.0, %v1016
        %v1018 = vpop.f32.mrb[0].mxu0
        %v1019 = vpop.f32.mrb[0].mxu0
        %v1020 = vpop.f32.mrb[0].mxu0
        %1021 = vdwg.mxu0
        %v1022 = vadd.f32 %v974, %v1017
        %v1023 = vxor.u32 %v1022, 2147483648
        %v1024 = vmul.f32 %v1023, 1.442695
        %v1025 = vpow.pop %v1024
        %v1026 = vadd.f32 %v1025, 1.0
        %v1027 = vrcp.pop %v1026
        %v1028 = vmul.f32 1.0, %v1027
        %v1029 = vadd.f32 %v1017, %v627
        %1031 = vrot.lane.b32.xlu0 %v1029, 64
        %v1032 = vpop.permute.xlu0 %1031
        %v1034 = vmul.f32 %v1028, %v1032
        %1036 = vrot.lane.b32.xlu0 %v1034, 64
        %v1037 = vpop.permute.xlu0 %1036
        %v1039 = vadd.f32 %v974, %v1037
        %v1040 = vtanh.pop %v1039
        %v1041 = vsub.f32 1.0, %v1028
        %1043 = vrot.lane.b32.xlu0 %v1040, 96
        %v1044 = vpop.permute.xlu0 %1043
        %v1046 = vmul.f32 %v1041, %v1044
        %v1047 = vmul.f32 %v1028, %v968
        %v1048 = vadd.f32 %v1046, %v1047
        %1050 = vrot.lane.b32.xlu0 %v1048, 96
        %v1051 = vpop.permute.xlu0 %1050
        %1053 = vst.msk [vmem:[%s306 + $0x28] sm:$0xff] %vm358, %v1051
        %v1054 = vld [vmem:[#allocation2 + $0x30] sm:$0xff]
        %v1055 = vpack.c.bf16 %v1048, %v1048
        %1057 = vrot.lane.b32.xlu0 %v1055, 96
        %v1058 = vpop.permute.xlu0 %1057
        %v1060 = vsel %vm358, %v1058, 0
        %1062 = vmatprep.subr.bf16.mxu0 0
        %1063 = vmatpush1.bf16.msra.mxu0 %v567
        %1064 = vmatprep.subr.bf16.mxu0 0
        %1065 = vmatpush1.bf16.msra.mxu0 %v568
        %1066 = vmatprep.subr.bf16.mxu0 0
        %1067 = vmatpush1.bf16.msra.mxu0 0
        %1068 = vmatprep.subr.bf16.mxu0 0
        %1069 = vmatpush1.bf16.msra.mxu0 0
        %1070 = vmatprep.subr.bf16.mxu0 0
        %1071 = vmatpush1.bf16.msra.mxu0 0
        %1072 = vmatprep.subr.bf16.mxu0 0
        %1073 = vmatpush1.bf16.msra.mxu0 0
        %1074 = vmatprep.subr.bf16.mxu0 0
        %1075 = vmatpush1.bf16.msra.mxu0 0
        %1076 = vmatprep.subr.bf16.mxu0 0
        %1077 = vmatpush1.bf16.msra.mxu0 0
        %1078 = vmatprep.subr.bf16.mxu0 0
        %1079 = vmatpush1.bf16.msra.mxu0 0
        %1080 = vmatprep.subr.bf16.mxu0 0
        %1081 = vmatpush1.bf16.msra.mxu0 0
        %1082 = vmatprep.subr.bf16.mxu0 0
        %1083 = vmatpush1.bf16.msra.mxu0 0
        %1084 = vmatprep.subr.bf16.mxu0 0
        %1085 = vmatpush1.bf16.msra.mxu0 0
        %1086 = vmatprep.subr.bf16.mxu0 0
        %1087 = vmatpush1.bf16.msra.mxu0 0
        %1088 = vmatprep.subr.bf16.mxu0 0
        %1089 = vmatpush1.bf16.msra.mxu0 0
        %1090 = vmatprep.subr.bf16.mxu0 0
        %1091 = vmatpush1.bf16.msra.mxu0 0
        %1092 = vmatprep.subr.bf16.mxu0 0
        %1093 = vmatpush1.bf16.msra.mxu0 0
        %1094 = vmatprep.mubr.bf16.mxu0 0
        %1095 = vmatmul.mubr.bf16.gmra.mrb[0].mxu0 %v1060
        %v1096 = vpop.f32.mrb[0].mxu0
        %v1097 = vadd.f32 0.0, %v1096
        %v1098 = vpop.f32.mrb[0].mxu0
        %v1099 = vpop.f32.mrb[0].mxu0
        %v1100 = vpop.f32.mrb[0].mxu0
        %1101 = vdwg.mxu0
        %v1102 = vadd.f32 %v1054, %v1097
        %v1103 = vxor.u32 %v1102, 2147483648
        %v1104 = vmul.f32 %v1103, 1.442695
        %v1105 = vpow.pop %v1104
        %v1106 = vadd.f32 %v1105, 1.0
        %v1107 = vrcp.pop %v1106
        %v1108 = vmul.f32 1.0, %v1107
        %v1109 = vadd.f32 %v1097, %v627
        %1111 = vrot.lane.b32.xlu0 %v1109, 64
        %v1112 = vpop.permute.xlu0 %1111
        %v1114 = vmul.f32 %v1108, %v1112
        %1116 = vrot.lane.b32.xlu0 %v1114, 64
        %v1117 = vpop.permute.xlu0 %1116
        %v1119 = vadd.f32 %v1054, %v1117
        %v1120 = vtanh.pop %v1119
        %v1121 = vsub.f32 1.0, %v1108
        %1123 = vrot.lane.b32.xlu0 %v1120, 96
        %v1124 = vpop.permute.xlu0 %1123
        %v1126 = vmul.f32 %v1121, %v1124
        %v1127 = vmul.f32 %v1108, %v1048
        %v1128 = vadd.f32 %v1126, %v1127
        %1130 = vrot.lane.b32.xlu0 %v1128, 96
        %v1131 = vpop.permute.xlu0 %1130
        %1133 = vst.msk [vmem:[%s306 + $0x30] sm:$0xff] %vm358, %v1131
        %v1134 = vld [vmem:[#allocation2 + $0x38] sm:$0xff]
        %v1135 = vpack.c.bf16 %v1128, %v1128
        %1137 = vrot.lane.b32.xlu0 %v1135, 96
        %v1138 = vpop.permute.xlu0 %1137
        %v1140 = vsel %vm358, %v1138, 0
        %1142 = vmatprep.subr.bf16.mxu0 0
        %1143 = vmatpush1.bf16.msra.mxu0 %v567
        %1144 = vmatprep.subr.bf16.mxu0 0
        %1145 = vmatpush1.bf16.msra.mxu0 %v568
        %1146 = vmatprep.subr.bf16.mxu0 0
        %1147 = vmatpush1.bf16.msra.mxu0 0
        %1148 = vmatprep.subr.bf16.mxu0 0
        %1149 = vmatpush1.bf16.msra.mxu0 0
        %1150 = vmatprep.subr.bf16.mxu0 0
        %1151 = vmatpush1.bf16.msra.mxu0 0
        %1152 = vmatprep.subr.bf16.mxu0 0
        %1153 = vmatpush1.bf16.msra.mxu0 0
        %1154 = vmatprep.subr.bf16.mxu0 0
        %1155 = vmatpush1.bf16.msra.mxu0 0
        %1156 = vmatprep.subr.bf16.mxu0 0
        %1157 = vmatpush1.bf16.msra.mxu0 0
        %1158 = vmatprep.subr.bf16.mxu0 0
        %1159 = vmatpush1.bf16.msra.mxu0 0
        %1160 = vmatprep.subr.bf16.mxu0 0
        %1161 = vmatpush1.bf16.msra.mxu0 0
        %1162 = vmatprep.subr.bf16.mxu0 0
        %1163 = vmatpush1.bf16.msra.mxu0 0
        %1164 = vmatprep.subr.bf16.mxu0 0
        %1165 = vmatpush1.bf16.msra.mxu0 0
        %1166 = vmatprep.subr.bf16.mxu0 0
        %1167 = vmatpush1.bf16.msra.mxu0 0
        %1168 = vmatprep.subr.bf16.mxu0 0
        %1169 = vmatpush1.bf16.msra.mxu0 0
        %1170 = vmatprep.subr.bf16.mxu0 0
        %1171 = vmatpush1.bf16.msra.mxu0 0
        %1172 = vmatprep.subr.bf16.mxu0 0
        %1173 = vmatpush1.bf16.msra.mxu0 0
        %1174 = vmatprep.mubr.bf16.mxu0 0
        %1175 = vmatmul.mubr.bf16.gmra.mrb[0].mxu0 %v1140
        %v1176 = vpop.f32.mrb[0].mxu0
        %v1177 = vadd.f32 0.0, %v1176
        %v1178 = vpop.f32.mrb[0].mxu0
        %v1179 = vpop.f32.mrb[0].mxu0
        %v1180 = vpop.f32.mrb[0].mxu0
        %1181 = vdwg.mxu0
        %v1182 = vadd.f32 %v1134, %v1177
        %v1183 = vxor.u32 %v1182, 2147483648
        %v1184 = vmul.f32 %v1183, 1.442695
        %v1185 = vpow.pop %v1184
        %v1186 = vadd.f32 %v1185, 1.0
        %v1187 = vrcp.pop %v1186
        %v1188 = vmul.f32 1.0, %v1187
        %v1189 = vadd.f32 %v1177, %v627
        %1191 = vrot.lane.b32.xlu0 %v1189, 64
        %v1192 = vpop.permute.xlu0 %1191
        %v1194 = vmul.f32 %v1188, %v1192
        %1196 = vrot.lane.b32.xlu0 %v1194, 64
        %v1197 = vpop.permute.xlu0 %1196
        %v1199 = vadd.f32 %v1134, %v1197
        %v1200 = vtanh.pop %v1199
        %v1201 = vsub.f32 1.0, %v1188
        %1203 = vrot.lane.b32.xlu0 %v1200, 96
        %v1204 = vpop.permute.xlu0 %1203
        %v1206 = vmul.f32 %v1201, %v1204
        %v1207 = vmul.f32 %v1188, %v1128
        %v1208 = vadd.f32 %v1206, %v1207
        %1210 = vrot.lane.b32.xlu0 %v1208, 96
        %v1211 = vpop.permute.xlu0 %1210
        %1213 = vst.msk [vmem:[%s306 + $0x38] sm:$0xff] %vm358, %v1211
        %1214 = vst.msk [vmem:[%s310] sm:$0xff] %vm358, %v1211
      $region44: #{rnn_encoder_forward.3} parent=39 // pred_fallthru
        _
      %p1215 = scmp.eq.s32.totalorder %s18, 1
      // Predicated region
      $region45: #{rnn_encoder_forward.3} parent=39 // pred_check
        %p1216 = pneg %p1215
      $region46: #{rnn_encoder_forward.3} parent=39 // pred_check_branch
        %1218 = sbr.rel (%p1216) target = $region48
      $region47: #{rnn_encoder_forward.3} parent=39 // pred_region
        %v1219 = vld [vmem:[#allocation2 + $0x38] sm:$0xff]
        %v1224 = vunpack.c.l.b16 %v549
        %v1225 = vunpack.c.l.b16 %v550
        %v1226 = vunpack.c.l.b16 %v551
        %v1227 = vunpack.c.l.b16 %v552
        %v1228 = vpack.c.b16 %v1225, %v1224
        %v1229 = vpack.c.b16 %v1227, %v1226
        %v1233 = vsel %vm358, 0, 0
        %1235 = vmatprep.subr.bf16.mxu0 0
        %1236 = vmatpush1.bf16.msra.mxu0 %v1228
        %1237 = vmatprep.subr.bf16.mxu0 0
        %1238 = vmatpush1.bf16.msra.mxu0 %v1229
        %1239 = vmatprep.subr.bf16.mxu0 0
        %1240 = vmatpush1.bf16.msra.mxu0 0
        %1241 = vmatprep.subr.bf16.mxu0 0
        %1242 = vmatpush1.bf16.msra.mxu0 0
        %1243 = vmatprep.subr.bf16.mxu0 0
        %1244 = vmatpush1.bf16.msra.mxu0 0
        %1245 = vmatprep.subr.bf16.mxu0 0
        %1246 = vmatpush1.bf16.msra.mxu0 0
        %1247 = vmatprep.subr.bf16.mxu0 0
        %1248 = vmatpush1.bf16.msra.mxu0 0
        %1249 = vmatprep.subr.bf16.mxu0 0
        %1250 = vmatpush1.bf16.msra.mxu0 0
        %1251 = vmatprep.subr.bf16.mxu0 0
        %1252 = vmatpush1.bf16.msra.mxu0 0
        %1253 = vmatprep.subr.bf16.mxu0 0
        %1254 = vmatpush1.bf16.msra.mxu0 0
        %1255 = vmatprep.subr.bf16.mxu0 0
        %1256 = vmatpush1.bf16.msra.mxu0 0
        %1257 = vmatprep.subr.bf16.mxu0 0
        %1258 = vmatpush1.bf16.msra.mxu0 0
        %1259 = vmatprep.subr.bf16.mxu0 0
        %1260 = vmatpush1.bf16.msra.mxu0 0
        %1261 = vmatprep.subr.bf16.mxu0 0
        %1262 = vmatpush1.bf16.msra.mxu0 0
        %1263 = vmatprep.subr.bf16.mxu0 0
        %1264 = vmatpush1.bf16.msra.mxu0 0
        %1265 = vmatprep.subr.bf16.mxu0 0
        %1266 = vmatpush1.bf16.msra.mxu0 0
        %1267 = vmatprep.mubr.bf16.mxu0 0
        %1268 = vmatmul.mubr.bf16.gmra.mrb[0].mxu0 %v1233
        %v1269 = vpop.f32.mrb[0].mxu0
        %v1270 = vadd.f32 0.0, %v1269
        %v1271 = vpop.f32.mrb[0].mxu0
        %v1272 = vpop.f32.mrb[0].mxu0
        %v1273 = vpop.f32.mrb[0].mxu0
        %1274 = vdwg.mxu0
        %v1275 = vadd.f32 %v1219, %v1270
        %v1276 = vxor.u32 %v1275, 2147483648
        %v1277 = vmul.f32 %v1276, 1.442695
        %v1278 = vpow.pop %v1277
        %v1279 = vadd.f32 %v1278, 1.0
        %v1280 = vrcp.pop %v1279
        %v1281 = vmul.f32 1.0, %v1280
        %v1283 = vlaneseq
        %v1284 = vshrl.u32 %v1283, 7
        %v1285 = vsub.s32 0, %v1284
        %v1286 = vrot.slane %v553, %v1285
        %1287 = vrot.lane.b32.xlu0 %v1286, 64
        %v1288 = vpop.permute.xlu0 %1287
        %v1290 = vadd.f32 %v1270, %v1288
        %1292 = vrot.lane.b32.xlu0 %v1290, 64
        %v1293 = vpop.permute.xlu0 %1292
        %v1295 = vmul.f32 %v1281, %v1293
        %1297 = vrot.lane.b32.xlu0 %v1295, 64
        %v1298 = vpop.permute.xlu0 %1297
        %v1300 = vadd.f32 %v1219, %v1298
        %v1301 = vtanh.pop %v1300
        %v1302 = vsub.f32 1.0, %v1281
        %1304 = vrot.lane.b32.xlu0 %v1301, 96
        %v1305 = vpop.permute.xlu0 %1304
        %v1307 = vmul.f32 %v1302, %v1305
        %v1308 = vmul.f32 %v1281, 0.0
        %v1309 = vadd.f32 %v1307, %v1308
        %1311 = vrot.lane.b32.xlu0 %v1309, 96
        %v1312 = vpop.permute.xlu0 %1311
        %1314 = vst.msk [vmem:[%s306 + $0x38] sm:$0xff] %vm358, %v1312
        %v1315 = vld [vmem:[#allocation2 + $0x30] sm:$0xff]
        %v1316 = vpack.c.bf16 %v1309, %v1309
        %1318 = vrot.lane.b32.xlu0 %v1316, 96
        %v1319 = vpop.permute.xlu0 %1318
        %v1321 = vsel %vm358, %v1319, 0
        %1323 = vmatprep.subr.bf16.mxu0 0
        %1324 = vmatpush1.bf16.msra.mxu0 %v1228
        %1325 = vmatprep.subr.bf16.mxu0 0
        %1326 = vmatpush1.bf16.msra.mxu0 %v1229
        %1327 = vmatprep.subr.bf16.mxu0 0
        %1328 = vmatpush1.bf16.msra.mxu0 0
        %1329 = vmatprep.subr.bf16.mxu0 0
        %1330 = vmatpush1.bf16.msra.mxu0 0
        %1331 = vmatprep.subr.bf16.mxu0 0
        %1332 = vmatpush1.bf16.msra.mxu0 0
        %1333 = vmatprep.subr.bf16.mxu0 0
        %1334 = vmatpush1.bf16.msra.mxu0 0
        %1335 = vmatprep.subr.bf16.mxu0 0
        %1336 = vmatpush1.bf16.msra.mxu0 0
        %1337 = vmatprep.subr.bf16.mxu0 0
        %1338 = vmatpush1.bf16.msra.mxu0 0
        %1339 = vmatprep.subr.bf16.mxu0 0
        %1340 = vmatpush1.bf16.msra.mxu0 0
        %1341 = vmatprep.subr.bf16.mxu0 0
        %1342 = vmatpush1.bf16.msra.mxu0 0
        %1343 = vmatprep.subr.bf16.mxu0 0
        %1344 = vmatpush1.bf16.msra.mxu0 0
        %1345 = vmatprep.subr.bf16.mxu0 0
        %1346 = vmatpush1.bf16.msra.mxu0 0
        %1347 = vmatprep.subr.bf16.mxu0 0
        %1348 = vmatpush1.bf16.msra.mxu0 0
        %1349 = vmatprep.subr.bf16.mxu0 0
        %1350 = vmatpush1.bf16.msra.mxu0 0
        %1351 = vmatprep.subr.bf16.mxu0 0
        %1352 = vmatpush1.bf16.msra.mxu0 0
        %1353 = vmatprep.subr.bf16.mxu0 0
        %1354 = vmatpush1.bf16.msra.mxu0 0
        %1355 = vmatprep.mubr.bf16.mxu0 0
        %1356 = vmatmul.mubr.bf16.gmra.mrb[0].mxu0 %v1321
        %v1357 = vpop.f32.mrb[0].mxu0
        %v1358 = vadd.f32 0.0, %v1357
        %v1359 = vpop.f32.mrb[0].mxu0
        %v1360 = vpop.f32.mrb[0].mxu0
        %v1361 = vpop.f32.mrb[0].mxu0
        %1362 = vdwg.mxu0
        %v1363 = vadd.f32 %v1315, %v1358
        %v1364 = vxor.u32 %v1363, 2147483648
        %v1365 = vmul.f32 %v1364, 1.442695
        %v1366 = vpow.pop %v1365
        %v1367 = vadd.f32 %v1366, 1.0
        %v1368 = vrcp.pop %v1367
        %v1369 = vmul.f32 1.0, %v1368
        %v1370 = vadd.f32 %v1358, %v1288
        %1372 = vrot.lane.b32.xlu0 %v1370, 64
        %v1373 = vpop.permute.xlu0 %1372
        %v1375 = vmul.f32 %v1369, %v1373
        %1377 = vrot.lane.b32.xlu0 %v1375, 64
        %v1378 = vpop.permute.xlu0 %1377
        %v1380 = vadd.f32 %v1315, %v1378
        %v1381 = vtanh.pop %v1380
        %v1382 = vsub.f32 1.0, %v1369
        %1384 = vrot.lane.b32.xlu0 %v1381, 96
        %v1385 = vpop.permute.xlu0 %1384
        %v1387 = vmul.f32 %v1382, %v1385
        %v1388 = vmul.f32 %v1369, %v1309
        %v1389 = vadd.f32 %v1387, %v1388
        %1391 = vrot.lane.b32.xlu0 %v1389, 96
        %v1392 = vpop.permute.xlu0 %1391
        %1394 = vst.msk [vmem:[%s306 + $0x30] sm:$0xff] %vm358, %v1392
        %v1395 = vld [vmem:[#allocation2 + $0x28] sm:$0xff]
        %v1396 = vpack.c.bf16 %v1389, %v1389
        %1398 = vrot.lane.b32.xlu0 %v1396, 96
        %v1399 = vpop.permute.xlu0 %1398
        %v1401 = vsel %vm358, %v1399, 0
        %1403 = vmatprep.subr.bf16.mxu0 0
        %1404 = vmatpush1.bf16.msra.mxu0 %v1228
        %1405 = vmatprep.subr.bf16.mxu0 0
        %1406 = vmatpush1.bf16.msra.mxu0 %v1229
        %1407 = vmatprep.subr.bf16.mxu0 0
        %1408 = vmatpush1.bf16.msra.mxu0 0
        %1409 = vmatprep.subr.bf16.mxu0 0
        %1410 = vmatpush1.bf16.msra.mxu0 0
        %1411 = vmatprep.subr.bf16.mxu0 0
        %1412 = vmatpush1.bf16.msra.mxu0 0
        %1413 = vmatprep.subr.bf16.mxu0 0
        %1414 = vmatpush1.bf16.msra.mxu0 0
        %1415 = vmatprep.subr.bf16.mxu0 0
        %1416 = vmatpush1.bf16.msra.mxu0 0
        %1417 = vmatprep.subr.bf16.mxu0 0
        %1418 = vmatpush1.bf16.msra.mxu0 0
        %1419 = vmatprep.subr.bf16.mxu0 0
        %1420 = vmatpush1.bf16.msra.mxu0 0
        %1421 = vmatprep.subr.bf16.mxu0 0
        %1422 = vmatpush1.bf16.msra.mxu0 0
        %1423 = vmatprep.subr.bf16.mxu0 0
        %1424 = vmatpush1.bf16.msra.mxu0 0
        %1425 = vmatprep.subr.bf16.mxu0 0
        %1426 = vmatpush1.bf16.msra.mxu0 0
        %1427 = vmatprep.subr.bf16.mxu0 0
        %1428 = vmatpush1.bf16.msra.mxu0 0
        %1429 = vmatprep.subr.bf16.mxu0 0
        %1430 = vmatpush1.bf16.msra.mxu0 0
        %1431 = vmatprep.subr.bf16.mxu0 0
        %1432 = vmatpush1.bf16.msra.mxu0 0
        %1433 = vmatprep.subr.bf16.mxu0 0
        %1434 = vmatpush1.bf16.msra.mxu0 0
        %1435 = vmatprep.mubr.bf16.mxu0 0
        %1436 = vmatmul.mubr.bf16.gmra.mrb[0].mxu0 %v1401
        %v1437 = vpop.f32.mrb[0].mxu0
        %v1438 = vadd.f32 0.0, %v1437
        %v1439 = vpop.f32.mrb[0].mxu0
        %v1440 = vpop.f32.mrb[0].mxu0
        %v1441 = vpop.f32.mrb[0].mxu0
        %1442 = vdwg.mxu0
        %v1443 = vadd.f32 %v1395, %v1438
        %v1444 = vxor.u32 %v1443, 2147483648
        %v1445 = vmul.f32 %v1444, 1.442695
        %v1446 = vpow.pop %v1445
        %v1447 = vadd.f32 %v1446, 1.0
        %v1448 = vrcp.pop %v1447
        %v1449 = vmul.f32 1.0, %v1448
        %v1450 = vadd.f32 %v1438, %v1288
        %1452 = vrot.lane.b32.xlu0 %v1450, 64
        %v1453 = vpop.permute.xlu0 %1452
        %v1455 = vmul.f32 %v1449, %v1453
        %1457 = vrot.lane.b32.xlu0 %v1455, 64
        %v1458 = vpop.permute.xlu0 %1457
        %v1460 = vadd.f32 %v1395, %v1458
        %v1461 = vtanh.pop %v1460
        %v1462 = vsub.f32 1.0, %v1449
        %1464 = vrot.lane.b32.xlu0 %v1461, 96
        %v1465 = vpop.permute.xlu0 %1464
        %v1467 = vmul.f32 %v1462, %v1465
        %v1468 = vmul.f32 %v1449, %v1389
        %v1469 = vadd.f32 %v1467, %v1468
        %1471 = vrot.lane.b32.xlu0 %v1469, 96
        %v1472 = vpop.permute.xlu0 %1471
        %1474 = vst.msk [vmem:[%s306 + $0x28] sm:$0xff] %vm358, %v1472
        %v1475 = vld [vmem:[#allocation2 + $0x20] sm:$0xff]
        %v1476 = vpack.c.bf16 %v1469, %v1469
        %1478 = vrot.lane.b32.xlu0 %v1476, 96
        %v1479 = vpop.permute.xlu0 %1478
        %v1481 = vsel %vm358, %v1479, 0
        %1483 = vmatprep.subr.bf16.mxu0 0
        %1484 = vmatpush1.bf16.msra.mxu0 %v1228
        %1485 = vmatprep.subr.bf16.mxu0 0
        %1486 = vmatpush1.bf16.msra.mxu0 %v1229
        %1487 = vmatprep.subr.bf16.mxu0 0
        %1488 = vmatpush1.bf16.msra.mxu0 0
        %1489 = vmatprep.subr.bf16.mxu0 0
        %1490 = vmatpush1.bf16.msra.mxu0 0
        %1491 = vmatprep.subr.bf16.mxu0 0
        %1492 = vmatpush1.bf16.msra.mxu0 0
        %1493 = vmatprep.subr.bf16.mxu0 0
        %1494 = vmatpush1.bf16.msra.mxu0 0
        %1495 = vmatprep.subr.bf16.mxu0 0
        %1496 = vmatpush1.bf16.msra.mxu0 0
        %1497 = vmatprep.subr.bf16.mxu0 0
        %1498 = vmatpush1.bf16.msra.mxu0 0
        %1499 = vmatprep.subr.bf16.mxu0 0
        %1500 = vmatpush1.bf16.msra.mxu0 0
        %1501 = vmatprep.subr.bf16.mxu0 0
        %1502 = vmatpush1.bf16.msra.mxu0 0
        %1503 = vmatprep.subr.bf16.mxu0 0
        %1504 = vmatpush1.bf16.msra.mxu0 0
        %1505 = vmatprep.subr.bf16.mxu0 0
        %1506 = vmatpush1.bf16.msra.mxu0 0
        %1507 = vmatprep.subr.bf16.mxu0 0
        %1508 = vmatpush1.bf16.msra.mxu0 0
        %1509 = vmatprep.subr.bf16.mxu0 0
        %1510 = vmatpush1.bf16.msra.mxu0 0
        %1511 = vmatprep.subr.bf16.mxu0 0
        %1512 = vmatpush1.bf16.msra.mxu0 0
        %1513 = vmatprep.subr.bf16.mxu0 0
        %1514 = vmatpush1.bf16.msra.mxu0 0
        %1515 = vmatprep.mubr.bf16.mxu0 0
        %1516 = vmatmul.mubr.bf16.gmra.mrb[0].mxu0 %v1481
        %v1517 = vpop.f32.mrb[0].mxu0
        %v1518 = vadd.f32 0.0, %v1517
        %v1519 = vpop.f32.mrb[0].mxu0
        %v1520 = vpop.f32.mrb[0].mxu0
        %v1521 = vpop.f32.mrb[0].mxu0
        %1522 = vdwg.mxu0
        %v1523 = vadd.f32 %v1475, %v1518
        %v1524 = vxor.u32 %v1523, 2147483648
        %v1525 = vmul.f32 %v1524, 1.442695
        %v1526 = vpow.pop %v1525
        %v1527 = vadd.f32 %v1526, 1.0
        %v1528 = vrcp.pop %v1527
        %v1529 = vmul.f32 1.0, %v1528
        %v1530 = vadd.f32 %v1518, %v1288
        %1532 = vrot.lane.b32.xlu0 %v1530, 64
        %v1533 = vpop.permute.xlu0 %1532
        %v1535 = vmul.f32 %v1529, %v1533
        %1537 = vrot.lane.b32.xlu0 %v1535, 64
        %v1538 = vpop.permute.xlu0 %1537
        %v1540 = vadd.f32 %v1475, %v1538
        %v1541 = vtanh.pop %v1540
        %v1542 = vsub.f32 1.0, %v1529
        %1544 = vrot.lane.b32.xlu0 %v1541, 96
        %v1545 = vpop.permute.xlu0 %1544
        %v1547 = vmul.f32 %v1542, %v1545
        %v1548 = vmul.f32 %v1529, %v1469
        %v1549 = vadd.f32 %v1547, %v1548
        %1551 = vrot.lane.b32.xlu0 %v1549, 96
        %v1552 = vpop.permute.xlu0 %1551
        %1554 = vst.msk [vmem:[%s306 + $0x20] sm:$0xff] %vm358, %v1552
        %v1555 = vld [vmem:[#allocation2 + $0x18] sm:$0xff]
        %v1556 = vpack.c.bf16 %v1549, %v1549
        %1558 = vrot.lane.b32.xlu0 %v1556, 96
        %v1559 = vpop.permute.xlu0 %1558
        %v1561 = vsel %vm358, %v1559, 0
        %1563 = vmatprep.subr.bf16.mxu0 0
        %1564 = vmatpush1.bf16.msra.mxu0 %v1228
        %1565 = vmatprep.subr.bf16.mxu0 0
        %1566 = vmatpush1.bf16.msra.mxu0 %v1229
        %1567 = vmatprep.subr.bf16.mxu0 0
        %1568 = vmatpush1.bf16.msra.mxu0 0
        %1569 = vmatprep.subr.bf16.mxu0 0
        %1570 = vmatpush1.bf16.msra.mxu0 0
        %1571 = vmatprep.subr.bf16.mxu0 0
        %1572 = vmatpush1.bf16.msra.mxu0 0
        %1573 = vmatprep.subr.bf16.mxu0 0
        %1574 = vmatpush1.bf16.msra.mxu0 0
        %1575 = vmatprep.subr.bf16.mxu0 0
        %1576 = vmatpush1.bf16.msra.mxu0 0
        %1577 = vmatprep.subr.bf16.mxu0 0
        %1578 = vmatpush1.bf16.msra.mxu0 0
        %1579 = vmatprep.subr.bf16.mxu0 0
        %1580 = vmatpush1.bf16.msra.mxu0 0
        %1581 = vmatprep.subr.bf16.mxu0 0
        %1582 = vmatpush1.bf16.msra.mxu0 0
        %1583 = vmatprep.subr.bf16.mxu0 0
        %1584 = vmatpush1.bf16.msra.mxu0 0
        %1585 = vmatprep.subr.bf16.mxu0 0
        %1586 = vmatpush1.bf16.msra.mxu0 0
        %1587 = vmatprep.subr.bf16.mxu0 0
        %1588 = vmatpush1.bf16.msra.mxu0 0
        %1589 = vmatprep.subr.bf16.mxu0 0
        %1590 = vmatpush1.bf16.msra.mxu0 0
        %1591 = vmatprep.subr.bf16.mxu0 0
        %1592 = vmatpush1.bf16.msra.mxu0 0
        %1593 = vmatprep.subr.bf16.mxu0 0
        %1594 = vmatpush1.bf16.msra.mxu0 0
        %1595 = vmatprep.mubr.bf16.mxu0 0
        %1596 = vmatmul.mubr.bf16.gmra.mrb[0].mxu0 %v1561
        %v1597 = vpop.f32.mrb[0].mxu0
        %v1598 = vadd.f32 0.0, %v1597
        %v1599 = vpop.f32.mrb[0].mxu0
        %v1600 = vpop.f32.mrb[0].mxu0
        %v1601 = vpop.f32.mrb[0].mxu0
        %1602 = vdwg.mxu0
        %v1603 = vadd.f32 %v1555, %v1598
        %v1604 = vxor.u32 %v1603, 2147483648
        %v1605 = vmul.f32 %v1604, 1.442695
        %v1606 = vpow.pop %v1605
        %v1607 = vadd.f32 %v1606, 1.0
        %v1608 = vrcp.pop %v1607
        %v1609 = vmul.f32 1.0, %v1608
        %v1610 = vadd.f32 %v1598, %v1288
        %1612 = vrot.lane.b32.xlu0 %v1610, 64
        %v1613 = vpop.permute.xlu0 %1612
        %v1615 = vmul.f32 %v1609, %v1613
        %1617 = vrot.lane.b32.xlu0 %v1615, 64
        %v1618 = vpop.permute.xlu0 %1617
        %v1620 = vadd.f32 %v1555, %v1618
        %v1621 = vtanh.pop %v1620
        %v1622 = vsub.f32 1.0, %v1609
        %1624 = vrot.lane.b32.xlu0 %v1621, 96
        %v1625 = vpop.permute.xlu0 %1624
        %v1627 = vmul.f32 %v1622, %v1625
        %v1628 = vmul.f32 %v1609, %v1549
        %v1629 = vadd.f32 %v1627, %v1628
        %1631 = vrot.lane.b32.xlu0 %v1629, 96
        %v1632 = vpop.permute.xlu0 %1631
        %1634 = vst.msk [vmem:[%s306 + $0x18] sm:$0xff] %vm358, %v1632
        %v1635 = vld [vmem:[#allocation2 + $0x10] sm:$0xff]
        %v1636 = vpack.c.bf16 %v1629, %v1629
        %1638 = vrot.lane.b32.xlu0 %v1636, 96
        %v1639 = vpop.permute.xlu0 %1638
        %v1641 = vsel %vm358, %v1639, 0
        %1643 = vmatprep.subr.bf16.mxu0 0
        %1644 = vmatpush1.bf16.msra.mxu0 %v1228
        %1645 = vmatprep.subr.bf16.mxu0 0
        %1646 = vmatpush1.bf16.msra.mxu0 %v1229
        %1647 = vmatprep.subr.bf16.mxu0 0
        %1648 = vmatpush1.bf16.msra.mxu0 0
        %1649 = vmatprep.subr.bf16.mxu0 0
        %1650 = vmatpush1.bf16.msra.mxu0 0
        %1651 = vmatprep.subr.bf16.mxu0 0
        %1652 = vmatpush1.bf16.msra.mxu0 0
        %1653 = vmatprep.subr.bf16.mxu0 0
        %1654 = vmatpush1.bf16.msra.mxu0 0
        %1655 = vmatprep.subr.bf16.mxu0 0
        %1656 = vmatpush1.bf16.msra.mxu0 0
        %1657 = vmatprep.subr.bf16.mxu0 0
        %1658 = vmatpush1.bf16.msra.mxu0 0
        %1659 = vmatprep.subr.bf16.mxu0 0
        %1660 = vmatpush1.bf16.msra.mxu0 0
        %1661 = vmatprep.subr.bf16.mxu0 0
        %1662 = vmatpush1.bf16.msra.mxu0 0
        %1663 = vmatprep.subr.bf16.mxu0 0
        %1664 = vmatpush1.bf16.msra.mxu0 0
        %1665 = vmatprep.subr.bf16.mxu0 0
        %1666 = vmatpush1.bf16.msra.mxu0 0
        %1667 = vmatprep.subr.bf16.mxu0 0
        %1668 = vmatpush1.bf16.msra.mxu0 0
        %1669 = vmatprep.subr.bf16.mxu0 0
        %1670 = vmatpush1.bf16.msra.mxu0 0
        %1671 = vmatprep.subr.bf16.mxu0 0
        %1672 = vmatpush1.bf16.msra.mxu0 0
        %1673 = vmatprep.subr.bf16.mxu0 0
        %1674 = vmatpush1.bf16.msra.mxu0 0
        %1675 = vmatprep.mubr.bf16.mxu0 0
        %1676 = vmatmul.mubr.bf16.gmra.mrb[0].mxu0 %v1641
        %v1677 = vpop.f32.mrb[0].mxu0
        %v1678 = vadd.f32 0.0, %v1677
        %v1679 = vpop.f32.mrb[0].mxu0
        %v1680 = vpop.f32.mrb[0].mxu0
        %v1681 = vpop.f32.mrb[0].mxu0
        %1682 = vdwg.mxu0
        %v1683 = vadd.f32 %v1635, %v1678
        %v1684 = vxor.u32 %v1683, 2147483648
        %v1685 = vmul.f32 %v1684, 1.442695
        %v1686 = vpow.pop %v1685
        %v1687 = vadd.f32 %v1686, 1.0
        %v1688 = vrcp.pop %v1687
        %v1689 = vmul.f32 1.0, %v1688
        %v1690 = vadd.f32 %v1678, %v1288
        %1692 = vrot.lane.b32.xlu0 %v1690, 64
        %v1693 = vpop.permute.xlu0 %1692
        %v1695 = vmul.f32 %v1689, %v1693
        %1697 = vrot.lane.b32.xlu0 %v1695, 64
        %v1698 = vpop.permute.xlu0 %1697
        %v1700 = vadd.f32 %v1635, %v1698
        %v1701 = vtanh.pop %v1700
        %v1702 = vsub.f32 1.0, %v1689
        %1704 = vrot.lane.b32.xlu0 %v1701, 96
        %v1705 = vpop.permute.xlu0 %1704
        %v1707 = vmul.f32 %v1702, %v1705
        %v1708 = vmul.f32 %v1689, %v1629
        %v1709 = vadd.f32 %v1707, %v1708
        %1711 = vrot.lane.b32.xlu0 %v1709, 96
        %v1712 = vpop.permute.xlu0 %1711
        %1714 = vst.msk [vmem:[%s306 + $0x10] sm:$0xff] %vm358, %v1712
        %v1715 = vld [vmem:[#allocation2 + $0x8] sm:$0xff]
        %v1716 = vpack.c.bf16 %v1709, %v1709
        %1718 = vrot.lane.b32.xlu0 %v1716, 96
        %v1719 = vpop.permute.xlu0 %1718
        %v1721 = vsel %vm358, %v1719, 0
        %1723 = vmatprep.subr.bf16.mxu0 0
        %1724 = vmatpush1.bf16.msra.mxu0 %v1228
        %1725 = vmatprep.subr.bf16.mxu0 0
        %1726 = vmatpush1.bf16.msra.mxu0 %v1229
        %1727 = vmatprep.subr.bf16.mxu0 0
        %1728 = vmatpush1.bf16.msra.mxu0 0
        %1729 = vmatprep.subr.bf16.mxu0 0
        %1730 = vmatpush1.bf16.msra.mxu0 0
        %1731 = vmatprep.subr.bf16.mxu0 0
        %1732 = vmatpush1.bf16.msra.mxu0 0
        %1733 = vmatprep.subr.bf16.mxu0 0
        %1734 = vmatpush1.bf16.msra.mxu0 0
        %1735 = vmatprep.subr.bf16.mxu0 0
        %1736 = vmatpush1.bf16.msra.mxu0 0
        %1737 = vmatprep.subr.bf16.mxu0 0
        %1738 = vmatpush1.bf16.msra.mxu0 0
        %1739 = vmatprep.subr.bf16.mxu0 0
        %1740 = vmatpush1.bf16.msra.mxu0 0
        %1741 = vmatprep.subr.bf16.mxu0 0
        %1742 = vmatpush1.bf16.msra.mxu0 0
        %1743 = vmatprep.subr.bf16.mxu0 0
        %1744 = vmatpush1.bf16.msra.mxu0 0
        %1745 = vmatprep.subr.bf16.mxu0 0
        %1746 = vmatpush1.bf16.msra.mxu0 0
        %1747 = vmatprep.subr.bf16.mxu0 0
        %1748 = vmatpush1.bf16.msra.mxu0 0
        %1749 = vmatprep.subr.bf16.mxu0 0
        %1750 = vmatpush1.bf16.msra.mxu0 0
        %1751 = vmatprep.subr.bf16.mxu0 0
        %1752 = vmatpush1.bf16.msra.mxu0 0
        %1753 = vmatprep.subr.bf16.mxu0 0
        %1754 = vmatpush1.bf16.msra.mxu0 0
        %1755 = vmatprep.mubr.bf16.mxu0 0
        %1756 = vmatmul.mubr.bf16.gmra.mrb[0].mxu0 %v1721
        %v1757 = vpop.f32.mrb[0].mxu0
        %v1758 = vadd.f32 0.0, %v1757
        %v1759 = vpop.f32.mrb[0].mxu0
        %v1760 = vpop.f32.mrb[0].mxu0
        %v1761 = vpop.f32.mrb[0].mxu0
        %1762 = vdwg.mxu0
        %v1763 = vadd.f32 %v1715, %v1758
        %v1764 = vxor.u32 %v1763, 2147483648
        %v1765 = vmul.f32 %v1764, 1.442695
        %v1766 = vpow.pop %v1765
        %v1767 = vadd.f32 %v1766, 1.0
        %v1768 = vrcp.pop %v1767
        %v1769 = vmul.f32 1.0, %v1768
        %v1770 = vadd.f32 %v1758, %v1288
        %1772 = vrot.lane.b32.xlu0 %v1770, 64
        %v1773 = vpop.permute.xlu0 %1772
        %v1775 = vmul.f32 %v1769, %v1773
        %1777 = vrot.lane.b32.xlu0 %v1775, 64
        %v1778 = vpop.permute.xlu0 %1777
        %v1780 = vadd.f32 %v1715, %v1778
        %v1781 = vtanh.pop %v1780
        %v1782 = vsub.f32 1.0, %v1769
        %1784 = vrot.lane.b32.xlu0 %v1781, 96
        %v1785 = vpop.permute.xlu0 %1784
        %v1787 = vmul.f32 %v1782, %v1785
        %v1788 = vmul.f32 %v1769, %v1709
        %v1789 = vadd.f32 %v1787, %v1788
        %1791 = vrot.lane.b32.xlu0 %v1789, 96
        %v1792 = vpop.permute.xlu0 %1791
        %1794 = vst.msk [vmem:[%s306 + $0x8] sm:$0xff] %vm358, %v1792
        %v1795 = vld [vmem:[#allocation2] sm:$0xff]
        %v1796 = vpack.c.bf16 %v1789, %v1789
        %1798 = vrot.lane.b32.xlu0 %v1796, 96
        %v1799 = vpop.permute.xlu0 %1798
        %v1801 = vsel %vm358, %v1799, 0
        %1803 = vmatprep.subr.bf16.mxu0 0
        %1804 = vmatpush1.bf16.msra.mxu0 %v1228
        %1805 = vmatprep.subr.bf16.mxu0 0
        %1806 = vmatpush1.bf16.msra.mxu0 %v1229
        %1807 = vmatprep.subr.bf16.mxu0 0
        %1808 = vmatpush1.bf16.msra.mxu0 0
        %1809 = vmatprep.subr.bf16.mxu0 0
        %1810 = vmatpush1.bf16.msra.mxu0 0
        %1811 = vmatprep.subr.bf16.mxu0 0
        %1812 = vmatpush1.bf16.msra.mxu0 0
        %1813 = vmatprep.subr.bf16.mxu0 0
        %1814 = vmatpush1.bf16.msra.mxu0 0
        %1815 = vmatprep.subr.bf16.mxu0 0
        %1816 = vmatpush1.bf16.msra.mxu0 0
        %1817 = vmatprep.subr.bf16.mxu0 0
        %1818 = vmatpush1.bf16.msra.mxu0 0
        %1819 = vmatprep.subr.bf16.mxu0 0
        %1820 = vmatpush1.bf16.msra.mxu0 0
        %1821 = vmatprep.subr.bf16.mxu0 0
        %1822 = vmatpush1.bf16.msra.mxu0 0
        %1823 = vmatprep.subr.bf16.mxu0 0
        %1824 = vmatpush1.bf16.msra.mxu0 0
        %1825 = vmatprep.subr.bf16.mxu0 0
        %1826 = vmatpush1.bf16.msra.mxu0 0
        %1827 = vmatprep.subr.bf16.mxu0 0
        %1828 = vmatpush1.bf16.msra.mxu0 0
        %1829 = vmatprep.subr.bf16.mxu0 0
        %1830 = vmatpush1.bf16.msra.mxu0 0
        %1831 = vmatprep.subr.bf16.mxu0 0
        %1832 = vmatpush1.bf16.msra.mxu0 0
        %1833 = vmatprep.subr.bf16.mxu0 0
        %1834 = vmatpush1.bf16.msra.mxu0 0
        %1835 = vmatprep.mubr.bf16.mxu0 0
        %1836 = vmatmul.mubr.bf16.gmra.mrb[0].mxu0 %v1801
        %v1837 = vpop.f32.mrb[0].mxu0
        %v1838 = vadd.f32 0.0, %v1837
        %v1839 = vpop.f32.mrb[0].mxu0
        %v1840 = vpop.f32.mrb[0].mxu0
        %v1841 = vpop.f32.mrb[0].mxu0
        %1842 = vdwg.mxu0
        %v1843 = vadd.f32 %v1795, %v1838
        %v1844 = vxor.u32 %v1843, 2147483648
        %v1845 = vmul.f32 %v1844, 1.442695
        %v1846 = vpow.pop %v1845
        %v1847 = vadd.f32 %v1846, 1.0
        %v1848 = vrcp.pop %v1847
        %v1849 = vmul.f32 1.0, %v1848
        %v1850 = vadd.f32 %v1838, %v1288
        %1852 = vrot.lane.b32.xlu0 %v1850, 64
        %v1853 = vpop.permute.xlu0 %1852
        %v1855 = vmul.f32 %v1849, %v1853
        %1857 = vrot.lane.b32.xlu0 %v1855, 64
        %v1858 = vpop.permute.xlu0 %1857
        %v1860 = vadd.f32 %v1795, %v1858
        %v1861 = vtanh.pop %v1860
        %v1862 = vsub.f32 1.0, %v1849
        %1864 = vrot.lane.b32.xlu0 %v1861, 96
        %v1865 = vpop.permute.xlu0 %1864
        %v1867 = vmul.f32 %v1862, %v1865
        %v1868 = vmul.f32 %v1849, %v1789
        %v1869 = vadd.f32 %v1867, %v1868
        %1871 = vrot.lane.b32.xlu0 %v1869, 96
        %v1872 = vpop.permute.xlu0 %1871
        %1874 = vst.msk [vmem:[%s306] sm:$0xff] %vm358, %v1872
        %1875 = vst.msk [vmem:[%s310] sm:$0xff] %vm358, %v1872
      $region48: #{rnn_encoder_forward.3} parent=39 // pred_fallthru
        _
      %p1876 = scmp.lt.s32.totalorder %s18, 1
      %s1877 = scalar_select %p1876, %s18, 1
      %s1878 = smul.addr %s1877, 8
      %s1879 = smul.addr %s1878, 8
      %s1880 = scalar_lea.vmem %s5, %s1879
      %p1881 = scmp.lt.s32.totalorder %s18, 1
      %s1882 = scalar_select %p1881, %s18, 1
      %s1883 = smul.addr %s1882, 8
      %s1884 = scalar_lea.vmem %s6, %s1883
      // Predicated region
      $region49: #{rnn_encoder_forward.3} parent=39 // pred_check
        %p1885 = pneg %p161
      $region50: #{rnn_encoder_forward.3} parent=39 // pred_check_branch
        %1887 = sbr.rel (%p1885) target = $region52
      $region51: #{rnn_encoder_forward.3} parent=39 // pred_region
        _
      $region52: #{rnn_encoder_forward.3} parent=39 // pred_fallthru
        _
      // Predicated region
      $region53: #{rnn_encoder_forward.3} parent=39 // pred_check
        %p1888 = pneg %p187
      $region54: #{rnn_encoder_forward.3} parent=39 // pred_check_branch
        %1890 = sbr.rel (%p1888) target = $region56
      $region55: #{rnn_encoder_forward.3} parent=39 // pred_region
        _
      $region56: #{rnn_encoder_forward.3} parent=39 // pred_fallthru
        _
    $region40: #{rnn_encoder_forward.3} parent=5 // pred_fallthru
      _
    %p1891 = scmp.le.s32.totalorder 2, %s13
    // Predicated region
    $region57: #{rnn_encoder_forward.3} parent=5 // pred_check
      %p1892 = pneg %p1891
    $region58: #{rnn_encoder_forward.3} parent=5 // pred_check_branch
      %1894 = sbr.rel (%p1892) target = $region60
    $region59: #{rnn_encoder_forward.3} parent=5 // pred_region
      %s1895 = ssub.s32 %s13, 2
      // Predicated region
      $region61: #{rnn_encoder_forward.3} parent=59 // pred_check
        %p1896 = pneg %p167
      $region62: #{rnn_encoder_forward.3} parent=59 // pred_check_branch
        %1898 = sbr.rel (%p1896) target = $region64
      $region63: #{rnn_encoder_forward.3} parent=59 // pred_region
        %p1899 = scmp.lt.s32.totalorder %s19, 1
        %s1900 = scalar_select %p1899, %s19, 1
        %s1901 = smul.addr %s1900, 8
        %s1902 = smul.addr %s1901, 8
        %s1903 = scalar_lea.vmem %s5, %s1902
      $region64: #{rnn_encoder_forward.3} parent=59 // pred_fallthru
        _
      // Predicated region
      $region65: #{rnn_encoder_forward.3} parent=59 // pred_check
        %p1904 = pneg %p193
      $region66: #{rnn_encoder_forward.3} parent=59 // pred_check_branch
        %1906 = sbr.rel (%p1904) target = $region68
      $region67: #{rnn_encoder_forward.3} parent=59 // pred_region
        %p1907 = scmp.lt.s32.totalorder %s19, 1
        %s1908 = scalar_select %p1907, %s19, 1
        %s1909 = smul.addr %s1908, 8
        %s1910 = scalar_lea.vmem %s6, %s1909
      $region68: #{rnn_encoder_forward.3} parent=59 // pred_fallthru
        _
    $region60: #{rnn_encoder_forward.3} parent=5 // pred_fallthru
      _
  $region6: #{rnn_encoder_forward.3} parent=0 // loop_footer
    %s17 = sadd.s32 1, %s13
  $region7: #{rnn_encoder_forward.3} parent=0 // loop_footer_branch
    %12 = sbr.rel target = $region3
  $region8: #{rnn_encoder_forward.3} parent=0 // loop_exit
    _

</llo_original>
